<compile_context>
chip_gen: v7x
topology: tpu7x:2x2x1
jax: 0.10.0
libtpu: 0.0.40
codegen_flags: <defaults>
</compile_context>

<pallas_src>
import math
import functools

import numpy as np
import jax
import jax.numpy as jnp
from jax.experimental import pallas as pl
from jax.experimental.pallas import tpu as pltpu


# ============================================================================
# Kernel math
# ============================================================================
def _fused_bigru(gin, whh, bhh, T, B, H, fwd_mask, seq_f_ref=None, seq_b_ref=None):
    """One bidirectional GRU layer for BOTH towers, fwd & bwd interleaved.

    gin:      (T*B, 12H) precomputed input-gate projections; columns are
              gate blocks [r | z | n], each 4H wide, unit order
              [q_fwd, d_fwd, q_bwd, d_bwd].
    whh:      (4H, 12H) block-diagonal recurrent weights (same column layout).
    bhh:      (1, 12H)  recurrent bias.
    fwd_mask: (B, 12H) bool; True on lanes belonging to forward-direction units.
    seq_f/seq_b: optional (T*B, 4H) VMEM refs receiving full-h snapshots keyed
              by the forward time index (seq_f) / backward time index (seq_b).
    Returns the final fused hidden state (B, 4H).
    """
    G = 4 * H
    h = jnp.zeros((B, G), jnp.float32)
    for s in range(T):                      # T static & small -> fully unrolled
        tb = T - 1 - s
        # fwd lanes read time s, bwd lanes read time T-1-s.  Pure VPU select,
        # independent of h, so it sits off the serial dependence chain.
        gi = jnp.where(fwd_mask,
                       gin[s * B:(s + 1) * B, :],
                       gin[tb * B:(tb + 1) * B, :])
        # Single recurrent matmul: both towers, both directions, all 3 gates.
        hg = jnp.dot(h, whh, preferred_element_type=jnp.float32) + bhh
        r = jax.nn.sigmoid(gi[:, :G] + hg[:, :G])
        z = jax.nn.sigmoid(gi[:, G:2 * G] + hg[:, G:2 * G])
        n = jnp.tanh(gi[:, 2 * G:] + r * hg[:, 2 * G:])
        h = (1.0 - z) * n + z * h
        if seq_f_ref is not None:
            # Full-width, sublane-aligned stores of the whole h; the half that
            # is invalid for this time index is zeroed later by the layer-1
            # input weights (w1f / w1b have zero rows there).
            seq_f_ref[s * B:(s + 1) * B, :] = h
            seq_b_ref[tb * B:(tb + 1) * B, :] = h
    return h


def _two_tower_kernel(T, B, H, hd,
                      x_ref, fmask_ref,
                      wih0_ref, bih0_ref, whh0_ref, bhh0_ref,
                      w1f_ref, w1b_ref, bih1_ref, whh1_ref, bhh1_ref,
                      pw1_ref, pb1_ref, pg_ref, pbt_ref, pw2_ref, pb2_ref,
                      out_ref, seq_f_ref, seq_b_ref):
    """Whole two-tower forward in one kernel invocation (no grid)."""
    G = 4 * H
    fwd_mask = jnp.broadcast_to(fmask_ref[...], (B, 3 * G)) != 0.0

    # ---- layer 0: input projection for all time steps / towers / directions
    gin0 = jnp.dot(x_ref[...], wih0_ref[...],
                   preferred_element_type=jnp.float32) + bih0_ref[...]
    _fused_bigru(gin0, whh0_ref[...], bhh0_ref[...], T, B, H, fwd_mask,
                 seq_f_ref, seq_b_ref)

    # ---- layer 1: input projection from the two layer-0 sequence buffers
    gin1 = (jnp.dot(seq_f_ref[...], w1f_ref[...], preferred_element_type=jnp.float32)
            + jnp.dot(seq_b_ref[...], w1b_ref[...], preferred_element_type=jnp.float32)
            + bih1_ref[...])
    h1 = _fused_bigru(gin1, whh1_ref[...], bhh1_ref[...], T, B, H, fwd_mask)

    # ---- projection heads; zero-padded weights route each tower into its own
    #      lane range of one lane-dense output slab (no slicing of h1).
    out = jnp.zeros((B, 2 * hd), jnp.float32)
    for t in range(2):
        y = jnp.dot(h1, pw1_ref[t], preferred_element_type=jnp.float32) + pb1_ref[t]
        mu = jnp.mean(y, axis=-1, keepdims=True)
        var = jnp.mean(jnp.square(y - mu), axis=-1, keepdims=True)
        yn = (y - mu) * jax.lax.rsqrt(var + 1e-5) * pg_ref[t] + pbt_ref[t]
        yr = jnp.maximum(yn, 0.0)
        out = out + jnp.dot(yr, pw2_ref[t],
                            preferred_element_type=jnp.float32) + pb2_ref[t]
    out_ref[...] = out


# ============================================================================
# pallas_call wrapper (single grid-less launch; params pre-fused at init)
# ============================================================================
@functools.partial(jax.jit, static_argnames=("hidden_dim",))
def enhanced_two_tower_forward(query_emb, doc_emb, fused_params, hidden_dim):
    """query_emb/doc_emb: (B, T, E) f32.  Returns (q_vec, d_vec), each (B, hidden_dim)."""
    B, T, E = query_emb.shape
    H = 2 * hidden_dim                       # GRU hidden size per direction
    B_pad = ((B + 7) // 8) * 8               # full sublane tile -> aligned row slices

    # Present inputs time-major (row = t*B_pad + b) with query/doc stacked on
    # the lane axis; the block-diagonal wih0 keeps the towers separate.
    x = jnp.concatenate([query_emb, doc_emb], axis=-1)        # (B, T, 2E)
    x = jnp.transpose(x, (1, 0, 2))                            # (T, B, 2E)
    if B_pad != B:
        x = jnp.pad(x, ((0, 0), (0, B_pad - B), (0, 0)))
    x = x.reshape(T * B_pad, 2 * E)

    kernel = functools.partial(_two_tower_kernel, T, B_pad, H, hidden_dim)
    out = pl.pallas_call(
        kernel,
        out_shape=jax.ShapeDtypeStruct((B_pad, 2 * hidden_dim), jnp.float32),
        scratch_shapes=[pltpu.VMEM((T * B_pad, 4 * H), jnp.float32),   # layer-0 fwd-time seq
                        pltpu.VMEM((T * B_pad, 4 * H), jnp.float32)],  # layer-0 bwd-time seq
    )(x, *fused_params)
    return out[:B, :hidden_dim], out[:B, hidden_dim:]


# ============================================================================
# Parameter construction (PyTorch layout) + one-time fusion to kernel layout
# ============================================================================
def init_raw_tower_params(key, embedding_dim, hidden_dim):
    """PyTorch-layout GRU + projection parameters (gate order r, z, n)."""
    H = 2 * hidden_dim
    ks = jax.random.split(key, 6)

    def gru_dir(k, din):
        k1, k2, k3, k4 = jax.random.split(k, 4)
        bound = 1.0 / math.sqrt(H)
        wih = jax.random.uniform(k1, (3 * H, din), jnp.float32, -bound, bound)
        whh = jax.random.uniform(k2, (3 * H, H), jnp.float32, -bound, bound)
        bih = jax.random.uniform(k3, (3 * H,), jnp.float32, -bound, bound)
        bhh = jax.random.uniform(k4, (3 * H,), jnp.float32, -bound, bound)
        return (wih, whh, bih, bhh)

    def linear(k, din, dout):
        k1, k2 = jax.random.split(k)
        bound = 1.0 / math.sqrt(din)
        w = jax.random.uniform(k1, (dout, din), jnp.float32, -bound, bound)
        b = jax.random.uniform(k2, (dout,), jnp.float32, -bound, bound)
        return w, b

    layer0 = (gru_dir(ks[0], embedding_dim), gru_dir(ks[1], embedding_dim))
    layer1 = (gru_dir(ks[2], 2 * H), gru_dir(ks[3], 2 * H))
    w1, b1 = linear(ks[4], 4 * hidden_dim, 2 * hidden_dim)
    gamma = jnp.ones((2 * hidden_dim,), jnp.float32)
    beta = jnp.zeros((2 * hidden_dim,), jnp.float32)
    w2, b2 = linear(ks[5], 2 * hidden_dim, hidden_dim)
    return dict(layer0=layer0, layer1=layer1,
                proj=(w1, b1, gamma, beta, w2, b2))


def fuse_two_tower_params(q_raw, d_raw, embedding_dim, hidden_dim):
    """Fuse BOTH towers' raw (PyTorch-layout) parameters into the kernel layout.

    Lane layout: unit 0=(query,fwd) 1=(doc,fwd) 2=(query,bwd) 3=(doc,bwd);
    hidden state lanes: unit u at [u*H, (u+1)*H);
    gin/hg columns: [r-block | z-block | n-block], each block 4H wide with the
    same unit order.  Done ONCE at init -- nothing here runs per call.
    """
    H = 2 * hidden_dim
    E = embedding_dim
    hd = hidden_dim

    def np32(x):
        return np.asarray(x, dtype=np.float32)

    def unit_list(layer):
        qf, qb = q_raw[layer]
        df, db = d_raw[layer]
        return [(qf, 0), (df, 1), (qb, 0), (db, 1)]     # (params, tower index)

    def gcols(g, u):
        return slice(g * 4 * H + u * H, g * 4 * H + (u + 1) * H)

    # Forward-lane mask over the 12H gate columns (fwd units = first 2H lanes
    # of every 4H gate block).
    lane = np.arange(12 * H)
    fmask = ((lane % (4 * H)) < 2 * H).astype(np.float32)[None, :]    # (1, 12H)

    # ---- layer 0 --------------------------------------------------------
    wih0 = np.zeros((2 * E, 12 * H), np.float32)
    bih0 = np.zeros((1, 12 * H), np.float32)
    whh0 = np.zeros((4 * H, 12 * H), np.float32)
    bhh0 = np.zeros((1, 12 * H), np.float32)
    for u, (p, tw) in enumerate(unit_list("layer0")):
        wih, whh, bih, bhh = map(np32, p)
        for g in range(3):
            c = gcols(g, u)
            wih0[tw * E:(tw + 1) * E, c] = wih[g * H:(g + 1) * H, :].T
            whh0[u * H:(u + 1) * H, c] = whh[g * H:(g + 1) * H, :].T
            bih0[0, c] = bih[g * H:(g + 1) * H]
            bhh0[0, c] = bhh[g * H:(g + 1) * H]

    # ---- layer 1 (input = layer-0 outputs stored as full-h snapshots) ----
    w1f = np.zeros((4 * H, 12 * H), np.float32)
    w1b = np.zeros((4 * H, 12 * H), np.float32)
    bih1 = np.zeros((1, 12 * H), np.float32)
    whh1 = np.zeros((4 * H, 12 * H), np.float32)
    bhh1 = np.zeros((1, 12 * H), np.float32)
    for u, (p, tw) in enumerate(unit_list("layer1")):
        wih, whh, bih, bhh = map(np32, p)
        fr = slice(tw * H, (tw + 1) * H)                     # tower's fwd-output lanes
        br = slice(2 * H + tw * H, 2 * H + (tw + 1) * H)     # tower's bwd-output lanes
        for g in range(3):
            c = gcols(g, u)
            w1f[fr, c] = wih[g * H:(g + 1) * H, :H].T        # reads fwd outputs
            w1b[br, c] = wih[g * H:(g + 1) * H, H:].T        # reads bwd outputs
            whh1[u * H:(u + 1) * H, c] = whh[g * H:(g + 1) * H, :].T
            bih1[0, c] = bih[g * H:(g + 1) * H]
            bhh1[0, c] = bhh[g * H:(g + 1) * H]

    # ---- projection heads (stacked over towers, zero-padded so the kernel
    #      never lane-slices the fused hidden state) -----------------------
    pw1 = np.zeros((2, 4 * H, 2 * hd), np.float32)
    pb1 = np.zeros((2, 1, 2 * hd), np.float32)
    pg = np.zeros((2, 1, 2 * hd), np.float32)
    pbt = np.zeros((2, 1, 2 * hd), np.float32)
    pw2 = np.zeros((2, 2 * hd, 2 * hd), np.float32)
    pb2 = np.zeros((2, 1, 2 * hd), np.float32)
    for tw, raw in enumerate((q_raw, d_raw)):
        w1, b1, gamma, beta, w2, b2 = map(np32, raw["proj"])
        w1t = w1.T                                            # (2H, 2*hd)
        pw1[tw, tw * H:(tw + 1) * H, :] = w1t[:H, :]                     # fwd final
        pw1[tw, 2 * H + tw * H:2 * H + (tw + 1) * H, :] = w1t[H:, :]     # bwd final
        pb1[tw, 0, :] = b1
        pg[tw, 0, :] = gamma
        pbt[tw, 0, :] = beta
        pw2[tw, :, tw * hd:(tw + 1) * hd] = w2.T
        pb2[tw, 0, tw * hd:(tw + 1) * hd] = b2

    arrs = (fmask, wih0, bih0, whh0, bhh0, w1f, w1b, bih1, whh1, bhh1,
            pw1, pb1, pg, pbt, pw2, pb2)
    return tuple(jnp.asarray(a) for a in arrs)


# ============================================================================
# Independent pure-JAX reference (straight per-gate PyTorch math on RAW params)
# ============================================================================
def _ref_gru_direction(x, wih, whh, bih, bhh, reverse):
    B, T, _ = x.shape
    H = whh.shape[1]
    hp = jax.lax.Precision.HIGHEST
    h = jnp.zeros((B, H), jnp.float32)
    outs = [None] * T
    order = range(T - 1, -1, -1) if reverse else range(T)
    for t in order:
        xt = x[:, t, :]
        gi = jnp.dot(xt, wih.T, precision=hp) + bih
        gh = jnp.dot(h, whh.T, precision=hp) + bhh
        r = jax.nn.sigmoid(gi[:, :H] + gh[:, :H])
        z = jax.nn.sigmoid(gi[:, H:2 * H] + gh[:, H:2 * H])
        n = jnp.tanh(gi[:, 2 * H:] + r * gh[:, 2 * H:])
        h = (1.0 - z) * n + z * h
        outs[t] = h
    return outs, h


def reference_tower(x, raw):
    B, T, _ = x.shape
    fwd0, bwd0 = raw["layer0"]
    fwd1, bwd1 = raw["layer1"]
    of, _ = _ref_gru_direction(x, *fwd0, reverse=False)
    ob, _ = _ref_gru_direction(x, *bwd0, reverse=True)
    x1 = jnp.stack([jnp.concatenate([of[t], ob[t]], axis=1) for t in range(T)],
                   axis=1)
    _, hf = _ref_gru_direction(x1, *fwd1, reverse=False)
    _, hb = _ref_gru_direction(x1, *bwd1, reverse=True)
    vec = jnp.concatenate([hf, hb], axis=1)

    w1, b1, gamma, beta, w2, b2 = raw["proj"]
    hp = jax.lax.Precision.HIGHEST
    y = jnp.dot(vec, w1.T, precision=hp) + b1
    mu = jnp.mean(y, axis=-1, keepdims=True)
    var = jnp.mean(jnp.square(y - mu), axis=-1, keepdims=True)
    yn = (y - mu) * jax.lax.rsqrt(var + 1e-5) * gamma + beta
    yr = jnp.maximum(yn, 0.0)
    return jnp.dot(yr, w2.T, precision=hp) + b2


# ============================================================================
if __name__ == "__main__":
    batch, seq, embedding_dim, hidden_dim = 2, 8, 32, 16

    root = jax.random.PRNGKey(0)
    kq, kd, kx1, kx2 = jax.random.split(root, 4)

    q_raw = init_raw_tower_params(kq, embedding_dim, hidden_dim)
    d_raw = init_raw_tower_params(kd, embedding_dim, hidden_dim)
    # Parameter fusion / transposition / padding happens ONCE here, not per call.
    fused_params = fuse_two_tower_params(q_raw, d_raw, embedding_dim, hidden_dim)

    query_emb = jax.random.normal(kx1, (batch, seq, embedding_dim), jnp.float32)
    doc_emb = jax.random.normal(kx2, (batch, seq, embedding_dim), jnp.float32)

    q_vec, d_vec = enhanced_two_tower_forward(
        query_emb, doc_emb, fused_params, hidden_dim=hidden_dim)
    q_vec = jax.block_until_ready(q_vec)
    d_vec = jax.block_until_ready(d_vec)

    assert q_vec.shape == (batch, hidden_dim), q_vec.shape
    assert d_vec.shape == (batch, hidden_dim), d_vec.shape

    # Validate the fused kernel against an independent per-gate reference built
    # from the RAW (PyTorch-layout) weights -- a completely different code path.
    q_ref = reference_tower(query_emb, q_raw)
    d_ref = reference_tower(doc_emb, d_raw)
    assert jnp.allclose(q_vec, q_ref, rtol=2e-3, atol=2e-3), \
        float(jnp.max(jnp.abs(q_vec - q_ref)))
    assert jnp.allclose(d_vec, d_ref, rtol=2e-3, atol=2e-3), \
        float(jnp.max(jnp.abs(d_vec - d_ref)))

    print("KERNEL_OK")
</pallas_src>

<mosaic_0001>
module attributes {stable_mosaic.version = 11 : i64} {
  func.func @_two_tower_kernel(%arg0: memref<64x64xf32, #tpu.memory_space<vmem>>, %arg1: memref<1x384xf32, #tpu.memory_space<vmem>>, %arg2: memref<64x384xf32, #tpu.memory_space<vmem>>, %arg3: memref<1x384xf32, #tpu.memory_space<vmem>>, %arg4: memref<128x384xf32, #tpu.memory_space<vmem>>, %arg5: memref<1x384xf32, #tpu.memory_space<vmem>>, %arg6: memref<128x384xf32, #tpu.memory_space<vmem>>, %arg7: memref<128x384xf32, #tpu.memory_space<vmem>>, %arg8: memref<1x384xf32, #tpu.memory_space<vmem>>, %arg9: memref<128x384xf32, #tpu.memory_space<vmem>>, %arg10: memref<1x384xf32, #tpu.memory_space<vmem>>, %arg11: memref<2x128x32xf32, #tpu.memory_space<vmem>>, %arg12: memref<2x1x32xf32, #tpu.memory_space<vmem>>, %arg13: memref<2x1x32xf32, #tpu.memory_space<vmem>>, %arg14: memref<2x1x32xf32, #tpu.memory_space<vmem>>, %arg15: memref<2x32x32xf32, #tpu.memory_space<vmem>>, %arg16: memref<2x1x32xf32, #tpu.memory_space<vmem>>, %arg17: memref<8x32xf32, #tpu.memory_space<vmem>>, %arg18: memref<64x128xf32, #tpu.memory_space<vmem>>, %arg19: memref<64x128xf32, #tpu.memory_space<vmem>>) attributes {dimension_semantics = [], scalar_prefetch = 0 : i64, scratch_operands = 2 : i64, tpu.core_type = #tpu.core_type<tc>} {
    %c0 = arith.constant 0 : index
    %c0_0 = arith.constant 0 : index
    %0 = vector.load %arg1[%c0, %c0_0] : memref<1x384xf32, #tpu.memory_space<vmem>>, vector<1x384xf32>
    %1 = vector.shape_cast %0 : vector<1x384xf32> to vector<1x384xf32>
    %2 = vector.broadcast %1 : vector<1x384xf32> to vector<8x384xf32>
    %cst = arith.constant 0.000000e+00 : f32
    %3 = vector.broadcast %cst : f32 to vector<8x384xf32>
    %4 = arith.cmpf one, %2, %3 : vector<8x384xf32>
    %c0_1 = arith.constant 0 : index
    %c0_2 = arith.constant 0 : index
    %5 = vector.load %arg0[%c0_1, %c0_2] : memref<64x64xf32, #tpu.memory_space<vmem>>, vector<64x64xf32>
    %c0_3 = arith.constant 0 : index
    %c0_4 = arith.constant 0 : index
    %6 = vector.load %arg2[%c0_3, %c0_4] : memref<64x384xf32, #tpu.memory_space<vmem>>, vector<64x384xf32>
    %cst_5 = arith.constant dense<0.000000e+00> : vector<64x384xf32>
    %7 = tpu.matmul %5, %6, %cst_5 {dimension_numbers = #tpu.dot_dimension_numbers<[1], [0], [0], [1], [0, 0, 1, 1], [], []>} : vector<64x64xf32>, vector<64x384xf32>, vector<64x384xf32> -> vector<64x384xf32>
    %c0_6 = arith.constant 0 : index
    %c0_7 = arith.constant 0 : index
    %8 = vector.load %arg3[%c0_6, %c0_7] : memref<1x384xf32, #tpu.memory_space<vmem>>, vector<1x384xf32>
    %9 = vector.broadcast %8 : vector<1x384xf32> to vector<64x384xf32>
    %10 = arith.addf %7, %9 : vector<64x384xf32>
    %c0_8 = arith.constant 0 : index
    %c0_9 = arith.constant 0 : index
    %11 = vector.load %arg4[%c0_8, %c0_9] : memref<128x384xf32, #tpu.memory_space<vmem>>, vector<128x384xf32>
    %c0_10 = arith.constant 0 : index
    %c0_11 = arith.constant 0 : index
    %12 = vector.load %arg5[%c0_10, %c0_11] : memref<1x384xf32, #tpu.memory_space<vmem>>, vector<1x384xf32>
    %cst_12 = arith.constant 0.000000e+00 : f32
    %13 = vector.broadcast %cst_12 : f32 to vector<8x128xf32>
    %14 = vector.extract_strided_slice %10 {offsets = [0, 0], sizes = [8, 384], strides = [1, 1]} : vector<64x384xf32> to vector<8x384xf32>
    %15 = vector.extract_strided_slice %10 {offsets = [56, 0], sizes = [8, 384], strides = [1, 1]} : vector<64x384xf32> to vector<8x384xf32>
    %16 = arith.select %4, %14, %15 : vector<8x384xi1>, vector<8x384xf32>
    %cst_13 = arith.constant dense<0.000000e+00> : vector<8x384xf32>
    %17 = tpu.matmul %13, %11, %cst_13 {dimension_numbers = #tpu.dot_dimension_numbers<[1], [0], [0], [1], [0, 0, 1, 1], [], []>} : vector<8x128xf32>, vector<128x384xf32>, vector<8x384xf32> -> vector<8x384xf32>
    %18 = vector.broadcast %12 : vector<1x384xf32> to vector<8x384xf32>
    %19 = arith.addf %17, %18 : vector<8x384xf32>
    %20 = vector.extract_strided_slice %16 {offsets = [0, 0], sizes = [8, 128], strides = [1, 1]} : vector<8x384xf32> to vector<8x128xf32>
    %21 = vector.extract_strided_slice %19 {offsets = [0, 0], sizes = [8, 128], strides = [1, 1]} : vector<8x384xf32> to vector<8x128xf32>
    %22 = arith.addf %20, %21 : vector<8x128xf32>
    %23 = arith.negf %22 : vector<8x128xf32>
    %24 = math.exp %23 : vector<8x128xf32>
    %cst_14 = arith.constant 1.000000e+00 : f32
    %25 = vector.broadcast %cst_14 : f32 to vector<8x128xf32>
    %26 = arith.addf %25, %24 : vector<8x128xf32>
    %27 = arith.divf %25, %26 : vector<8x128xf32>
    %28 = vector.extract_strided_slice %16 {offsets = [0, 128], sizes = [8, 128], strides = [1, 1]} : vector<8x384xf32> to vector<8x128xf32>
    %29 = vector.extract_strided_slice %19 {offsets = [0, 128], sizes = [8, 128], strides = [1, 1]} : vector<8x384xf32> to vector<8x128xf32>
    %30 = arith.addf %28, %29 : vector<8x128xf32>
    %31 = arith.negf %30 : vector<8x128xf32>
    %32 = math.exp %31 : vector<8x128xf32>
    %cst_15 = arith.constant 1.000000e+00 : f32
    %33 = vector.broadcast %cst_15 : f32 to vector<8x128xf32>
    %34 = arith.addf %33, %32 : vector<8x128xf32>
    %35 = arith.divf %33, %34 : vector<8x128xf32>
    %36 = vector.extract_strided_slice %16 {offsets = [0, 256], sizes = [8, 128], strides = [1, 1]} : vector<8x384xf32> to vector<8x128xf32>
    %37 = vector.extract_strided_slice %19 {offsets = [0, 256], sizes = [8, 128], strides = [1, 1]} : vector<8x384xf32> to vector<8x128xf32>
    %38 = arith.mulf %27, %37 : vector<8x128xf32>
    %39 = arith.addf %36, %38 : vector<8x128xf32>
    %40 = math.tanh %39 : vector<8x128xf32>
    %cst_16 = arith.constant 1.000000e+00 : f32
    %41 = vector.broadcast %cst_16 : f32 to vector<8x128xf32>
    %42 = arith.subf %41, %35 : vector<8x128xf32>
    %43 = arith.mulf %42, %40 : vector<8x128xf32>
    %44 = arith.mulf %35, %13 : vector<8x128xf32>
    %45 = arith.addf %43, %44 : vector<8x128xf32>
    %c0_17 = arith.constant 0 : index
    %c0_18 = arith.constant 0 : index
    %46 = vector.load %arg18[%c0_17, %c0_18] : memref<64x128xf32, #tpu.memory_space<vmem>>, vector<8x128xf32>
    tpu.vector_store %arg18[%c0_17, %c0_18], %45 {strides = array<i32>} : memref<64x128xf32, #tpu.memory_space<vmem>>, vector<8x128xf32>,
    %c56 = arith.constant 56 : index
    %c0_19 = arith.constant 0 : index
    %47 = vector.load %arg19[%c56, %c0_19] : memref<64x128xf32, #tpu.memory_space<vmem>>, vector<8x128xf32>
    tpu.vector_store %arg19[%c56, %c0_19], %45 {strides = array<i32>} : memref<64x128xf32, #tpu.memory_space<vmem>>, vector<8x128xf32>,
    %48 = vector.extract_strided_slice %10 {offsets = [8, 0], sizes = [8, 384], strides = [1, 1]} : vector<64x384xf32> to vector<8x384xf32>
    %49 = vector.extract_strided_slice %10 {offsets = [48, 0], sizes = [8, 384], strides = [1, 1]} : vector<64x384xf32> to vector<8x384xf32>
    %50 = arith.select %4, %48, %49 : vector<8x384xi1>, vector<8x384xf32>
    %cst_20 = arith.constant dense<0.000000e+00> : vector<8x384xf32>
    %51 = tpu.matmul %45, %11, %cst_20 {dimension_numbers = #tpu.dot_dimension_numbers<[1], [0], [0], [1], [0, 0, 1, 1], [], []>} : vector<8x128xf32>, vector<128x384xf32>, vector<8x384xf32> -> vector<8x384xf32>
    %52 = vector.broadcast %12 : vector<1x384xf32> to vector<8x384xf32>
    %53 = arith.addf %51, %52 : vector<8x384xf32>
    %54 = vector.extract_strided_slice %50 {offsets = [0, 0], sizes = [8, 128], strides = [1, 1]} : vector<8x384xf32> to vector<8x128xf32>
    %55 = vector.extract_strided_slice %53 {offsets = [0, 0], sizes = [8, 128], strides = [1, 1]} : vector<8x384xf32> to vector<8x128xf32>
    %56 = arith.addf %54, %55 : vector<8x128xf32>
    %57 = arith.negf %56 : vector<8x128xf32>
    %58 = math.exp %57 : vector<8x128xf32>
    %cst_21 = arith.constant 1.000000e+00 : f32
    %59 = vector.broadcast %cst_21 : f32 to vector<8x128xf32>
    %60 = arith.addf %59, %58 : vector<8x128xf32>
    %61 = arith.divf %59, %60 : vector<8x128xf32>
    %62 = vector.extract_strided_slice %50 {offsets = [0, 128], sizes = [8, 128], strides = [1, 1]} : vector<8x384xf32> to vector<8x128xf32>
    %63 = vector.extract_strided_slice %53 {offsets = [0, 128], sizes = [8, 128], strides = [1, 1]} : vector<8x384xf32> to vector<8x128xf32>
    %64 = arith.addf %62, %63 : vector<8x128xf32>
    %65 = arith.negf %64 : vector<8x128xf32>
    %66 = math.exp %65 : vector<8x128xf32>
    %cst_22 = arith.constant 1.000000e+00 : f32
    %67 = vector.broadcast %cst_22 : f32 to vector<8x128xf32>
    %68 = arith.addf %67, %66 : vector<8x128xf32>
    %69 = arith.divf %67, %68 : vector<8x128xf32>
    %70 = vector.extract_strided_slice %50 {offsets = [0, 256], sizes = [8, 128], strides = [1, 1]} : vector<8x384xf32> to vector<8x128xf32>
    %71 = vector.extract_strided_slice %53 {offsets = [0, 256], sizes = [8, 128], strides = [1, 1]} : vector<8x384xf32> to vector<8x128xf32>
    %72 = arith.mulf %61, %71 : vector<8x128xf32>
    %73 = arith.addf %70, %72 : vector<8x128xf32>
    %74 = math.tanh %73 : vector<8x128xf32>
    %cst_23 = arith.constant 1.000000e+00 : f32
    %75 = vector.broadcast %cst_23 : f32 to vector<8x128xf32>
    %76 = arith.subf %75, %69 : vector<8x128xf32>
    %77 = arith.mulf %76, %74 : vector<8x128xf32>
    %78 = arith.mulf %69, %45 : vector<8x128xf32>
    %79 = arith.addf %77, %78 : vector<8x128xf32>
    %c8 = arith.constant 8 : index
    %c0_24 = arith.constant 0 : index
    %80 = vector.load %arg18[%c8, %c0_24] : memref<64x128xf32, #tpu.memory_space<vmem>>, vector<8x128xf32>
    tpu.vector_store %arg18[%c8, %c0_24], %79 {strides = array<i32>} : memref<64x128xf32, #tpu.memory_space<vmem>>, vector<8x128xf32>,
    %c48 = arith.constant 48 : index
    %c0_25 = arith.constant 0 : index
    %81 = vector.load %arg19[%c48, %c0_25] : memref<64x128xf32, #tpu.memory_space<vmem>>, vector<8x128xf32>
    tpu.vector_store %arg19[%c48, %c0_25], %79 {strides = array<i32>} : memref<64x128xf32, #tpu.memory_space<vmem>>, vector<8x128xf32>,
    %82 = vector.extract_strided_slice %10 {offsets = [16, 0], sizes = [8, 384], strides = [1, 1]} : vector<64x384xf32> to vector<8x384xf32>
    %83 = vector.extract_strided_slice %10 {offsets = [40, 0], sizes = [8, 384], strides = [1, 1]} : vector<64x384xf32> to vector<8x384xf32>
    %84 = arith.select %4, %82, %83 : vector<8x384xi1>, vector<8x384xf32>
    %cst_26 = arith.constant dense<0.000000e+00> : vector<8x384xf32>
    %85 = tpu.matmul %79, %11, %cst_26 {dimension_numbers = #tpu.dot_dimension_numbers<[1], [0], [0], [1], [0, 0, 1, 1], [], []>} : vector<8x128xf32>, vector<128x384xf32>, vector<8x384xf32> -> vector<8x384xf32>
    %86 = vector.broadcast %12 : vector<1x384xf32> to vector<8x384xf32>
    %87 = arith.addf %85, %86 : vector<8x384xf32>
    %88 = vector.extract_strided_slice %84 {offsets = [0, 0], sizes = [8, 128], strides = [1, 1]} : vector<8x384xf32> to vector<8x128xf32>
    %89 = vector.extract_strided_slice %87 {offsets = [0, 0], sizes = [8, 128], strides = [1, 1]} : vector<8x384xf32> to vector<8x128xf32>
    %90 = arith.addf %88, %89 : vector<8x128xf32>
    %91 = arith.negf %90 : vector<8x128xf32>
    %92 = math.exp %91 : vector<8x128xf32>
    %cst_27 = arith.constant 1.000000e+00 : f32
    %93 = vector.broadcast %cst_27 : f32 to vector<8x128xf32>
    %94 = arith.addf %93, %92 : vector<8x128xf32>
    %95 = arith.divf %93, %94 : vector<8x128xf32>
    %96 = vector.extract_strided_slice %84 {offsets = [0, 128], sizes = [8, 128], strides = [1, 1]} : vector<8x384xf32> to vector<8x128xf32>
    %97 = vector.extract_strided_slice %87 {offsets = [0, 128], sizes = [8, 128], strides = [1, 1]} : vector<8x384xf32> to vector<8x128xf32>
    %98 = arith.addf %96, %97 : vector<8x128xf32>
    %99 = arith.negf %98 : vector<8x128xf32>
    %100 = math.exp %99 : vector<8x128xf32>
    %cst_28 = arith.constant 1.000000e+00 : f32
    %101 = vector.broadcast %cst_28 : f32 to vector<8x128xf32>
    %102 = arith.addf %101, %100 : vector<8x128xf32>
    %103 = arith.divf %101, %102 : vector<8x128xf32>
    %104 = vector.extract_strided_slice %84 {offsets = [0, 256], sizes = [8, 128], strides = [1, 1]} : vector<8x384xf32> to vector<8x128xf32>
    %105 = vector.extract_strided_slice %87 {offsets = [0, 256], sizes = [8, 128], strides = [1, 1]} : vector<8x384xf32> to vector<8x128xf32>
    %106 = arith.mulf %95, %105 : vector<8x128xf32>
    %107 = arith.addf %104, %106 : vector<8x128xf32>
    %108 = math.tanh %107 : vector<8x128xf32>
    %cst_29 = arith.constant 1.000000e+00 : f32
    %109 = vector.broadcast %cst_29 : f32 to vector<8x128xf32>
    %110 = arith.subf %109, %103 : vector<8x128xf32>
    %111 = arith.mulf %110, %108 : vector<8x128xf32>
    %112 = arith.mulf %103, %79 : vector<8x128xf32>
    %113 = arith.addf %111, %112 : vector<8x128xf32>
    %c16 = arith.constant 16 : index
    %c0_30 = arith.constant 0 : index
    %114 = vector.load %arg18[%c16, %c0_30] : memref<64x128xf32, #tpu.memory_space<vmem>>, vector<8x128xf32>
    tpu.vector_store %arg18[%c16, %c0_30], %113 {strides = array<i32>} : memref<64x128xf32, #tpu.memory_space<vmem>>, vector<8x128xf32>,
    %c40 = arith.constant 40 : index
    %c0_31 = arith.constant 0 : index
    %115 = vector.load %arg19[%c40, %c0_31] : memref<64x128xf32, #tpu.memory_space<vmem>>, vector<8x128xf32>
    tpu.vector_store %arg19[%c40, %c0_31], %113 {strides = array<i32>} : memref<64x128xf32, #tpu.memory_space<vmem>>, vector<8x128xf32>,
    %116 = vector.extract_strided_slice %10 {offsets = [24, 0], sizes = [8, 384], strides = [1, 1]} : vector<64x384xf32> to vector<8x384xf32>
    %117 = vector.extract_strided_slice %10 {offsets = [32, 0], sizes = [8, 384], strides = [1, 1]} : vector<64x384xf32> to vector<8x384xf32>
    %118 = arith.select %4, %116, %117 : vector<8x384xi1>, vector<8x384xf32>
    %cst_32 = arith.constant dense<0.000000e+00> : vector<8x384xf32>
    %119 = tpu.matmul %113, %11, %cst_32 {dimension_numbers = #tpu.dot_dimension_numbers<[1], [0], [0], [1], [0, 0, 1, 1], [], []>} : vector<8x128xf32>, vector<128x384xf32>, vector<8x384xf32> -> vector<8x384xf32>
    %120 = vector.broadcast %12 : vector<1x384xf32> to vector<8x384xf32>
    %121 = arith.addf %119, %120 : vector<8x384xf32>
    %122 = vector.extract_strided_slice %118 {offsets = [0, 0], sizes = [8, 128], strides = [1, 1]} : vector<8x384xf32> to vector<8x128xf32>
    %123 = vector.extract_strided_slice %121 {offsets = [0, 0], sizes = [8, 128], strides = [1, 1]} : vector<8x384xf32> to vector<8x128xf32>
    %124 = arith.addf %122, %123 : vector<8x128xf32>
    %125 = arith.negf %124 : vector<8x128xf32>
    %126 = math.exp %125 : vector<8x128xf32>
    %cst_33 = arith.constant 1.000000e+00 : f32
    %127 = vector.broadcast %cst_33 : f32 to vector<8x128xf32>
    %128 = arith.addf %127, %126 : vector<8x128xf32>
    %129 = arith.divf %127, %128 : vector<8x128xf32>
    %130 = vector.extract_strided_slice %118 {offsets = [0, 128], sizes = [8, 128], strides = [1, 1]} : vector<8x384xf32> to vector<8x128xf32>
    %131 = vector.extract_strided_slice %121 {offsets = [0, 128], sizes = [8, 128], strides = [1, 1]} : vector<8x384xf32> to vector<8x128xf32>
    %132 = arith.addf %130, %131 : vector<8x128xf32>
    %133 = arith.negf %132 : vector<8x128xf32>
    %134 = math.exp %133 : vector<8x128xf32>
    %cst_34 = arith.constant 1.000000e+00 : f32
    %135 = vector.broadcast %cst_34 : f32 to vector<8x128xf32>
    %136 = arith.addf %135, %134 : vector<8x128xf32>
    %137 = arith.divf %135, %136 : vector<8x128xf32>
    %138 = vector.extract_strided_slice %118 {offsets = [0, 256], sizes = [8, 128], strides = [1, 1]} : vector<8x384xf32> to vector<8x128xf32>
    %139 = vector.extract_strided_slice %121 {offsets = [0, 256], sizes = [8, 128], strides = [1, 1]} : vector<8x384xf32> to vector<8x128xf32>
    %140 = arith.mulf %129, %139 : vector<8x128xf32>
    %141 = arith.addf %138, %140 : vector<8x128xf32>
    %142 = math.tanh %141 : vector<8x128xf32>
    %cst_35 = arith.constant 1.000000e+00 : f32
    %143 = vector.broadcast %cst_35 : f32 to vector<8x128xf32>
    %144 = arith.subf %143, %137 : vector<8x128xf32>
    %145 = arith.mulf %144, %142 : vector<8x128xf32>
    %146 = arith.mulf %137, %113 : vector<8x128xf32>
    %147 = arith.addf %145, %146 : vector<8x128xf32>
    %c24 = arith.constant 24 : index
    %c0_36 = arith.constant 0 : index
    %148 = vector.load %arg18[%c24, %c0_36] : memref<64x128xf32, #tpu.memory_space<vmem>>, vector<8x128xf32>
    tpu.vector_store %arg18[%c24, %c0_36], %147 {strides = array<i32>} : memref<64x128xf32, #tpu.memory_space<vmem>>, vector<8x128xf32>,
    %c32 = arith.constant 32 : index
    %c0_37 = arith.constant 0 : index
    %149 = vector.load %arg19[%c32, %c0_37] : memref<64x128xf32, #tpu.memory_space<vmem>>, vector<8x128xf32>
    tpu.vector_store %arg19[%c32, %c0_37], %147 {strides = array<i32>} : memref<64x128xf32, #tpu.memory_space<vmem>>, vector<8x128xf32>,
    %150 = vector.extract_strided_slice %10 {offsets = [32, 0], sizes = [8, 384], strides = [1, 1]} : vector<64x384xf32> to vector<8x384xf32>
    %151 = vector.extract_strided_slice %10 {offsets = [24, 0], sizes = [8, 384], strides = [1, 1]} : vector<64x384xf32> to vector<8x384xf32>
    %152 = arith.select %4, %150, %151 : vector<8x384xi1>, vector<8x384xf32>
    %cst_38 = arith.constant dense<0.000000e+00> : vector<8x384xf32>
    %153 = tpu.matmul %147, %11, %cst_38 {dimension_numbers = #tpu.dot_dimension_numbers<[1], [0], [0], [1], [0, 0, 1, 1], [], []>} : vector<8x128xf32>, vector<128x384xf32>, vector<8x384xf32> -> vector<8x384xf32>
    %154 = vector.broadcast %12 : vector<1x384xf32> to vector<8x384xf32>
    %155 = arith.addf %153, %154 : vector<8x384xf32>
    %156 = vector.extract_strided_slice %152 {offsets = [0, 0], sizes = [8, 128], strides = [1, 1]} : vector<8x384xf32> to vector<8x128xf32>
    %157 = vector.extract_strided_slice %155 {offsets = [0, 0], sizes = [8, 128], strides = [1, 1]} : vector<8x384xf32> to vector<8x128xf32>
    %158 = arith.addf %156, %157 : vector<8x128xf32>
    %159 = arith.negf %158 : vector<8x128xf32>
    %160 = math.exp %159 : vector<8x128xf32>
    %cst_39 = arith.constant 1.000000e+00 : f32
    %161 = vector.broadcast %cst_39 : f32 to vector<8x128xf32>
    %162 = arith.addf %161, %160 : vector<8x128xf32>
    %163 = arith.divf %161, %162 : vector<8x128xf32>
    %164 = vector.extract_strided_slice %152 {offsets = [0, 128], sizes = [8, 128], strides = [1, 1]} : vector<8x384xf32> to vector<8x128xf32>
    %165 = vector.extract_strided_slice %155 {offsets = [0, 128], sizes = [8, 128], strides = [1, 1]} : vector<8x384xf32> to vector<8x128xf32>
    %166 = arith.addf %164, %165 : vector<8x128xf32>
    %167 = arith.negf %166 : vector<8x128xf32>
    %168 = math.exp %167 : vector<8x128xf32>
    %cst_40 = arith.constant 1.000000e+00 : f32
    %169 = vector.broadcast %cst_40 : f32 to vector<8x128xf32>
    %170 = arith.addf %169, %168 : vector<8x128xf32>
    %171 = arith.divf %169, %170 : vector<8x128xf32>
    %172 = vector.extract_strided_slice %152 {offsets = [0, 256], sizes = [8, 128], strides = [1, 1]} : vector<8x384xf32> to vector<8x128xf32>
    %173 = vector.extract_strided_slice %155 {offsets = [0, 256], sizes = [8, 128], strides = [1, 1]} : vector<8x384xf32> to vector<8x128xf32>
    %174 = arith.mulf %163, %173 : vector<8x128xf32>
    %175 = arith.addf %172, %174 : vector<8x128xf32>
    %176 = math.tanh %175 : vector<8x128xf32>
    %cst_41 = arith.constant 1.000000e+00 : f32
    %177 = vector.broadcast %cst_41 : f32 to vector<8x128xf32>
    %178 = arith.subf %177, %171 : vector<8x128xf32>
    %179 = arith.mulf %178, %176 : vector<8x128xf32>
    %180 = arith.mulf %171, %147 : vector<8x128xf32>
    %181 = arith.addf %179, %180 : vector<8x128xf32>
    %c32_42 = arith.constant 32 : index
    %c0_43 = arith.constant 0 : index
    %182 = vector.load %arg18[%c32_42, %c0_43] : memref<64x128xf32, #tpu.memory_space<vmem>>, vector<8x128xf32>
    tpu.vector_store %arg18[%c32_42, %c0_43], %181 {strides = array<i32>} : memref<64x128xf32, #tpu.memory_space<vmem>>, vector<8x128xf32>,
    %c24_44 = arith.constant 24 : index
    %c0_45 = arith.constant 0 : index
    %183 = vector.load %arg19[%c24_44, %c0_45] : memref<64x128xf32, #tpu.memory_space<vmem>>, vector<8x128xf32>
    tpu.vector_store %arg19[%c24_44, %c0_45], %181 {strides = array<i32>} : memref<64x128xf32, #tpu.memory_space<vmem>>, vector<8x128xf32>,
    %184 = vector.extract_strided_slice %10 {offsets = [40, 0], sizes = [8, 384], strides = [1, 1]} : vector<64x384xf32> to vector<8x384xf32>
    %185 = vector.extract_strided_slice %10 {offsets = [16, 0], sizes = [8, 384], strides = [1, 1]} : vector<64x384xf32> to vector<8x384xf32>
    %186 = arith.select %4, %184, %185 : vector<8x384xi1>, vector<8x384xf32>
    %cst_46 = arith.constant dense<0.000000e+00> : vector<8x384xf32>
    %187 = tpu.matmul %181, %11, %cst_46 {dimension_numbers = #tpu.dot_dimension_numbers<[1], [0], [0], [1], [0, 0, 1, 1], [], []>} : vector<8x128xf32>, vector<128x384xf32>, vector<8x384xf32> -> vector<8x384xf32>
    %188 = vector.broadcast %12 : vector<1x384xf32> to vector<8x384xf32>
    %189 = arith.addf %187, %188 : vector<8x384xf32>
    %190 = vector.extract_strided_slice %186 {offsets = [0, 0], sizes = [8, 128], strides = [1, 1]} : vector<8x384xf32> to vector<8x128xf32>
    %191 = vector.extract_strided_slice %189 {offsets = [0, 0], sizes = [8, 128], strides = [1, 1]} : vector<8x384xf32> to vector<8x128xf32>
    %192 = arith.addf %190, %191 : vector<8x128xf32>
    %193 = arith.negf %192 : vector<8x128xf32>
    %194 = math.exp %193 : vector<8x128xf32>
    %cst_47 = arith.constant 1.000000e+00 : f32
    %195 = vector.broadcast %cst_47 : f32 to vector<8x128xf32>
    %196 = arith.addf %195, %194 : vector<8x128xf32>
    %197 = arith.divf %195, %196 : vector<8x128xf32>
    %198 = vector.extract_strided_slice %186 {offsets = [0, 128], sizes = [8, 128], strides = [1, 1]} : vector<8x384xf32> to vector<8x128xf32>
    %199 = vector.extract_strided_slice %189 {offsets = [0, 128], sizes = [8, 128], strides = [1, 1]} : vector<8x384xf32> to vector<8x128xf32>
    %200 = arith.addf %198, %199 : vector<8x128xf32>
    %201 = arith.negf %200 : vector<8x128xf32>
    %202 = math.exp %201 : vector<8x128xf32>
    %cst_48 = arith.constant 1.000000e+00 : f32
    %203 = vector.broadcast %cst_48 : f32 to vector<8x128xf32>
    %204 = arith.addf %203, %202 : vector<8x128xf32>
    %205 = arith.divf %203, %204 : vector<8x128xf32>
    %206 = vector.extract_strided_slice %186 {offsets = [0, 256], sizes = [8, 128], strides = [1, 1]} : vector<8x384xf32> to vector<8x128xf32>
    %207 = vector.extract_strided_slice %189 {offsets = [0, 256], sizes = [8, 128], strides = [1, 1]} : vector<8x384xf32> to vector<8x128xf32>
    %208 = arith.mulf %197, %207 : vector<8x128xf32>
    %209 = arith.addf %206, %208 : vector<8x128xf32>
    %210 = math.tanh %209 : vector<8x128xf32>
    %cst_49 = arith.constant 1.000000e+00 : f32
    %211 = vector.broadcast %cst_49 : f32 to vector<8x128xf32>
    %212 = arith.subf %211, %205 : vector<8x128xf32>
    %213 = arith.mulf %212, %210 : vector<8x128xf32>
    %214 = arith.mulf %205, %181 : vector<8x128xf32>
    %215 = arith.addf %213, %214 : vector<8x128xf32>
    %c40_50 = arith.constant 40 : index
    %c0_51 = arith.constant 0 : index
    %216 = vector.load %arg18[%c40_50, %c0_51] : memref<64x128xf32, #tpu.memory_space<vmem>>, vector<8x128xf32>
    tpu.vector_store %arg18[%c40_50, %c0_51], %215 {strides = array<i32>} : memref<64x128xf32, #tpu.memory_space<vmem>>, vector<8x128xf32>,
    %c16_52 = arith.constant 16 : index
    %c0_53 = arith.constant 0 : index
    %217 = vector.load %arg19[%c16_52, %c0_53] : memref<64x128xf32, #tpu.memory_space<vmem>>, vector<8x128xf32>
    tpu.vector_store %arg19[%c16_52, %c0_53], %215 {strides = array<i32>} : memref<64x128xf32, #tpu.memory_space<vmem>>, vector<8x128xf32>,
    %218 = vector.extract_strided_slice %10 {offsets = [48, 0], sizes = [8, 384], strides = [1, 1]} : vector<64x384xf32> to vector<8x384xf32>
    %219 = vector.extract_strided_slice %10 {offsets = [8, 0], sizes = [8, 384], strides = [1, 1]} : vector<64x384xf32> to vector<8x384xf32>
    %220 = arith.select %4, %218, %219 : vector<8x384xi1>, vector<8x384xf32>
    %cst_54 = arith.constant dense<0.000000e+00> : vector<8x384xf32>
    %221 = tpu.matmul %215, %11, %cst_54 {dimension_numbers = #tpu.dot_dimension_numbers<[1], [0], [0], [1], [0, 0, 1, 1], [], []>} : vector<8x128xf32>, vector<128x384xf32>, vector<8x384xf32> -> vector<8x384xf32>
    %222 = vector.broadcast %12 : vector<1x384xf32> to vector<8x384xf32>
    %223 = arith.addf %221, %222 : vector<8x384xf32>
    %224 = vector.extract_strided_slice %220 {offsets = [0, 0], sizes = [8, 128], strides = [1, 1]} : vector<8x384xf32> to vector<8x128xf32>
    %225 = vector.extract_strided_slice %223 {offsets = [0, 0], sizes = [8, 128], strides = [1, 1]} : vector<8x384xf32> to vector<8x128xf32>
    %226 = arith.addf %224, %225 : vector<8x128xf32>
    %227 = arith.negf %226 : vector<8x128xf32>
    %228 = math.exp %227 : vector<8x128xf32>
    %cst_55 = arith.constant 1.000000e+00 : f32
    %229 = vector.broadcast %cst_55 : f32 to vector<8x128xf32>
    %230 = arith.addf %229, %228 : vector<8x128xf32>
    %231 = arith.divf %229, %230 : vector<8x128xf32>
    %232 = vector.extract_strided_slice %220 {offsets = [0, 128], sizes = [8, 128], strides = [1, 1]} : vector<8x384xf32> to vector<8x128xf32>
    %233 = vector.extract_strided_slice %223 {offsets = [0, 128], sizes = [8, 128], strides = [1, 1]} : vector<8x384xf32> to vector<8x128xf32>
    %234 = arith.addf %232, %233 : vector<8x128xf32>
    %235 = arith.negf %234 : vector<8x128xf32>
    %236 = math.exp %235 : vector<8x128xf32>
    %cst_56 = arith.constant 1.000000e+00 : f32
    %237 = vector.broadcast %cst_56 : f32 to vector<8x128xf32>
    %238 = arith.addf %237, %236 : vector<8x128xf32>
    %239 = arith.divf %237, %238 : vector<8x128xf32>
    %240 = vector.extract_strided_slice %220 {offsets = [0, 256], sizes = [8, 128], strides = [1, 1]} : vector<8x384xf32> to vector<8x128xf32>
    %241 = vector.extract_strided_slice %223 {offsets = [0, 256], sizes = [8, 128], strides = [1, 1]} : vector<8x384xf32> to vector<8x128xf32>
    %242 = arith.mulf %231, %241 : vector<8x128xf32>
    %243 = arith.addf %240, %242 : vector<8x128xf32>
    %244 = math.tanh %243 : vector<8x128xf32>
    %cst_57 = arith.constant 1.000000e+00 : f32
    %245 = vector.broadcast %cst_57 : f32 to vector<8x128xf32>
    %246 = arith.subf %245, %239 : vector<8x128xf32>
    %247 = arith.mulf %246, %244 : vector<8x128xf32>
    %248 = arith.mulf %239, %215 : vector<8x128xf32>
    %249 = arith.addf %247, %248 : vector<8x128xf32>
    %c48_58 = arith.constant 48 : index
    %c0_59 = arith.constant 0 : index
    %250 = vector.load %arg18[%c48_58, %c0_59] : memref<64x128xf32, #tpu.memory_space<vmem>>, vector<8x128xf32>
    tpu.vector_store %arg18[%c48_58, %c0_59], %249 {strides = array<i32>} : memref<64x128xf32, #tpu.memory_space<vmem>>, vector<8x128xf32>,
    %c8_60 = arith.constant 8 : index
    %c0_61 = arith.constant 0 : index
    %251 = vector.load %arg19[%c8_60, %c0_61] : memref<64x128xf32, #tpu.memory_space<vmem>>, vector<8x128xf32>
    tpu.vector_store %arg19[%c8_60, %c0_61], %249 {strides = array<i32>} : memref<64x128xf32, #tpu.memory_space<vmem>>, vector<8x128xf32>,
    %252 = vector.extract_strided_slice %10 {offsets = [56, 0], sizes = [8, 384], strides = [1, 1]} : vector<64x384xf32> to vector<8x384xf32>
    %253 = vector.extract_strided_slice %10 {offsets = [0, 0], sizes = [8, 384], strides = [1, 1]} : vector<64x384xf32> to vector<8x384xf32>
    %254 = arith.select %4, %252, %253 : vector<8x384xi1>, vector<8x384xf32>
    %cst_62 = arith.constant dense<0.000000e+00> : vector<8x384xf32>
    %255 = tpu.matmul %249, %11, %cst_62 {dimension_numbers = #tpu.dot_dimension_numbers<[1], [0], [0], [1], [0, 0, 1, 1], [], []>} : vector<8x128xf32>, vector<128x384xf32>, vector<8x384xf32> -> vector<8x384xf32>
    %256 = vector.broadcast %12 : vector<1x384xf32> to vector<8x384xf32>
    %257 = arith.addf %255, %256 : vector<8x384xf32>
    %258 = vector.extract_strided_slice %254 {offsets = [0, 0], sizes = [8, 128], strides = [1, 1]} : vector<8x384xf32> to vector<8x128xf32>
    %259 = vector.extract_strided_slice %257 {offsets = [0, 0], sizes = [8, 128], strides = [1, 1]} : vector<8x384xf32> to vector<8x128xf32>
    %260 = arith.addf %258, %259 : vector<8x128xf32>
    %261 = arith.negf %260 : vector<8x128xf32>
    %262 = math.exp %261 : vector<8x128xf32>
    %cst_63 = arith.constant 1.000000e+00 : f32
    %263 = vector.broadcast %cst_63 : f32 to vector<8x128xf32>
    %264 = arith.addf %263, %262 : vector<8x128xf32>
    %265 = arith.divf %263, %264 : vector<8x128xf32>
    %266 = vector.extract_strided_slice %254 {offsets = [0, 128], sizes = [8, 128], strides = [1, 1]} : vector<8x384xf32> to vector<8x128xf32>
    %267 = vector.extract_strided_slice %257 {offsets = [0, 128], sizes = [8, 128], strides = [1, 1]} : vector<8x384xf32> to vector<8x128xf32>
    %268 = arith.addf %266, %267 : vector<8x128xf32>
    %269 = arith.negf %268 : vector<8x128xf32>
    %270 = math.exp %269 : vector<8x128xf32>
    %cst_64 = arith.constant 1.000000e+00 : f32
    %271 = vector.broadcast %cst_64 : f32 to vector<8x128xf32>
    %272 = arith.addf %271, %270 : vector<8x128xf32>
    %273 = arith.divf %271, %272 : vector<8x128xf32>
    %274 = vector.extract_strided_slice %254 {offsets = [0, 256], sizes = [8, 128], strides = [1, 1]} : vector<8x384xf32> to vector<8x128xf32>
    %275 = vector.extract_strided_slice %257 {offsets = [0, 256], sizes = [8, 128], strides = [1, 1]} : vector<8x384xf32> to vector<8x128xf32>
    %276 = arith.mulf %265, %275 : vector<8x128xf32>
    %277 = arith.addf %274, %276 : vector<8x128xf32>
    %278 = math.tanh %277 : vector<8x128xf32>
    %cst_65 = arith.constant 1.000000e+00 : f32
    %279 = vector.broadcast %cst_65 : f32 to vector<8x128xf32>
    %280 = arith.subf %279, %273 : vector<8x128xf32>
    %281 = arith.mulf %280, %278 : vector<8x128xf32>
    %282 = arith.mulf %273, %249 : vector<8x128xf32>
    %283 = arith.addf %281, %282 : vector<8x128xf32>
    %c56_66 = arith.constant 56 : index
    %c0_67 = arith.constant 0 : index
    %284 = vector.load %arg18[%c56_66, %c0_67] : memref<64x128xf32, #tpu.memory_space<vmem>>, vector<8x128xf32>
    tpu.vector_store %arg18[%c56_66, %c0_67], %283 {strides = array<i32>} : memref<64x128xf32, #tpu.memory_space<vmem>>, vector<8x128xf32>,
    %c0_68 = arith.constant 0 : index
    %c0_69 = arith.constant 0 : index
    %285 = vector.load %arg19[%c0_68, %c0_69] : memref<64x128xf32, #tpu.memory_space<vmem>>, vector<8x128xf32>
    tpu.vector_store %arg19[%c0_68, %c0_69], %283 {strides = array<i32>} : memref<64x128xf32, #tpu.memory_space<vmem>>, vector<8x128xf32>,
    %c0_70 = arith.constant 0 : index
    %c0_71 = arith.constant 0 : index
    %286 = vector.load %arg18[%c0_70, %c0_71] : memref<64x128xf32, #tpu.memory_space<vmem>>, vector<64x128xf32>
    %c0_72 = arith.constant 0 : index
    %c0_73 = arith.constant 0 : index
    %287 = vector.load %arg6[%c0_72, %c0_73] : memref<128x384xf32, #tpu.memory_space<vmem>>, vector<128x384xf32>
    %cst_74 = arith.constant dense<0.000000e+00> : vector<64x384xf32>
    %288 = tpu.matmul %286, %287, %cst_74 {dimension_numbers = #tpu.dot_dimension_numbers<[1], [0], [0], [1], [0, 0, 1, 1], [], []>} : vector<64x128xf32>, vector<128x384xf32>, vector<64x384xf32> -> vector<64x384xf32>
    %c0_75 = arith.constant 0 : index
    %c0_76 = arith.constant 0 : index
    %289 = vector.load %arg19[%c0_75, %c0_76] : memref<64x128xf32, #tpu.memory_space<vmem>>, vector<64x128xf32>
    %c0_77 = arith.constant 0 : index
    %c0_78 = arith.constant 0 : index
    %290 = vector.load %arg7[%c0_77, %c0_78] : memref<128x384xf32, #tpu.memory_space<vmem>>, vector<128x384xf32>
    %cst_79 = arith.constant dense<0.000000e+00> : vector<64x384xf32>
    %291 = tpu.matmul %289, %290, %cst_79 {dimension_numbers = #tpu.dot_dimension_numbers<[1], [0], [0], [1], [0, 0, 1, 1], [], []>} : vector<64x128xf32>, vector<128x384xf32>, vector<64x384xf32> -> vector<64x384xf32>
    %292 = arith.addf %288, %291 : vector<64x384xf32>
    %c0_80 = arith.constant 0 : index
    %c0_81 = arith.constant 0 : index
    %293 = vector.load %arg8[%c0_80, %c0_81] : memref<1x384xf32, #tpu.memory_space<vmem>>, vector<1x384xf32>
    %294 = vector.broadcast %293 : vector<1x384xf32> to vector<64x384xf32>
    %295 = arith.addf %292, %294 : vector<64x384xf32>
    %c0_82 = arith.constant 0 : index
    %c0_83 = arith.constant 0 : index
    %296 = vector.load %arg9[%c0_82, %c0_83] : memref<128x384xf32, #tpu.memory_space<vmem>>, vector<128x384xf32>
    %c0_84 = arith.constant 0 : index
    %c0_85 = arith.constant 0 : index
    %297 = vector.load %arg10[%c0_84, %c0_85] : memref<1x384xf32, #tpu.memory_space<vmem>>, vector<1x384xf32>
    %cst_86 = arith.constant 0.000000e+00 : f32
    %298 = vector.broadcast %cst_86 : f32 to vector<8x128xf32>
    %299 = vector.extract_strided_slice %295 {offsets = [0, 0], sizes = [8, 384], strides = [1, 1]} : vector<64x384xf32> to vector<8x384xf32>
    %300 = vector.extract_strided_slice %295 {offsets = [56, 0], sizes = [8, 384], strides = [1, 1]} : vector<64x384xf32> to vector<8x384xf32>
    %301 = arith.select %4, %299, %300 : vector<8x384xi1>, vector<8x384xf32>
    %cst_87 = arith.constant dense<0.000000e+00> : vector<8x384xf32>
    %302 = tpu.matmul %298, %296, %cst_87 {dimension_numbers = #tpu.dot_dimension_numbers<[1], [0], [0], [1], [0, 0, 1, 1], [], []>} : vector<8x128xf32>, vector<128x384xf32>, vector<8x384xf32> -> vector<8x384xf32>
    %303 = vector.broadcast %297 : vector<1x384xf32> to vector<8x384xf32>
    %304 = arith.addf %302, %303 : vector<8x384xf32>
    %305 = vector.extract_strided_slice %301 {offsets = [0, 0], sizes = [8, 128], strides = [1, 1]} : vector<8x384xf32> to vector<8x128xf32>
    %306 = vector.extract_strided_slice %304 {offsets = [0, 0], sizes = [8, 128], strides = [1, 1]} : vector<8x384xf32> to vector<8x128xf32>
    %307 = arith.addf %305, %306 : vector<8x128xf32>
    %308 = arith.negf %307 : vector<8x128xf32>
    %309 = math.exp %308 : vector<8x128xf32>
    %cst_88 = arith.constant 1.000000e+00 : f32
    %310 = vector.broadcast %cst_88 : f32 to vector<8x128xf32>
    %311 = arith.addf %310, %309 : vector<8x128xf32>
    %312 = arith.divf %310, %311 : vector<8x128xf32>
    %313 = vector.extract_strided_slice %301 {offsets = [0, 128], sizes = [8, 128], strides = [1, 1]} : vector<8x384xf32> to vector<8x128xf32>
    %314 = vector.extract_strided_slice %304 {offsets = [0, 128], sizes = [8, 128], strides = [1, 1]} : vector<8x384xf32> to vector<8x128xf32>
    %315 = arith.addf %313, %314 : vector<8x128xf32>
    %316 = arith.negf %315 : vector<8x128xf32>
    %317 = math.exp %316 : vector<8x128xf32>
    %cst_89 = arith.constant 1.000000e+00 : f32
    %318 = vector.broadcast %cst_89 : f32 to vector<8x128xf32>
    %319 = arith.addf %318, %317 : vector<8x128xf32>
    %320 = arith.divf %318, %319 : vector<8x128xf32>
    %321 = vector.extract_strided_slice %301 {offsets = [0, 256], sizes = [8, 128], strides = [1, 1]} : vector<8x384xf32> to vector<8x128xf32>
    %322 = vector.extract_strided_slice %304 {offsets = [0, 256], sizes = [8, 128], strides = [1, 1]} : vector<8x384xf32> to vector<8x128xf32>
    %323 = arith.mulf %312, %322 : vector<8x128xf32>
    %324 = arith.addf %321, %323 : vector<8x128xf32>
    %325 = math.tanh %324 : vector<8x128xf32>
    %cst_90 = arith.constant 1.000000e+00 : f32
    %326 = vector.broadcast %cst_90 : f32 to vector<8x128xf32>
    %327 = arith.subf %326, %320 : vector<8x128xf32>
    %328 = arith.mulf %327, %325 : vector<8x128xf32>
    %329 = arith.mulf %320, %298 : vector<8x128xf32>
    %330 = arith.addf %328, %329 : vector<8x128xf32>
    %331 = vector.extract_strided_slice %295 {offsets = [8, 0], sizes = [8, 384], strides = [1, 1]} : vector<64x384xf32> to vector<8x384xf32>
    %332 = vector.extract_strided_slice %295 {offsets = [48, 0], sizes = [8, 384], strides = [1, 1]} : vector<64x384xf32> to vector<8x384xf32>
    %333 = arith.select %4, %331, %332 : vector<8x384xi1>, vector<8x384xf32>
    %cst_91 = arith.constant dense<0.000000e+00> : vector<8x384xf32>
    %334 = tpu.matmul %330, %296, %cst_91 {dimension_numbers = #tpu.dot_dimension_numbers<[1], [0], [0], [1], [0, 0, 1, 1], [], []>} : vector<8x128xf32>, vector<128x384xf32>, vector<8x384xf32> -> vector<8x384xf32>
    %335 = vector.broadcast %297 : vector<1x384xf32> to vector<8x384xf32>
    %336 = arith.addf %334, %335 : vector<8x384xf32>
    %337 = vector.extract_strided_slice %333 {offsets = [0, 0], sizes = [8, 128], strides = [1, 1]} : vector<8x384xf32> to vector<8x128xf32>
    %338 = vector.extract_strided_slice %336 {offsets = [0, 0], sizes = [8, 128], strides = [1, 1]} : vector<8x384xf32> to vector<8x128xf32>
    %339 = arith.addf %337, %338 : vector<8x128xf32>
    %340 = arith.negf %339 : vector<8x128xf32>
    %341 = math.exp %340 : vector<8x128xf32>
    %cst_92 = arith.constant 1.000000e+00 : f32
    %342 = vector.broadcast %cst_92 : f32 to vector<8x128xf32>
    %343 = arith.addf %342, %341 : vector<8x128xf32>
    %344 = arith.divf %342, %343 : vector<8x128xf32>
    %345 = vector.extract_strided_slice %333 {offsets = [0, 128], sizes = [8, 128], strides = [1, 1]} : vector<8x384xf32> to vector<8x128xf32>
    %346 = vector.extract_strided_slice %336 {offsets = [0, 128], sizes = [8, 128], strides = [1, 1]} : vector<8x384xf32> to vector<8x128xf32>
    %347 = arith.addf %345, %346 : vector<8x128xf32>
    %348 = arith.negf %347 : vector<8x128xf32>
    %349 = math.exp %348 : vector<8x128xf32>
    %cst_93 = arith.constant 1.000000e+00 : f32
    %350 = vector.broadcast %cst_93 : f32 to vector<8x128xf32>
    %351 = arith.addf %350, %349 : vector<8x128xf32>
    %352 = arith.divf %350, %351 : vector<8x128xf32>
    %353 = vector.extract_strided_slice %333 {offsets = [0, 256], sizes = [8, 128], strides = [1, 1]} : vector<8x384xf32> to vector<8x128xf32>
    %354 = vector.extract_strided_slice %336 {offsets = [0, 256], sizes = [8, 128], strides = [1, 1]} : vector<8x384xf32> to vector<8x128xf32>
    %355 = arith.mulf %344, %354 : vector<8x128xf32>
    %356 = arith.addf %353, %355 : vector<8x128xf32>
    %357 = math.tanh %356 : vector<8x128xf32>
    %cst_94 = arith.constant 1.000000e+00 : f32
    %358 = vector.broadcast %cst_94 : f32 to vector<8x128xf32>
    %359 = arith.subf %358, %352 : vector<8x128xf32>
    %360 = arith.mulf %359, %357 : vector<8x128xf32>
    %361 = arith.mulf %352, %330 : vector<8x128xf32>
    %362 = arith.addf %360, %361 : vector<8x128xf32>
    %363 = vector.extract_strided_slice %295 {offsets = [16, 0], sizes = [8, 384], strides = [1, 1]} : vector<64x384xf32> to vector<8x384xf32>
    %364 = vector.extract_strided_slice %295 {offsets = [40, 0], sizes = [8, 384], strides = [1, 1]} : vector<64x384xf32> to vector<8x384xf32>
    %365 = arith.select %4, %363, %364 : vector<8x384xi1>, vector<8x384xf32>
    %cst_95 = arith.constant dense<0.000000e+00> : vector<8x384xf32>
    %366 = tpu.matmul %362, %296, %cst_95 {dimension_numbers = #tpu.dot_dimension_numbers<[1], [0], [0], [1], [0, 0, 1, 1], [], []>} : vector<8x128xf32>, vector<128x384xf32>, vector<8x384xf32> -> vector<8x384xf32>
    %367 = vector.broadcast %297 : vector<1x384xf32> to vector<8x384xf32>
    %368 = arith.addf %366, %367 : vector<8x384xf32>
    %369 = vector.extract_strided_slice %365 {offsets = [0, 0], sizes = [8, 128], strides = [1, 1]} : vector<8x384xf32> to vector<8x128xf32>
    %370 = vector.extract_strided_slice %368 {offsets = [0, 0], sizes = [8, 128], strides = [1, 1]} : vector<8x384xf32> to vector<8x128xf32>
    %371 = arith.addf %369, %370 : vector<8x128xf32>
    %372 = arith.negf %371 : vector<8x128xf32>
    %373 = math.exp %372 : vector<8x128xf32>
    %cst_96 = arith.constant 1.000000e+00 : f32
    %374 = vector.broadcast %cst_96 : f32 to vector<8x128xf32>
    %375 = arith.addf %374, %373 : vector<8x128xf32>
    %376 = arith.divf %374, %375 : vector<8x128xf32>
    %377 = vector.extract_strided_slice %365 {offsets = [0, 128], sizes = [8, 128], strides = [1, 1]} : vector<8x384xf32> to vector<8x128xf32>
    %378 = vector.extract_strided_slice %368 {offsets = [0, 128], sizes = [8, 128], strides = [1, 1]} : vector<8x384xf32> to vector<8x128xf32>
    %379 = arith.addf %377, %378 : vector<8x128xf32>
    %380 = arith.negf %379 : vector<8x128xf32>
    %381 = math.exp %380 : vector<8x128xf32>
    %cst_97 = arith.constant 1.000000e+00 : f32
    %382 = vector.broadcast %cst_97 : f32 to vector<8x128xf32>
    %383 = arith.addf %382, %381 : vector<8x128xf32>
    %384 = arith.divf %382, %383 : vector<8x128xf32>
    %385 = vector.extract_strided_slice %365 {offsets = [0, 256], sizes = [8, 128], strides = [1, 1]} : vector<8x384xf32> to vector<8x128xf32>
    %386 = vector.extract_strided_slice %368 {offsets = [0, 256], sizes = [8, 128], strides = [1, 1]} : vector<8x384xf32> to vector<8x128xf32>
    %387 = arith.mulf %376, %386 : vector<8x128xf32>
    %388 = arith.addf %385, %387 : vector<8x128xf32>
    %389 = math.tanh %388 : vector<8x128xf32>
    %cst_98 = arith.constant 1.000000e+00 : f32
    %390 = vector.broadcast %cst_98 : f32 to vector<8x128xf32>
    %391 = arith.subf %390, %384 : vector<8x128xf32>
    %392 = arith.mulf %391, %389 : vector<8x128xf32>
    %393 = arith.mulf %384, %362 : vector<8x128xf32>
    %394 = arith.addf %392, %393 : vector<8x128xf32>
    %395 = vector.extract_strided_slice %295 {offsets = [24, 0], sizes = [8, 384], strides = [1, 1]} : vector<64x384xf32> to vector<8x384xf32>
    %396 = vector.extract_strided_slice %295 {offsets = [32, 0], sizes = [8, 384], strides = [1, 1]} : vector<64x384xf32> to vector<8x384xf32>
    %397 = arith.select %4, %395, %396 : vector<8x384xi1>, vector<8x384xf32>
    %cst_99 = arith.constant dense<0.000000e+00> : vector<8x384xf32>
    %398 = tpu.matmul %394, %296, %cst_99 {dimension_numbers = #tpu.dot_dimension_numbers<[1], [0], [0], [1], [0, 0, 1, 1], [], []>} : vector<8x128xf32>, vector<128x384xf32>, vector<8x384xf32> -> vector<8x384xf32>
    %399 = vector.broadcast %297 : vector<1x384xf32> to vector<8x384xf32>
    %400 = arith.addf %398, %399 : vector<8x384xf32>
    %401 = vector.extract_strided_slice %397 {offsets = [0, 0], sizes = [8, 128], strides = [1, 1]} : vector<8x384xf32> to vector<8x128xf32>
    %402 = vector.extract_strided_slice %400 {offsets = [0, 0], sizes = [8, 128], strides = [1, 1]} : vector<8x384xf32> to vector<8x128xf32>
    %403 = arith.addf %401, %402 : vector<8x128xf32>
    %404 = arith.negf %403 : vector<8x128xf32>
    %405 = math.exp %404 : vector<8x128xf32>
    %cst_100 = arith.constant 1.000000e+00 : f32
    %406 = vector.broadcast %cst_100 : f32 to vector<8x128xf32>
    %407 = arith.addf %406, %405 : vector<8x128xf32>
    %408 = arith.divf %406, %407 : vector<8x128xf32>
    %409 = vector.extract_strided_slice %397 {offsets = [0, 128], sizes = [8, 128], strides = [1, 1]} : vector<8x384xf32> to vector<8x128xf32>
    %410 = vector.extract_strided_slice %400 {offsets = [0, 128], sizes = [8, 128], strides = [1, 1]} : vector<8x384xf32> to vector<8x128xf32>
    %411 = arith.addf %409, %410 : vector<8x128xf32>
    %412 = arith.negf %411 : vector<8x128xf32>
    %413 = math.exp %412 : vector<8x128xf32>
    %cst_101 = arith.constant 1.000000e+00 : f32
    %414 = vector.broadcast %cst_101 : f32 to vector<8x128xf32>
    %415 = arith.addf %414, %413 : vector<8x128xf32>
    %416 = arith.divf %414, %415 : vector<8x128xf32>
    %417 = vector.extract_strided_slice %397 {offsets = [0, 256], sizes = [8, 128], strides = [1, 1]} : vector<8x384xf32> to vector<8x128xf32>
    %418 = vector.extract_strided_slice %400 {offsets = [0, 256], sizes = [8, 128], strides = [1, 1]} : vector<8x384xf32> to vector<8x128xf32>
    %419 = arith.mulf %408, %418 : vector<8x128xf32>
    %420 = arith.addf %417, %419 : vector<8x128xf32>
    %421 = math.tanh %420 : vector<8x128xf32>
    %cst_102 = arith.constant 1.000000e+00 : f32
    %422 = vector.broadcast %cst_102 : f32 to vector<8x128xf32>
    %423 = arith.subf %422, %416 : vector<8x128xf32>
    %424 = arith.mulf %423, %421 : vector<8x128xf32>
    %425 = arith.mulf %416, %394 : vector<8x128xf32>
    %426 = arith.addf %424, %425 : vector<8x128xf32>
    %427 = vector.extract_strided_slice %295 {offsets = [32, 0], sizes = [8, 384], strides = [1, 1]} : vector<64x384xf32> to vector<8x384xf32>
    %428 = vector.extract_strided_slice %295 {offsets = [24, 0], sizes = [8, 384], strides = [1, 1]} : vector<64x384xf32> to vector<8x384xf32>
    %429 = arith.select %4, %427, %428 : vector<8x384xi1>, vector<8x384xf32>
    %cst_103 = arith.constant dense<0.000000e+00> : vector<8x384xf32>
    %430 = tpu.matmul %426, %296, %cst_103 {dimension_numbers = #tpu.dot_dimension_numbers<[1], [0], [0], [1], [0, 0, 1, 1], [], []>} : vector<8x128xf32>, vector<128x384xf32>, vector<8x384xf32> -> vector<8x384xf32>
    %431 = vector.broadcast %297 : vector<1x384xf32> to vector<8x384xf32>
    %432 = arith.addf %430, %431 : vector<8x384xf32>
    %433 = vector.extract_strided_slice %429 {offsets = [0, 0], sizes = [8, 128], strides = [1, 1]} : vector<8x384xf32> to vector<8x128xf32>
    %434 = vector.extract_strided_slice %432 {offsets = [0, 0], sizes = [8, 128], strides = [1, 1]} : vector<8x384xf32> to vector<8x128xf32>
    %435 = arith.addf %433, %434 : vector<8x128xf32>
    %436 = arith.negf %435 : vector<8x128xf32>
    %437 = math.exp %436 : vector<8x128xf32>
    %cst_104 = arith.constant 1.000000e+00 : f32
    %438 = vector.broadcast %cst_104 : f32 to vector<8x128xf32>
    %439 = arith.addf %438, %437 : vector<8x128xf32>
    %440 = arith.divf %438, %439 : vector<8x128xf32>
    %441 = vector.extract_strided_slice %429 {offsets = [0, 128], sizes = [8, 128], strides = [1, 1]} : vector<8x384xf32> to vector<8x128xf32>
    %442 = vector.extract_strided_slice %432 {offsets = [0, 128], sizes = [8, 128], strides = [1, 1]} : vector<8x384xf32> to vector<8x128xf32>
    %443 = arith.addf %441, %442 : vector<8x128xf32>
    %444 = arith.negf %443 : vector<8x128xf32>
    %445 = math.exp %444 : vector<8x128xf32>
    %cst_105 = arith.constant 1.000000e+00 : f32
    %446 = vector.broadcast %cst_105 : f32 to vector<8x128xf32>
    %447 = arith.addf %446, %445 : vector<8x128xf32>
    %448 = arith.divf %446, %447 : vector<8x128xf32>
    %449 = vector.extract_strided_slice %429 {offsets = [0, 256], sizes = [8, 128], strides = [1, 1]} : vector<8x384xf32> to vector<8x128xf32>
    %450 = vector.extract_strided_slice %432 {offsets = [0, 256], sizes = [8, 128], strides = [1, 1]} : vector<8x384xf32> to vector<8x128xf32>
    %451 = arith.mulf %440, %450 : vector<8x128xf32>
    %452 = arith.addf %449, %451 : vector<8x128xf32>
    %453 = math.tanh %452 : vector<8x128xf32>
    %cst_106 = arith.constant 1.000000e+00 : f32
    %454 = vector.broadcast %cst_106 : f32 to vector<8x128xf32>
    %455 = arith.subf %454, %448 : vector<8x128xf32>
    %456 = arith.mulf %455, %453 : vector<8x128xf32>
    %457 = arith.mulf %448, %426 : vector<8x128xf32>
    %458 = arith.addf %456, %457 : vector<8x128xf32>
    %459 = vector.extract_strided_slice %295 {offsets = [40, 0], sizes = [8, 384], strides = [1, 1]} : vector<64x384xf32> to vector<8x384xf32>
    %460 = vector.extract_strided_slice %295 {offsets = [16, 0], sizes = [8, 384], strides = [1, 1]} : vector<64x384xf32> to vector<8x384xf32>
    %461 = arith.select %4, %459, %460 : vector<8x384xi1>, vector<8x384xf32>
    %cst_107 = arith.constant dense<0.000000e+00> : vector<8x384xf32>
    %462 = tpu.matmul %458, %296, %cst_107 {dimension_numbers = #tpu.dot_dimension_numbers<[1], [0], [0], [1], [0, 0, 1, 1], [], []>} : vector<8x128xf32>, vector<128x384xf32>, vector<8x384xf32> -> vector<8x384xf32>
    %463 = vector.broadcast %297 : vector<1x384xf32> to vector<8x384xf32>
    %464 = arith.addf %462, %463 : vector<8x384xf32>
    %465 = vector.extract_strided_slice %461 {offsets = [0, 0], sizes = [8, 128], strides = [1, 1]} : vector<8x384xf32> to vector<8x128xf32>
    %466 = vector.extract_strided_slice %464 {offsets = [0, 0], sizes = [8, 128], strides = [1, 1]} : vector<8x384xf32> to vector<8x128xf32>
    %467 = arith.addf %465, %466 : vector<8x128xf32>
    %468 = arith.negf %467 : vector<8x128xf32>
    %469 = math.exp %468 : vector<8x128xf32>
    %cst_108 = arith.constant 1.000000e+00 : f32
    %470 = vector.broadcast %cst_108 : f32 to vector<8x128xf32>
    %471 = arith.addf %470, %469 : vector<8x128xf32>
    %472 = arith.divf %470, %471 : vector<8x128xf32>
    %473 = vector.extract_strided_slice %461 {offsets = [0, 128], sizes = [8, 128], strides = [1, 1]} : vector<8x384xf32> to vector<8x128xf32>
    %474 = vector.extract_strided_slice %464 {offsets = [0, 128], sizes = [8, 128], strides = [1, 1]} : vector<8x384xf32> to vector<8x128xf32>
    %475 = arith.addf %473, %474 : vector<8x128xf32>
    %476 = arith.negf %475 : vector<8x128xf32>
    %477 = math.exp %476 : vector<8x128xf32>
    %cst_109 = arith.constant 1.000000e+00 : f32
    %478 = vector.broadcast %cst_109 : f32 to vector<8x128xf32>
    %479 = arith.addf %478, %477 : vector<8x128xf32>
    %480 = arith.divf %478, %479 : vector<8x128xf32>
    %481 = vector.extract_strided_slice %461 {offsets = [0, 256], sizes = [8, 128], strides = [1, 1]} : vector<8x384xf32> to vector<8x128xf32>
    %482 = vector.extract_strided_slice %464 {offsets = [0, 256], sizes = [8, 128], strides = [1, 1]} : vector<8x384xf32> to vector<8x128xf32>
    %483 = arith.mulf %472, %482 : vector<8x128xf32>
    %484 = arith.addf %481, %483 : vector<8x128xf32>
    %485 = math.tanh %484 : vector<8x128xf32>
    %cst_110 = arith.constant 1.000000e+00 : f32
    %486 = vector.broadcast %cst_110 : f32 to vector<8x128xf32>
    %487 = arith.subf %486, %480 : vector<8x128xf32>
    %488 = arith.mulf %487, %485 : vector<8x128xf32>
    %489 = arith.mulf %480, %458 : vector<8x128xf32>
    %490 = arith.addf %488, %489 : vector<8x128xf32>
    %491 = vector.extract_strided_slice %295 {offsets = [48, 0], sizes = [8, 384], strides = [1, 1]} : vector<64x384xf32> to vector<8x384xf32>
    %492 = vector.extract_strided_slice %295 {offsets = [8, 0], sizes = [8, 384], strides = [1, 1]} : vector<64x384xf32> to vector<8x384xf32>
    %493 = arith.select %4, %491, %492 : vector<8x384xi1>, vector<8x384xf32>
    %cst_111 = arith.constant dense<0.000000e+00> : vector<8x384xf32>
    %494 = tpu.matmul %490, %296, %cst_111 {dimension_numbers = #tpu.dot_dimension_numbers<[1], [0], [0], [1], [0, 0, 1, 1], [], []>} : vector<8x128xf32>, vector<128x384xf32>, vector<8x384xf32> -> vector<8x384xf32>
    %495 = vector.broadcast %297 : vector<1x384xf32> to vector<8x384xf32>
    %496 = arith.addf %494, %495 : vector<8x384xf32>
    %497 = vector.extract_strided_slice %493 {offsets = [0, 0], sizes = [8, 128], strides = [1, 1]} : vector<8x384xf32> to vector<8x128xf32>
    %498 = vector.extract_strided_slice %496 {offsets = [0, 0], sizes = [8, 128], strides = [1, 1]} : vector<8x384xf32> to vector<8x128xf32>
    %499 = arith.addf %497, %498 : vector<8x128xf32>
    %500 = arith.negf %499 : vector<8x128xf32>
    %501 = math.exp %500 : vector<8x128xf32>
    %cst_112 = arith.constant 1.000000e+00 : f32
    %502 = vector.broadcast %cst_112 : f32 to vector<8x128xf32>
    %503 = arith.addf %502, %501 : vector<8x128xf32>
    %504 = arith.divf %502, %503 : vector<8x128xf32>
    %505 = vector.extract_strided_slice %493 {offsets = [0, 128], sizes = [8, 128], strides = [1, 1]} : vector<8x384xf32> to vector<8x128xf32>
    %506 = vector.extract_strided_slice %496 {offsets = [0, 128], sizes = [8, 128], strides = [1, 1]} : vector<8x384xf32> to vector<8x128xf32>
    %507 = arith.addf %505, %506 : vector<8x128xf32>
    %508 = arith.negf %507 : vector<8x128xf32>
    %509 = math.exp %508 : vector<8x128xf32>
    %cst_113 = arith.constant 1.000000e+00 : f32
    %510 = vector.broadcast %cst_113 : f32 to vector<8x128xf32>
    %511 = arith.addf %510, %509 : vector<8x128xf32>
    %512 = arith.divf %510, %511 : vector<8x128xf32>
    %513 = vector.extract_strided_slice %493 {offsets = [0, 256], sizes = [8, 128], strides = [1, 1]} : vector<8x384xf32> to vector<8x128xf32>
    %514 = vector.extract_strided_slice %496 {offsets = [0, 256], sizes = [8, 128], strides = [1, 1]} : vector<8x384xf32> to vector<8x128xf32>
    %515 = arith.mulf %504, %514 : vector<8x128xf32>
    %516 = arith.addf %513, %515 : vector<8x128xf32>
    %517 = math.tanh %516 : vector<8x128xf32>
    %cst_114 = arith.constant 1.000000e+00 : f32
    %518 = vector.broadcast %cst_114 : f32 to vector<8x128xf32>
    %519 = arith.subf %518, %512 : vector<8x128xf32>
    %520 = arith.mulf %519, %517 : vector<8x128xf32>
    %521 = arith.mulf %512, %490 : vector<8x128xf32>
    %522 = arith.addf %520, %521 : vector<8x128xf32>
    %523 = vector.extract_strided_slice %295 {offsets = [56, 0], sizes = [8, 384], strides = [1, 1]} : vector<64x384xf32> to vector<8x384xf32>
    %524 = vector.extract_strided_slice %295 {offsets = [0, 0], sizes = [8, 384], strides = [1, 1]} : vector<64x384xf32> to vector<8x384xf32>
    %525 = arith.select %4, %523, %524 : vector<8x384xi1>, vector<8x384xf32>
    %cst_115 = arith.constant dense<0.000000e+00> : vector<8x384xf32>
    %526 = tpu.matmul %522, %296, %cst_115 {dimension_numbers = #tpu.dot_dimension_numbers<[1], [0], [0], [1], [0, 0, 1, 1], [], []>} : vector<8x128xf32>, vector<128x384xf32>, vector<8x384xf32> -> vector<8x384xf32>
    %527 = vector.broadcast %297 : vector<1x384xf32> to vector<8x384xf32>
    %528 = arith.addf %526, %527 : vector<8x384xf32>
    %529 = vector.extract_strided_slice %525 {offsets = [0, 0], sizes = [8, 128], strides = [1, 1]} : vector<8x384xf32> to vector<8x128xf32>
    %530 = vector.extract_strided_slice %528 {offsets = [0, 0], sizes = [8, 128], strides = [1, 1]} : vector<8x384xf32> to vector<8x128xf32>
    %531 = arith.addf %529, %530 : vector<8x128xf32>
    %532 = arith.negf %531 : vector<8x128xf32>
    %533 = math.exp %532 : vector<8x128xf32>
    %cst_116 = arith.constant 1.000000e+00 : f32
    %534 = vector.broadcast %cst_116 : f32 to vector<8x128xf32>
    %535 = arith.addf %534, %533 : vector<8x128xf32>
    %536 = arith.divf %534, %535 : vector<8x128xf32>
    %537 = vector.extract_strided_slice %525 {offsets = [0, 128], sizes = [8, 128], strides = [1, 1]} : vector<8x384xf32> to vector<8x128xf32>
    %538 = vector.extract_strided_slice %528 {offsets = [0, 128], sizes = [8, 128], strides = [1, 1]} : vector<8x384xf32> to vector<8x128xf32>
    %539 = arith.addf %537, %538 : vector<8x128xf32>
    %540 = arith.negf %539 : vector<8x128xf32>
    %541 = math.exp %540 : vector<8x128xf32>
    %cst_117 = arith.constant 1.000000e+00 : f32
    %542 = vector.broadcast %cst_117 : f32 to vector<8x128xf32>
    %543 = arith.addf %542, %541 : vector<8x128xf32>
    %544 = arith.divf %542, %543 : vector<8x128xf32>
    %545 = vector.extract_strided_slice %525 {offsets = [0, 256], sizes = [8, 128], strides = [1, 1]} : vector<8x384xf32> to vector<8x128xf32>
    %546 = vector.extract_strided_slice %528 {offsets = [0, 256], sizes = [8, 128], strides = [1, 1]} : vector<8x384xf32> to vector<8x128xf32>
    %547 = arith.mulf %536, %546 : vector<8x128xf32>
    %548 = arith.addf %545, %547 : vector<8x128xf32>
    %549 = math.tanh %548 : vector<8x128xf32>
    %cst_118 = arith.constant 1.000000e+00 : f32
    %550 = vector.broadcast %cst_118 : f32 to vector<8x128xf32>
    %551 = arith.subf %550, %544 : vector<8x128xf32>
    %552 = arith.mulf %551, %549 : vector<8x128xf32>
    %553 = arith.mulf %544, %522 : vector<8x128xf32>
    %554 = arith.addf %552, %553 : vector<8x128xf32>
    %cst_119 = arith.constant 0.000000e+00 : f32
    %555 = vector.broadcast %cst_119 : f32 to vector<8x32xf32>
    %c0_120 = arith.constant 0 : index
    %c0_121 = arith.constant 0 : index
    %c0_122 = arith.constant 0 : index
    %556 = vector.load %arg11[%c0_120, %c0_121, %c0_122] : memref<2x128x32xf32, #tpu.memory_space<vmem>>, vector<1x128x32xf32>
    %557 = vector.shape_cast %556 : vector<1x128x32xf32> to vector<128x32xf32>
    %cst_123 = arith.constant dense<0.000000e+00> : vector<8x32xf32>
    %558 = tpu.matmul %554, %557, %cst_123 {dimension_numbers = #tpu.dot_dimension_numbers<[1], [0], [0], [1], [0, 0, 1, 1], [], []>} : vector<8x128xf32>, vector<128x32xf32>, vector<8x32xf32> -> vector<8x32xf32>
    %c0_124 = arith.constant 0 : index
    %c0_125 = arith.constant 0 : index
    %c0_126 = arith.constant 0 : index
    %559 = vector.load %arg12[%c0_124, %c0_125, %c0_126] : memref<2x1x32xf32, #tpu.memory_space<vmem>>, vector<1x1x32xf32>
    %560 = vector.shape_cast %559 : vector<1x1x32xf32> to vector<1x32xf32>
    %561 = vector.broadcast %560 : vector<1x32xf32> to vector<8x32xf32>
    %562 = arith.addf %558, %561 : vector<8x32xf32>
    %cst_127 = arith.constant dense<0.000000e+00> : vector<8xf32>
    %563 = vector.multi_reduction <add>, %562, %cst_127 [1] : vector<8x32xf32> to vector<8xf32>
    %564 = vector.shape_cast %563 : vector<8xf32> to vector<8x1xf32>
    %cst_128 = arith.constant 3.200000e+01 : f32
    %565 = vector.broadcast %cst_128 : f32 to vector<8x1xf32>
    %566 = arith.divf %564, %565 : vector<8x1xf32>
    %567 = vector.broadcast %566 : vector<8x1xf32> to vector<8x32xf32>
    %568 = arith.subf %562, %567 : vector<8x32xf32>
    %569 = arith.mulf %568, %568 : vector<8x32xf32>
    %cst_129 = arith.constant dense<0.000000e+00> : vector<8xf32>
    %570 = vector.multi_reduction <add>, %569, %cst_129 [1] : vector<8x32xf32> to vector<8xf32>
    %571 = vector.shape_cast %570 : vector<8xf32> to vector<8x1xf32>
    %cst_130 = arith.constant 3.200000e+01 : f32
    %572 = vector.broadcast %cst_130 : f32 to vector<8x1xf32>
    %573 = arith.divf %571, %572 : vector<8x1xf32>
    %574 = vector.broadcast %566 : vector<8x1xf32> to vector<8x32xf32>
    %575 = arith.subf %562, %574 : vector<8x32xf32>
    %cst_131 = arith.constant 9.99999974E-6 : f32
    %576 = vector.broadcast %cst_131 : f32 to vector<8x1xf32>
    %577 = arith.addf %573, %576 : vector<8x1xf32>
    %578 = math.rsqrt %577 : vector<8x1xf32>
    %579 = vector.broadcast %578 : vector<8x1xf32> to vector<8x32xf32>
    %580 = arith.mulf %575, %579 : vector<8x32xf32>
    %c0_132 = arith.constant 0 : index
    %c0_133 = arith.constant 0 : index
    %c0_134 = arith.constant 0 : index
    %581 = vector.load %arg13[%c0_132, %c0_133, %c0_134] : memref<2x1x32xf32, #tpu.memory_space<vmem>>, vector<1x1x32xf32>
    %582 = vector.shape_cast %581 : vector<1x1x32xf32> to vector<1x32xf32>
    %583 = vector.broadcast %582 : vector<1x32xf32> to vector<8x32xf32>
    %584 = arith.mulf %580, %583 : vector<8x32xf32>
    %c0_135 = arith.constant 0 : index
    %c0_136 = arith.constant 0 : index
    %c0_137 = arith.constant 0 : index
    %585 = vector.load %arg14[%c0_135, %c0_136, %c0_137] : memref<2x1x32xf32, #tpu.memory_space<vmem>>, vector<1x1x32xf32>
    %586 = vector.shape_cast %585 : vector<1x1x32xf32> to vector<1x32xf32>
    %587 = vector.broadcast %586 : vector<1x32xf32> to vector<8x32xf32>
    %588 = arith.addf %584, %587 : vector<8x32xf32>
    %cst_138 = arith.constant 0.000000e+00 : f32
    %589 = vector.broadcast %cst_138 : f32 to vector<8x32xf32>
    %590 = arith.maximumf %588, %589 : vector<8x32xf32>
    %c0_139 = arith.constant 0 : index
    %c0_140 = arith.constant 0 : index
    %c0_141 = arith.constant 0 : index
    %591 = vector.load %arg15[%c0_139, %c0_140, %c0_141] : memref<2x32x32xf32, #tpu.memory_space<vmem>>, vector<1x32x32xf32>
    %592 = vector.shape_cast %591 : vector<1x32x32xf32> to vector<32x32xf32>
    %cst_142 = arith.constant dense<0.000000e+00> : vector<8x32xf32>
    %593 = tpu.matmul %590, %592, %cst_142 {dimension_numbers = #tpu.dot_dimension_numbers<[1], [0], [0], [1], [0, 0, 1, 1], [], []>} : vector<8x32xf32>, vector<32x32xf32>, vector<8x32xf32> -> vector<8x32xf32>
    %594 = arith.addf %555, %593 : vector<8x32xf32>
    %c0_143 = arith.constant 0 : index
    %c0_144 = arith.constant 0 : index
    %c0_145 = arith.constant 0 : index
    %595 = vector.load %arg16[%c0_143, %c0_144, %c0_145] : memref<2x1x32xf32, #tpu.memory_space<vmem>>, vector<1x1x32xf32>
    %596 = vector.shape_cast %595 : vector<1x1x32xf32> to vector<1x32xf32>
    %597 = vector.broadcast %596 : vector<1x32xf32> to vector<8x32xf32>
    %598 = arith.addf %594, %597 : vector<8x32xf32>
    %c1 = arith.constant 1 : index
    %c0_146 = arith.constant 0 : index
    %c0_147 = arith.constant 0 : index
    %599 = vector.load %arg11[%c1, %c0_146, %c0_147] : memref<2x128x32xf32, #tpu.memory_space<vmem>>, vector<1x128x32xf32>
    %600 = vector.shape_cast %599 : vector<1x128x32xf32> to vector<128x32xf32>
    %cst_148 = arith.constant dense<0.000000e+00> : vector<8x32xf32>
    %601 = tpu.matmul %554, %600, %cst_148 {dimension_numbers = #tpu.dot_dimension_numbers<[1], [0], [0], [1], [0, 0, 1, 1], [], []>} : vector<8x128xf32>, vector<128x32xf32>, vector<8x32xf32> -> vector<8x32xf32>
    %c1_149 = arith.constant 1 : index
    %c0_150 = arith.constant 0 : index
    %c0_151 = arith.constant 0 : index
    %602 = vector.load %arg12[%c1_149, %c0_150, %c0_151] : memref<2x1x32xf32, #tpu.memory_space<vmem>>, vector<1x1x32xf32>
    %603 = vector.shape_cast %602 : vector<1x1x32xf32> to vector<1x32xf32>
    %604 = vector.broadcast %603 : vector<1x32xf32> to vector<8x32xf32>
    %605 = arith.addf %601, %604 : vector<8x32xf32>
    %cst_152 = arith.constant dense<0.000000e+00> : vector<8xf32>
    %606 = vector.multi_reduction <add>, %605, %cst_152 [1] : vector<8x32xf32> to vector<8xf32>
    %607 = vector.shape_cast %606 : vector<8xf32> to vector<8x1xf32>
    %cst_153 = arith.constant 3.200000e+01 : f32
    %608 = vector.broadcast %cst_153 : f32 to vector<8x1xf32>
    %609 = arith.divf %607, %608 : vector<8x1xf32>
    %610 = vector.broadcast %609 : vector<8x1xf32> to vector<8x32xf32>
    %611 = arith.subf %605, %610 : vector<8x32xf32>
    %612 = arith.mulf %611, %611 : vector<8x32xf32>
    %cst_154 = arith.constant dense<0.000000e+00> : vector<8xf32>
    %613 = vector.multi_reduction <add>, %612, %cst_154 [1] : vector<8x32xf32> to vector<8xf32>
    %614 = vector.shape_cast %613 : vector<8xf32> to vector<8x1xf32>
    %cst_155 = arith.constant 3.200000e+01 : f32
    %615 = vector.broadcast %cst_155 : f32 to vector<8x1xf32>
    %616 = arith.divf %614, %615 : vector<8x1xf32>
    %617 = vector.broadcast %609 : vector<8x1xf32> to vector<8x32xf32>
    %618 = arith.subf %605, %617 : vector<8x32xf32>
    %cst_156 = arith.constant 9.99999974E-6 : f32
    %619 = vector.broadcast %cst_156 : f32 to vector<8x1xf32>
    %620 = arith.addf %616, %619 : vector<8x1xf32>
    %621 = math.rsqrt %620 : vector<8x1xf32>
    %622 = vector.broadcast %621 : vector<8x1xf32> to vector<8x32xf32>
    %623 = arith.mulf %618, %622 : vector<8x32xf32>
    %c1_157 = arith.constant 1 : index
    %c0_158 = arith.constant 0 : index
    %c0_159 = arith.constant 0 : index
    %624 = vector.load %arg13[%c1_157, %c0_158, %c0_159] : memref<2x1x32xf32, #tpu.memory_space<vmem>>, vector<1x1x32xf32>
    %625 = vector.shape_cast %624 : vector<1x1x32xf32> to vector<1x32xf32>
    %626 = vector.broadcast %625 : vector<1x32xf32> to vector<8x32xf32>
    %627 = arith.mulf %623, %626 : vector<8x32xf32>
    %c1_160 = arith.constant 1 : index
    %c0_161 = arith.constant 0 : index
    %c0_162 = arith.constant 0 : index
    %628 = vector.load %arg14[%c1_160, %c0_161, %c0_162] : memref<2x1x32xf32, #tpu.memory_space<vmem>>, vector<1x1x32xf32>
    %629 = vector.shape_cast %628 : vector<1x1x32xf32> to vector<1x32xf32>
    %630 = vector.broadcast %629 : vector<1x32xf32> to vector<8x32xf32>
    %631 = arith.addf %627, %630 : vector<8x32xf32>
    %cst_163 = arith.constant 0.000000e+00 : f32
    %632 = vector.broadcast %cst_163 : f32 to vector<8x32xf32>
    %633 = arith.maximumf %631, %632 : vector<8x32xf32>
    %c1_164 = arith.constant 1 : index
    %c0_165 = arith.constant 0 : index
    %c0_166 = arith.constant 0 : index
    %634 = vector.load %arg15[%c1_164, %c0_165, %c0_166] : memref<2x32x32xf32, #tpu.memory_space<vmem>>, vector<1x32x32xf32>
    %635 = vector.shape_cast %634 : vector<1x32x32xf32> to vector<32x32xf32>
    %cst_167 = arith.constant dense<0.000000e+00> : vector<8x32xf32>
    %636 = tpu.matmul %633, %635, %cst_167 {dimension_numbers = #tpu.dot_dimension_numbers<[1], [0], [0], [1], [0, 0, 1, 1], [], []>} : vector<8x32xf32>, vector<32x32xf32>, vector<8x32xf32> -> vector<8x32xf32>
    %637 = arith.addf %598, %636 : vector<8x32xf32>
    %c1_168 = arith.constant 1 : index
    %c0_169 = arith.constant 0 : index
    %c0_170 = arith.constant 0 : index
    %638 = vector.load %arg16[%c1_168, %c0_169, %c0_170] : memref<2x1x32xf32, #tpu.memory_space<vmem>>, vector<1x1x32xf32>
    %639 = vector.shape_cast %638 : vector<1x1x32xf32> to vector<1x32xf32>
    %640 = vector.broadcast %639 : vector<1x32xf32> to vector<8x32xf32>
    %641 = arith.addf %637, %640 : vector<8x32xf32>
    %c0_171 = arith.constant 0 : index
    %c0_172 = arith.constant 0 : index
    %642 = vector.load %arg17[%c0_171, %c0_172] : memref<8x32xf32, #tpu.memory_space<vmem>>, vector<8x32xf32>
    tpu.vector_store %arg17[%c0_171, %c0_172], %641 {strides = array<i32>} : memref<8x32xf32, #tpu.memory_space<vmem>>, vector<8x32xf32>,
    return
  }
}

</mosaic_0001>

<llo_original>
// kernel: enhanced_two_tower_forward.1
$region0: #{enhanced_two_tower_forward.1}
  #allocation0 [shape = 'u32[]', space=smem, size = 0x4, offset = 0x4, fixed_abs, tag = 'smem constant byte address 0x4 - core index']
  #allocation1 [shape = 'u32[144,128]{1,0:T(1,128)}', space=vmem, size = 0x12000, scoped, tag = 'internal scratch']
  #allocation2 [shape = 'f32[64,128]{1,0:T(8,128)}', space=vmem, size = 0x8000, scoped, tag = 'scratch operand']
  #allocation3 [shape = 'f32[64,128]{1,0:T(8,128)}', space=vmem, size = 0x8000, scoped, tag = 'scratch operand']
  %s0 = inlined_call_operand.vmem [shape: f32[64,64], index: 0, kind: input, shape index: {}]
  %s1 = inlined_call_operand.vmem [shape: f32[1,384], index: 1, kind: input, shape index: {}]
  %s2 = inlined_call_operand.hbm [shape: f32[64,384], index: 2, kind: input, shape index: {}]
  %s3 = inlined_call_operand.hbm [shape: f32[1,384], index: 3, kind: input, shape index: {}]
  %s4 = inlined_call_operand.vmem [shape: f32[128,384], index: 4, kind: input, shape index: {}]
  %s5 = inlined_call_operand.hbm [shape: f32[1,384], index: 5, kind: input, shape index: {}]
  %s6 = inlined_call_operand.hbm [shape: f32[128,384], index: 6, kind: input, shape index: {}]
  %s7 = inlined_call_operand.hbm [shape: f32[128,384], index: 7, kind: input, shape index: {}]
  %s8 = inlined_call_operand.hbm [shape: f32[1,384], index: 8, kind: input, shape index: {}]
  %s9 = inlined_call_operand.hbm [shape: f32[128,384], index: 9, kind: input, shape index: {}]
  %s10 = inlined_call_operand.hbm [shape: f32[1,384], index: 10, kind: input, shape index: {}]
  %s11 = inlined_call_operand.vmem [shape: f32[2,128,32], index: 11, kind: input, shape index: {}]
  %s12 = inlined_call_operand.vmem [shape: f32[2,1,32], index: 12, kind: input, shape index: {}]
  %s13 = inlined_call_operand.vmem [shape: f32[2,1,32], index: 13, kind: input, shape index: {}]
  %s14 = inlined_call_operand.vmem [shape: f32[2,1,32], index: 14, kind: input, shape index: {}]
  %s15 = inlined_call_operand.vmem [shape: f32[2,32,32], index: 15, kind: input, shape index: {}]
  %s16 = inlined_call_operand.vmem [shape: f32[2,1,32], index: 16, kind: input, shape index: {}]
  %s17 = inlined_call_operand.vmem [shape: f32[8,32], index: 17, kind: output, shape index: {}]
  %s18 = sld [smem:[#allocation0]]
  $region110: #{enhanced_two_tower_forward.1} parent=0
    _
  %s20 = ssub.s32 1, %s18
  %s21 = scalar_select 0, %s20, %s18
  $region1: #{enhanced_two_tower_forward.1} parent=0
    #allocation4 [shape = 'u8[98304]{0}', space=vmem, size = 0x18000, scoped, tag = 'input window, operand 2, single buffered']
    #allocation5 [shape = 's32[1]{0}', space=sflag, size = 0x4, scoped, tag = 'scoped memory for enhanced_two_tower_forward.1']
    #allocation6 [shape = 'u8[1536]{0}', space=vmem, size = 0x800, scoped, tag = 'input window, operand 3, single buffered']
    #allocation7 [shape = 's32[1]{0}', space=sflag, size = 0x4, scoped, tag = 'scoped memory for enhanced_two_tower_forward.1']
    #allocation8 [shape = 'u8[1536]{0}', space=vmem, size = 0x800, scoped, tag = 'input window, operand 5, single buffered']
    #allocation9 [shape = 'u8[196608]{0}', space=vmem, size = 0x30000, scoped, tag = 'input window, operand 6, single buffered']
    #allocation10 [shape = 's32[1]{0}', space=sflag, size = 0x4, scoped, tag = 'scoped memory for enhanced_two_tower_forward.1']
    #allocation11 [shape = 'u8[196608]{0}', space=vmem, size = 0x30000, scoped, tag = 'input window, operand 7, single buffered']
    #allocation12 [shape = 'u8[1536]{0}', space=vmem, size = 0x800, scoped, tag = 'input window, operand 8, single buffered']
    #allocation13 [shape = 's32[1]{0}', space=sflag, size = 0x4, scoped, tag = 'scoped memory for enhanced_two_tower_forward.1']
    #allocation14 [shape = 'u8[196608]{0}', space=vmem, size = 0x30000, scoped, tag = 'input window, operand 9, single buffered']
    #allocation15 [shape = 'u8[1536]{0}', space=vmem, size = 0x800, scoped, tag = 'input window, operand 10, single buffered']
    #allocation16 [shape = 's32[1]{0}', space=sflag, size = 0x4, scoped, tag = 'scoped memory for enhanced_two_tower_forward.1']
    %22 = vsyncpa [#allocation5], 0
    %23 = vsyncpa [#allocation7], 0
    %24 = vsyncpa [#allocation10], 0
    %25 = vsyncpa [#allocation13], 0
    %26 = vsyncpa [#allocation16], 0
    // Predicated region
    $region2: #{enhanced_two_tower_forward.1} parent=1 // pred_check
      _
    $region3: #{enhanced_two_tower_forward.1} parent=1 // pred_check_branch
      %28 = sbr.rel (0) target = $region5
    $region4: #{enhanced_two_tower_forward.1} parent=1 // pred_region
      _
    $region5: #{enhanced_two_tower_forward.1} parent=1 // pred_fallthru
      _
    // Predicated region
    $region6: #{enhanced_two_tower_forward.1} parent=1 // pred_check
      _
    $region7: #{enhanced_two_tower_forward.1} parent=1 // pred_check_branch
      %30 = sbr.rel (0) target = $region9
    $region8: #{enhanced_two_tower_forward.1} parent=1 // pred_region
      _
    $region9: #{enhanced_two_tower_forward.1} parent=1 // pred_fallthru
      _
    // Predicated region
    $region10: #{enhanced_two_tower_forward.1} parent=1 // pred_check
      _
    $region11: #{enhanced_two_tower_forward.1} parent=1 // pred_check_branch
      %32 = sbr.rel (0) target = $region13
    $region12: #{enhanced_two_tower_forward.1} parent=1 // pred_region
      %s34 = ssub.s32 3072, 3072
      %35 = vsyncadd [#allocation5], %s34
      %s36 = sshll.u32 [#allocation4], 4
      %s37 = int_to_ptr.vmem [resolvable:$true] %s36
      %42 = dma.hbm_to_vmem [thread:$0]  %s2, 3072, %s37, [#allocation5], 384, 384, 24
    $region13: #{enhanced_two_tower_forward.1} parent=1 // pred_fallthru
      _
    // Predicated region
    $region14: #{enhanced_two_tower_forward.1} parent=1 // pred_check
      _
    $region15: #{enhanced_two_tower_forward.1} parent=1 // pred_check_branch
      %44 = sbr.rel (0) target = $region17
    $region16: #{enhanced_two_tower_forward.1} parent=1 // pred_region
      %s46 = ssub.s32 48, 48
      %47 = vsyncadd [#allocation7], %s46
      %s49 = sshll.u32 [#allocation6], 4
      %s50 = int_to_ptr.vmem [resolvable:$true] %s49
      %52 = dma.hbm_to_vmem [thread:$0]  %s3, 48, %s50, [#allocation7]
    $region17: #{enhanced_two_tower_forward.1} parent=1 // pred_fallthru
      _
    // Predicated region
    $region18: #{enhanced_two_tower_forward.1} parent=1 // pred_check
      _
    $region19: #{enhanced_two_tower_forward.1} parent=1 // pred_check_branch
      %54 = sbr.rel (0) target = $region21
    $region20: #{enhanced_two_tower_forward.1} parent=1 // pred_region
      _
    $region21: #{enhanced_two_tower_forward.1} parent=1 // pred_fallthru
      _
    // Predicated region
    $region22: #{enhanced_two_tower_forward.1} parent=1 // pred_check
      _
    $region23: #{enhanced_two_tower_forward.1} parent=1 // pred_check_branch
      %56 = sbr.rel (0) target = $region25
    $region24: #{enhanced_two_tower_forward.1} parent=1 // pred_region
      %s58 = ssub.s32 48, 48
      %59 = vsyncadd [#allocation7], %s58
      %s61 = sshll.u32 [#allocation8], 4
      %s62 = int_to_ptr.vmem [resolvable:$true] %s61
      %64 = dma.hbm_to_vmem [thread:$0]  %s5, 48, %s62, [#allocation7]
    $region25: #{enhanced_two_tower_forward.1} parent=1 // pred_fallthru
      _
    // Predicated region
    $region26: #{enhanced_two_tower_forward.1} parent=1 // pred_check
      _
    $region27: #{enhanced_two_tower_forward.1} parent=1 // pred_check_branch
      %66 = sbr.rel (0) target = $region29
    $region28: #{enhanced_two_tower_forward.1} parent=1 // pred_region
      %s68 = ssub.s32 6144, 6144
      %69 = vsyncadd [#allocation10], %s68
      %s70 = sshll.u32 [#allocation9], 4
      %s71 = int_to_ptr.vmem [resolvable:$true] %s70
      %76 = dma.hbm_to_vmem [thread:$0]  %s6, 6144, %s71, [#allocation10], 384, 384, 24
    $region29: #{enhanced_two_tower_forward.1} parent=1 // pred_fallthru
      _
    // Predicated region
    $region30: #{enhanced_two_tower_forward.1} parent=1 // pred_check
      _
    $region31: #{enhanced_two_tower_forward.1} parent=1 // pred_check_branch
      %78 = sbr.rel (0) target = $region33
    $region32: #{enhanced_two_tower_forward.1} parent=1 // pred_region
      %s80 = ssub.s32 6144, 6144
      %81 = vsyncadd [#allocation10], %s80
      %s82 = sshll.u32 [#allocation11], 4
      %s83 = int_to_ptr.vmem [resolvable:$true] %s82
      %88 = dma.hbm_to_vmem [thread:$0]  %s7, 6144, %s83, [#allocation10], 384, 384, 24
    $region33: #{enhanced_two_tower_forward.1} parent=1 // pred_fallthru
      _
    // Predicated region
    $region34: #{enhanced_two_tower_forward.1} parent=1 // pred_check
      _
    $region35: #{enhanced_two_tower_forward.1} parent=1 // pred_check_branch
      %90 = sbr.rel (0) target = $region37
    $region36: #{enhanced_two_tower_forward.1} parent=1 // pred_region
      %s92 = ssub.s32 48, 48
      %93 = vsyncadd [#allocation13], %s92
      %s95 = sshll.u32 [#allocation12], 4
      %s96 = int_to_ptr.vmem [resolvable:$true] %s95
      %98 = dma.hbm_to_vmem [thread:$0]  %s8, 48, %s96, [#allocation13]
    $region37: #{enhanced_two_tower_forward.1} parent=1 // pred_fallthru
      _
    // Predicated region
    $region38: #{enhanced_two_tower_forward.1} parent=1 // pred_check
      _
    $region39: #{enhanced_two_tower_forward.1} parent=1 // pred_check_branch
      %100 = sbr.rel (0) target = $region41
    $region40: #{enhanced_two_tower_forward.1} parent=1 // pred_region
      %s102 = ssub.s32 6144, 6144
      %103 = vsyncadd [#allocation13], %s102
      %s104 = sshll.u32 [#allocation14], 4
      %s105 = int_to_ptr.vmem [resolvable:$true] %s104
      %110 = dma.hbm_to_vmem [thread:$0]  %s9, 6144, %s105, [#allocation13], 384, 384, 24
    $region41: #{enhanced_two_tower_forward.1} parent=1 // pred_fallthru
      _
    // Predicated region
    $region42: #{enhanced_two_tower_forward.1} parent=1 // pred_check
      _
    $region43: #{enhanced_two_tower_forward.1} parent=1 // pred_check_branch
      %112 = sbr.rel (0) target = $region45
    $region44: #{enhanced_two_tower_forward.1} parent=1 // pred_region
      %s114 = ssub.s32 48, 48
      %115 = vsyncadd [#allocation16], %s114
      %s117 = sshll.u32 [#allocation15], 4
      %s118 = int_to_ptr.vmem [resolvable:$true] %s117
      %120 = dma.hbm_to_vmem [thread:$0]  %s10, 48, %s118, [#allocation16]
    $region45: #{enhanced_two_tower_forward.1} parent=1 // pred_fallthru
      _
    // Predicated region
    $region46: #{enhanced_two_tower_forward.1} parent=1 // pred_check
      _
    $region47: #{enhanced_two_tower_forward.1} parent=1 // pred_check_branch
      %122 = sbr.rel (0) target = $region49
    $region48: #{enhanced_two_tower_forward.1} parent=1 // pred_region
      _
    $region49: #{enhanced_two_tower_forward.1} parent=1 // pred_fallthru
      _
    // Predicated region
    $region50: #{enhanced_two_tower_forward.1} parent=1 // pred_check
      _
    $region51: #{enhanced_two_tower_forward.1} parent=1 // pred_check_branch
      %124 = sbr.rel (0) target = $region53
    $region52: #{enhanced_two_tower_forward.1} parent=1 // pred_region
      _
    $region53: #{enhanced_two_tower_forward.1} parent=1 // pred_fallthru
      _
    // Predicated region
    $region54: #{enhanced_two_tower_forward.1} parent=1 // pred_check
      _
    $region55: #{enhanced_two_tower_forward.1} parent=1 // pred_check_branch
      %126 = sbr.rel (0) target = $region57
    $region56: #{enhanced_two_tower_forward.1} parent=1 // pred_region
      _
    $region57: #{enhanced_two_tower_forward.1} parent=1 // pred_fallthru
      _
    // Predicated region
    $region58: #{enhanced_two_tower_forward.1} parent=1 // pred_check
      _
    $region59: #{enhanced_two_tower_forward.1} parent=1 // pred_check_branch
      %128 = sbr.rel (0) target = $region61
    $region60: #{enhanced_two_tower_forward.1} parent=1 // pred_region
      _
    $region61: #{enhanced_two_tower_forward.1} parent=1 // pred_fallthru
      _
    // Predicated region
    $region62: #{enhanced_two_tower_forward.1} parent=1 // pred_check
      _
    $region63: #{enhanced_two_tower_forward.1} parent=1 // pred_check_branch
      %130 = sbr.rel (0) target = $region65
    $region64: #{enhanced_two_tower_forward.1} parent=1 // pred_region
      _
    $region65: #{enhanced_two_tower_forward.1} parent=1 // pred_fallthru
      _
    // Predicated region
    $region66: #{enhanced_two_tower_forward.1} parent=1 // pred_check
      _
    $region67: #{enhanced_two_tower_forward.1} parent=1 // pred_check_branch
      %132 = sbr.rel (0) target = $region69
    $region68: #{enhanced_two_tower_forward.1} parent=1 // pred_region
      _
    $region69: #{enhanced_two_tower_forward.1} parent=1 // pred_fallthru
      _
    // Predicated region
    $region70: #{enhanced_two_tower_forward.1} parent=1 // pred_check
      _
    $region71: #{enhanced_two_tower_forward.1} parent=1 // pred_check_branch
      %134 = sbr.rel (0) target = $region73
    $region72: #{enhanced_two_tower_forward.1} parent=1 // pred_region
      %135 = dma.done [#allocation5], 3072
    $region73: #{enhanced_two_tower_forward.1} parent=1 // pred_fallthru
      _
    // Predicated region
    $region74: #{enhanced_two_tower_forward.1} parent=1 // pred_check
      _
    $region75: #{enhanced_two_tower_forward.1} parent=1 // pred_check_branch
      %137 = sbr.rel (0) target = $region77
    $region76: #{enhanced_two_tower_forward.1} parent=1 // pred_region
      %138 = dma.done [#allocation7], 48
    $region77: #{enhanced_two_tower_forward.1} parent=1 // pred_fallthru
      _
    // Predicated region
    $region78: #{enhanced_two_tower_forward.1} parent=1 // pred_check
      _
    $region79: #{enhanced_two_tower_forward.1} parent=1 // pred_check_branch
      %140 = sbr.rel (0) target = $region81
    $region80: #{enhanced_two_tower_forward.1} parent=1 // pred_region
      %141 = dma.done [#allocation7], 48
    $region81: #{enhanced_two_tower_forward.1} parent=1 // pred_fallthru
      _
    // Predicated region
    $region82: #{enhanced_two_tower_forward.1} parent=1 // pred_check
      _
    $region83: #{enhanced_two_tower_forward.1} parent=1 // pred_check_branch
      %143 = sbr.rel (0) target = $region85
    $region84: #{enhanced_two_tower_forward.1} parent=1 // pred_region
      %144 = dma.done [#allocation10], 6144
    $region85: #{enhanced_two_tower_forward.1} parent=1 // pred_fallthru
      _
    // Predicated region
    $region86: #{enhanced_two_tower_forward.1} parent=1 // pred_check
      _
    $region87: #{enhanced_two_tower_forward.1} parent=1 // pred_check_branch
      %146 = sbr.rel (0) target = $region89
    $region88: #{enhanced_two_tower_forward.1} parent=1 // pred_region
      %147 = dma.done [#allocation10], 6144
    $region89: #{enhanced_two_tower_forward.1} parent=1 // pred_fallthru
      _
    // Predicated region
    $region90: #{enhanced_two_tower_forward.1} parent=1 // pred_check
      _
    $region91: #{enhanced_two_tower_forward.1} parent=1 // pred_check_branch
      %149 = sbr.rel (0) target = $region93
    $region92: #{enhanced_two_tower_forward.1} parent=1 // pred_region
      %150 = dma.done [#allocation13], 48
    $region93: #{enhanced_two_tower_forward.1} parent=1 // pred_fallthru
      _
    // Predicated region
    $region94: #{enhanced_two_tower_forward.1} parent=1 // pred_check
      _
    $region95: #{enhanced_two_tower_forward.1} parent=1 // pred_check_branch
      %152 = sbr.rel (0) target = $region97
    $region96: #{enhanced_two_tower_forward.1} parent=1 // pred_region
      %153 = dma.done [#allocation13], 6144
    $region97: #{enhanced_two_tower_forward.1} parent=1 // pred_fallthru
      _
    // Predicated region
    $region98: #{enhanced_two_tower_forward.1} parent=1 // pred_check
      _
    $region99: #{enhanced_two_tower_forward.1} parent=1 // pred_check_branch
      %155 = sbr.rel (0) target = $region101
    $region100: #{enhanced_two_tower_forward.1} parent=1 // pred_region
      %156 = dma.done [#allocation16], 48
    $region101: #{enhanced_two_tower_forward.1} parent=1 // pred_fallthru
      _
    %v157 = vld [vmem:[%s1] sm:$0x7]
    %v159 = vlaneseq
    %v160 = vshrl.u32 %v159, 7
    %v161 = vsub.s32 0, %v160
    %v162 = vrot.slane %v157, %v161
    %v163 = vlaneseq
    %v164 = vshrl.u32 %v163, 7
    %v165 = vsub.s32 1, %v164
    %v166 = vrot.slane %v157, %v165
    %v167 = vlaneseq
    %v168 = vshrl.u32 %v167, 7
    %v169 = vsub.s32 2, %v168
    %v170 = vrot.slane %v157, %v169
    %vm174 = vcmp.ne.f32.partialorder %v162, 0.0
    %vm175 = vcmp.ne.f32.partialorder %v166, 0.0
    %vm176 = vcmp.ne.f32.partialorder %v170, 0.0
    %v177 = vld [vmem:[%s0] sm:$0xff]
    %v178 = vld [vmem:[%s0 + $0x8] sm:$0xff]
    %v179 = vld [vmem:[%s0 + $0x10] sm:$0xff]
    %v180 = vld [vmem:[%s0 + $0x18] sm:$0xff]
    %v181 = vld [vmem:[%s0 + $0x20] sm:$0xff]
    %v182 = vld [vmem:[%s0 + $0x28] sm:$0xff]
    %v183 = vld [vmem:[%s0 + $0x30] sm:$0xff]
    %v184 = vld [vmem:[%s0 + $0x38] sm:$0xff]
    %v185 = vld [vmem:[#allocation4] sm:$0xff]
    %v186 = vld [vmem:[#allocation4 + $0x8] sm:$0xff]
    %v187 = vld [vmem:[#allocation4 + $0x10] sm:$0xff]
    %v188 = vld [vmem:[#allocation4 + $0x18] sm:$0xff]
    %v189 = vld [vmem:[#allocation4 + $0x20] sm:$0xff]
    %v190 = vld [vmem:[#allocation4 + $0x28] sm:$0xff]
    %v191 = vld [vmem:[#allocation4 + $0x30] sm:$0xff]
    %v192 = vld [vmem:[#allocation4 + $0x38] sm:$0xff]
    %v193 = vld [vmem:[#allocation4 + $0x40] sm:$0xff]
    %v194 = vld [vmem:[#allocation4 + $0x48] sm:$0xff]
    %v195 = vld [vmem:[#allocation4 + $0x50] sm:$0xff]
    %v196 = vld [vmem:[#allocation4 + $0x58] sm:$0xff]
    %v197 = vld [vmem:[#allocation4 + $0x60] sm:$0xff]
    %v198 = vld [vmem:[#allocation4 + $0x68] sm:$0xff]
    %v199 = vld [vmem:[#allocation4 + $0x70] sm:$0xff]
    %v200 = vld [vmem:[#allocation4 + $0x78] sm:$0xff]
    %v201 = vld [vmem:[#allocation4 + $0x80] sm:$0xff]
    %v202 = vld [vmem:[#allocation4 + $0x88] sm:$0xff]
    %v203 = vld [vmem:[#allocation4 + $0x90] sm:$0xff]
    %v204 = vld [vmem:[#allocation4 + $0x98] sm:$0xff]
    %v205 = vld [vmem:[#allocation4 + $0xa0] sm:$0xff]
    %v206 = vld [vmem:[#allocation4 + $0xa8] sm:$0xff]
    %v207 = vld [vmem:[#allocation4 + $0xb0] sm:$0xff]
    %v208 = vld [vmem:[#allocation4 + $0xb8] sm:$0xff]
    %v209 = vld [vmem:[#allocation6] sm:$0x7]
    %v211 = vlaneseq
    %v212 = vshrl.u32 %v211, 7
    %v213 = vsub.s32 0, %v212
    %v214 = vrot.slane %v209, %v213
    %v215 = vlaneseq
    %v216 = vshrl.u32 %v215, 7
    %v217 = vsub.s32 1, %v216
    %v218 = vrot.slane %v209, %v217
    %v219 = vlaneseq
    %v220 = vshrl.u32 %v219, 7
    %v221 = vsub.s32 2, %v220
    %v222 = vrot.slane %v209, %v221
    %vm226 = vcmask 523264
    %v228 = vsel %vm226, %v177, 0
    %v231 = vsel %vm226, %v178, 0
    %v234 = vsel %vm226, %v179, 0
    %v237 = vsel %vm226, %v180, 0
    %v240 = vsel %vm226, %v181, 0
    %v243 = vsel %vm226, %v182, 0
    %v246 = vsel %vm226, %v183, 0
    %v249 = vsel %vm226, %v184, 0
    %251 = vmatprep.subr.mxu0 %v186
    %252 = vmatpush1.msra.mxu0 %v185
    %253 = vmatprep.subr.mxu0 %v189
    %254 = vmatpush1.msra.mxu0 %v188
    %255 = vmatprep.subr.mxu0 %v192
    %256 = vmatpush1.msra.mxu0 %v191
    %257 = vmatprep.subr.mxu0 %v195
    %258 = vmatpush1.msra.mxu0 %v194
    %259 = vmatprep.subr.mxu0 %v198
    %260 = vmatpush1.msra.mxu0 %v197
    %261 = vmatprep.subr.mxu0 %v201
    %262 = vmatpush1.msra.mxu0 %v200
    %263 = vmatprep.subr.mxu0 %v204
    %264 = vmatpush1.msra.mxu0 %v203
    %265 = vmatprep.subr.mxu0 %v207
    %266 = vmatpush1.msra.mxu0 %v206
    %267 = vmatprep.subr.mxu0 0.0
    %268 = vmatpush1.msra.mxu0 0.0
    %269 = vmatprep.subr.mxu0 0.0
    %270 = vmatpush1.msra.mxu0 0.0
    %271 = vmatprep.subr.mxu0 0.0
    %272 = vmatpush1.msra.mxu0 0.0
    %273 = vmatprep.subr.mxu0 0.0
    %274 = vmatpush1.msra.mxu0 0.0
    %275 = vmatprep.subr.mxu0 0.0
    %276 = vmatpush1.msra.mxu0 0.0
    %277 = vmatprep.subr.mxu0 0.0
    %278 = vmatpush1.msra.mxu0 0.0
    %279 = vmatprep.subr.mxu0 0.0
    %280 = vmatpush1.msra.mxu0 0.0
    %281 = vmatprep.subr.mxu0 0.0
    %282 = vmatpush1.msra.mxu0 0.0
    %283 = vmatprep.subr.mxu0 0.0
    %284 = vmatpush1.msra.mxu0 0.0
    %285 = vmatprep.subr.mxu0 0.0
    %286 = vmatpush1.msra.mxu0 0.0
    %287 = vmatprep.subr.mxu0 0.0
    %288 = vmatpush1.msra.mxu0 0.0
    %289 = vmatprep.subr.mxu0 0.0
    %290 = vmatpush1.msra.mxu0 0.0
    %291 = vmatprep.subr.mxu0 0.0
    %292 = vmatpush1.msra.mxu0 0.0
    %293 = vmatprep.subr.mxu0 0.0
    %294 = vmatpush1.msra.mxu0 0.0
    %295 = vmatprep.subr.mxu0 0.0
    %296 = vmatpush1.msra.mxu0 0.0
    %297 = vmatprep.subr.mxu0 0.0
    %298 = vmatpush1.msra.mxu0 0.0
    %299 = vmatprep.subr.mxu0 0.0
    %300 = vmatpush1.msra.mxu0 0.0
    %301 = vmatprep.subr.mxu0 0.0
    %302 = vmatpush1.msra.mxu0 0.0
    %303 = vmatprep.subr.mxu0 0.0
    %304 = vmatpush1.msra.mxu0 0.0
    %305 = vmatprep.subr.mxu0 0.0
    %306 = vmatpush1.msra.mxu0 0.0
    %307 = vmatprep.subr.mxu0 0.0
    %308 = vmatpush1.msra.mxu0 0.0
    %309 = vmatprep.subr.mxu0 0.0
    %310 = vmatpush1.msra.mxu0 0.0
    %311 = vmatprep.subr.mxu0 0.0
    %312 = vmatpush1.msra.mxu0 0.0
    %313 = vmatprep.subr.mxu0 0.0
    %314 = vmatpush1.msra.mxu0 0.0
    %315 = vmatprep.mubr.f32.mxu0 0.0
    %316 = vmatmul.mubr.f32.gmra.mrb[0].mxu0 %v228
    %v317 = vpop.f32.mrb[0].mxu0
    %v318 = vadd.f32 %v214, %v317
    %v319 = vpop.f32.mrb[0].mxu0
    %v320 = vadd.f32 %v218, %v319
    %321 = vmatprep.mubr.f32.mxu0 0.0
    %322 = vmatmul.mubr.f32.gmra.mrb[0].mxu0 %v231
    %v323 = vpop.f32.mrb[0].mxu0
    %v324 = vadd.f32 %v214, %v323
    %v325 = vpop.f32.mrb[0].mxu0
    %v326 = vadd.f32 %v218, %v325
    %327 = vmatprep.mubr.f32.mxu0 0.0
    %328 = vmatmul.mubr.f32.gmra.mrb[0].mxu0 %v234
    %v329 = vpop.f32.mrb[0].mxu0
    %v330 = vadd.f32 %v214, %v329
    %v331 = vpop.f32.mrb[0].mxu0
    %v332 = vadd.f32 %v218, %v331
    %333 = vmatprep.mubr.f32.mxu0 0.0
    %334 = vmatmul.mubr.f32.gmra.mrb[0].mxu0 %v237
    %v335 = vpop.f32.mrb[0].mxu0
    %v336 = vadd.f32 %v214, %v335
    %v337 = vpop.f32.mrb[0].mxu0
    %v338 = vadd.f32 %v218, %v337
    %339 = vmatprep.mubr.f32.mxu0 0.0
    %340 = vmatmul.mubr.f32.gmra.mrb[0].mxu0 %v240
    %v341 = vpop.f32.mrb[0].mxu0
    %v342 = vadd.f32 %v214, %v341
    %v343 = vpop.f32.mrb[0].mxu0
    %v344 = vadd.f32 %v218, %v343
    %345 = vmatprep.mubr.f32.mxu0 0.0
    %346 = vmatmul.mubr.f32.gmra.mrb[0].mxu0 %v243
    %v347 = vpop.f32.mrb[0].mxu0
    %v348 = vadd.f32 %v214, %v347
    %v349 = vpop.f32.mrb[0].mxu0
    %v350 = vadd.f32 %v218, %v349
    %351 = vmatprep.mubr.f32.mxu0 0.0
    %352 = vmatmul.mubr.f32.gmra.mrb[0].mxu0 %v246
    %v353 = vpop.f32.mrb[0].mxu0
    %v354 = vadd.f32 %v214, %v353
    %v355 = vpop.f32.mrb[0].mxu0
    %v356 = vadd.f32 %v218, %v355
    %357 = vmatprep.mubr.f32.mxu0 0.0
    %358 = vmatmul.mubr.f32.gmra.mrb[0].mxu0 %v249
    %v359 = vpop.f32.mrb[0].mxu0
    %v360 = vadd.f32 %v214, %v359
    %v361 = vpop.f32.mrb[0].mxu0
    %v362 = vadd.f32 %v218, %v361
    %363 = vdwg.mxu0
    %364 = vmatprep.subr.mxu0 0.0
    %365 = vmatpush1.msra.mxu0 %v187
    %366 = vmatprep.subr.mxu0 0.0
    %367 = vmatpush1.msra.mxu0 %v190
    %368 = vmatprep.subr.mxu0 0.0
    %369 = vmatpush1.msra.mxu0 %v193
    %370 = vmatprep.subr.mxu0 0.0
    %371 = vmatpush1.msra.mxu0 %v196
    %372 = vmatprep.subr.mxu0 0.0
    %373 = vmatpush1.msra.mxu0 %v199
    %374 = vmatprep.subr.mxu0 0.0
    %375 = vmatpush1.msra.mxu0 %v202
    %376 = vmatprep.subr.mxu0 0.0
    %377 = vmatpush1.msra.mxu0 %v205
    %378 = vmatprep.subr.mxu0 0.0
    %379 = vmatpush1.msra.mxu0 %v208
    %380 = vmatprep.subr.mxu0 0.0
    %381 = vmatpush1.msra.mxu0 0.0
    %382 = vmatprep.subr.mxu0 0.0
    %383 = vmatpush1.msra.mxu0 0.0
    %384 = vmatprep.subr.mxu0 0.0
    %385 = vmatpush1.msra.mxu0 0.0
    %386 = vmatprep.subr.mxu0 0.0
    %387 = vmatpush1.msra.mxu0 0.0
    %388 = vmatprep.subr.mxu0 0.0
    %389 = vmatpush1.msra.mxu0 0.0
    %390 = vmatprep.subr.mxu0 0.0
    %391 = vmatpush1.msra.mxu0 0.0
    %392 = vmatprep.subr.mxu0 0.0
    %393 = vmatpush1.msra.mxu0 0.0
    %394 = vmatprep.subr.mxu0 0.0
    %395 = vmatpush1.msra.mxu0 0.0
    %396 = vmatprep.subr.mxu0 0.0
    %397 = vmatpush1.msra.mxu0 0.0
    %398 = vmatprep.subr.mxu0 0.0
    %399 = vmatpush1.msra.mxu0 0.0
    %400 = vmatprep.subr.mxu0 0.0
    %401 = vmatpush1.msra.mxu0 0.0
    %402 = vmatprep.subr.mxu0 0.0
    %403 = vmatpush1.msra.mxu0 0.0
    %404 = vmatprep.subr.mxu0 0.0
    %405 = vmatpush1.msra.mxu0 0.0
    %406 = vmatprep.subr.mxu0 0.0
    %407 = vmatpush1.msra.mxu0 0.0
    %408 = vmatprep.subr.mxu0 0.0
    %409 = vmatpush1.msra.mxu0 0.0
    %410 = vmatprep.subr.mxu0 0.0
    %411 = vmatpush1.msra.mxu0 0.0
    %412 = vmatprep.subr.mxu0 0.0
    %413 = vmatpush1.msra.mxu0 0.0
    %414 = vmatprep.subr.mxu0 0.0
    %415 = vmatpush1.msra.mxu0 0.0
    %416 = vmatprep.subr.mxu0 0.0
    %417 = vmatpush1.msra.mxu0 0.0
    %418 = vmatprep.subr.mxu0 0.0
    %419 = vmatpush1.msra.mxu0 0.0
    %420 = vmatprep.subr.mxu0 0.0
    %421 = vmatpush1.msra.mxu0 0.0
    %422 = vmatprep.subr.mxu0 0.0
    %423 = vmatpush1.msra.mxu0 0.0
    %424 = vmatprep.subr.mxu0 0.0
    %425 = vmatpush1.msra.mxu0 0.0
    %426 = vmatprep.subr.mxu0 0.0
    %427 = vmatpush1.msra.mxu0 0.0
    %428 = vmatprep.mubr.f32.mxu0 0.0
    %429 = vmatmul.mubr.f32.gmra.mrb[0].mxu0 %v228
    %v430 = vpop.f32.mrb[0].mxu0
    %v431 = vadd.f32 %v222, %v430
    %v432 = vpop.f32.mrb[0].mxu0
    %433 = vmatprep.mubr.f32.mxu0 0.0
    %434 = vmatmul.mubr.f32.gmra.mrb[0].mxu0 %v231
    %v435 = vpop.f32.mrb[0].mxu0
    %v436 = vadd.f32 %v222, %v435
    %v437 = vpop.f32.mrb[0].mxu0
    %438 = vmatprep.mubr.f32.mxu0 0.0
    %439 = vmatmul.mubr.f32.gmra.mrb[0].mxu0 %v234
    %v440 = vpop.f32.mrb[0].mxu0
    %v441 = vadd.f32 %v222, %v440
    %v442 = vpop.f32.mrb[0].mxu0
    %443 = vmatprep.mubr.f32.mxu0 0.0
    %444 = vmatmul.mubr.f32.gmra.mrb[0].mxu0 %v237
    %v445 = vpop.f32.mrb[0].mxu0
    %v446 = vadd.f32 %v222, %v445
    %v447 = vpop.f32.mrb[0].mxu0
    %448 = vmatprep.mubr.f32.mxu0 0.0
    %449 = vmatmul.mubr.f32.gmra.mrb[0].mxu0 %v240
    %v450 = vpop.f32.mrb[0].mxu0
    %v451 = vadd.f32 %v222, %v450
    %v452 = vpop.f32.mrb[0].mxu0
    %453 = vmatprep.mubr.f32.mxu0 0.0
    %454 = vmatmul.mubr.f32.gmra.mrb[0].mxu0 %v243
    %v455 = vpop.f32.mrb[0].mxu0
    %v456 = vadd.f32 %v222, %v455
    %v457 = vpop.f32.mrb[0].mxu0
    %458 = vmatprep.mubr.f32.mxu0 0.0
    %459 = vmatmul.mubr.f32.gmra.mrb[0].mxu0 %v246
    %v460 = vpop.f32.mrb[0].mxu0
    %v461 = vadd.f32 %v222, %v460
    %v462 = vpop.f32.mrb[0].mxu0
    %463 = vmatprep.mubr.f32.mxu0 0.0
    %464 = vmatmul.mubr.f32.gmra.mrb[0].mxu0 %v249
    %v465 = vpop.f32.mrb[0].mxu0
    %v466 = vadd.f32 %v222, %v465
    %v467 = vpop.f32.mrb[0].mxu0
    %468 = vdwg.mxu0
    %v469 = vld [vmem:[%s4] sm:$0xff]
    %v470 = vld [vmem:[%s4 + $0x8] sm:$0xff]
    %v471 = vld [vmem:[%s4 + $0x10] sm:$0xff]
    %v472 = vld [vmem:[%s4 + $0x18] sm:$0xff]
    %v473 = vld [vmem:[%s4 + $0x20] sm:$0xff]
    %v474 = vld [vmem:[%s4 + $0x28] sm:$0xff]
    %v475 = vld [vmem:[%s4 + $0x30] sm:$0xff]
    %v476 = vld [vmem:[%s4 + $0x38] sm:$0xff]
    %v477 = vld [vmem:[%s4 + $0x40] sm:$0xff]
    %v478 = vld [vmem:[%s4 + $0x48] sm:$0xff]
    %v479 = vld [vmem:[%s4 + $0x50] sm:$0xff]
    %v480 = vld [vmem:[%s4 + $0x58] sm:$0xff]
    %v481 = vld [vmem:[%s4 + $0x60] sm:$0xff]
    %v482 = vld [vmem:[%s4 + $0x68] sm:$0xff]
    %v483 = vld [vmem:[%s4 + $0x70] sm:$0xff]
    %v484 = vld [vmem:[%s4 + $0x78] sm:$0xff]
    %v485 = vld [vmem:[%s4 + $0x80] sm:$0xff]
    %v486 = vld [vmem:[%s4 + $0x88] sm:$0xff]
    %v487 = vld [vmem:[%s4 + $0x90] sm:$0xff]
    %v488 = vld [vmem:[%s4 + $0x98] sm:$0xff]
    %v489 = vld [vmem:[%s4 + $0xa0] sm:$0xff]
    %v490 = vld [vmem:[%s4 + $0xa8] sm:$0xff]
    %v491 = vld [vmem:[%s4 + $0xb0] sm:$0xff]
    %v492 = vld [vmem:[%s4 + $0xb8] sm:$0xff]
    %v493 = vld [vmem:[%s4 + $0xc0] sm:$0xff]
    %v494 = vld [vmem:[%s4 + $0xc8] sm:$0xff]
    %v495 = vld [vmem:[%s4 + $0xd0] sm:$0xff]
    %v496 = vld [vmem:[%s4 + $0xd8] sm:$0xff]
    %v497 = vld [vmem:[%s4 + $0xe0] sm:$0xff]
    %v498 = vld [vmem:[%s4 + $0xe8] sm:$0xff]
    %v499 = vld [vmem:[%s4 + $0xf0] sm:$0xff]
    %v500 = vld [vmem:[%s4 + $0xf8] sm:$0xff]
    %v501 = vld [vmem:[%s4 + $0x100] sm:$0xff]
    %v502 = vld [vmem:[%s4 + $0x108] sm:$0xff]
    %v503 = vld [vmem:[%s4 + $0x110] sm:$0xff]
    %v504 = vld [vmem:[%s4 + $0x118] sm:$0xff]
    %v505 = vld [vmem:[%s4 + $0x120] sm:$0xff]
    %v506 = vld [vmem:[%s4 + $0x128] sm:$0xff]
    %v507 = vld [vmem:[%s4 + $0x130] sm:$0xff]
    %v508 = vld [vmem:[%s4 + $0x138] sm:$0xff]
    %v509 = vld [vmem:[%s4 + $0x140] sm:$0xff]
    %v510 = vld [vmem:[%s4 + $0x148] sm:$0xff]
    %v511 = vld [vmem:[%s4 + $0x150] sm:$0xff]
    %v512 = vld [vmem:[%s4 + $0x158] sm:$0xff]
    %v513 = vld [vmem:[%s4 + $0x160] sm:$0xff]
    %v514 = vld [vmem:[%s4 + $0x168] sm:$0xff]
    %v515 = vld [vmem:[%s4 + $0x170] sm:$0xff]
    %v516 = vld [vmem:[%s4 + $0x178] sm:$0xff]
    %v517 = vld [vmem:[#allocation8] sm:$0x7]
    %v518 = vsel %vm174, %v318, %v360
    %v519 = vsel %vm175, %v320, %v362
    %v520 = vsel %vm176, %v431, %v466
    %v522 = vlaneseq
    %v523 = vshrl.u32 %v522, 7
    %v524 = vsub.s32 0, %v523
    %v525 = vrot.slane %v517, %v524
    %v526 = vlaneseq
    %v527 = vshrl.u32 %v526, 7
    %v528 = vsub.s32 1, %v527
    %v529 = vrot.slane %v517, %v528
    %v530 = vlaneseq
    %v531 = vshrl.u32 %v530, 7
    %v532 = vsub.s32 2, %v531
    %v533 = vrot.slane %v517, %v532
    %537 = vmatprep.subr.mxu0 %v470
    %538 = vmatpush1.msra.mxu0 %v469
    %539 = vmatprep.subr.mxu0 %v473
    %540 = vmatpush1.msra.mxu0 %v472
    %541 = vmatprep.subr.mxu0 %v476
    %542 = vmatpush1.msra.mxu0 %v475
    %543 = vmatprep.subr.mxu0 %v479
    %544 = vmatpush1.msra.mxu0 %v478
    %545 = vmatprep.subr.mxu0 %v482
    %546 = vmatpush1.msra.mxu0 %v481
    %547 = vmatprep.subr.mxu0 %v485
    %548 = vmatpush1.msra.mxu0 %v484
    %549 = vmatprep.subr.mxu0 %v488
    %550 = vmatpush1.msra.mxu0 %v487
    %551 = vmatprep.subr.mxu0 %v491
    %552 = vmatpush1.msra.mxu0 %v490
    %553 = vmatprep.subr.mxu0 %v494
    %554 = vmatpush1.msra.mxu0 %v493
    %555 = vmatprep.subr.mxu0 %v497
    %556 = vmatpush1.msra.mxu0 %v496
    %557 = vmatprep.subr.mxu0 %v500
    %558 = vmatpush1.msra.mxu0 %v499
    %559 = vmatprep.subr.mxu0 %v503
    %560 = vmatpush1.msra.mxu0 %v502
    %561 = vmatprep.subr.mxu0 %v506
    %562 = vmatpush1.msra.mxu0 %v505
    %563 = vmatprep.subr.mxu0 %v509
    %564 = vmatpush1.msra.mxu0 %v508
    %565 = vmatprep.subr.mxu0 %v512
    %566 = vmatpush1.msra.mxu0 %v511
    %567 = vmatprep.subr.mxu0 %v515
    %568 = vmatpush1.msra.mxu0 %v514
    %569 = vmatprep.subr.mxu0 0.0
    %570 = vmatpush1.msra.mxu0 0.0
    %571 = vmatprep.subr.mxu0 0.0
    %572 = vmatpush1.msra.mxu0 0.0
    %573 = vmatprep.subr.mxu0 0.0
    %574 = vmatpush1.msra.mxu0 0.0
    %575 = vmatprep.subr.mxu0 0.0
    %576 = vmatpush1.msra.mxu0 0.0
    %577 = vmatprep.subr.mxu0 0.0
    %578 = vmatpush1.msra.mxu0 0.0
    %579 = vmatprep.subr.mxu0 0.0
    %580 = vmatpush1.msra.mxu0 0.0
    %581 = vmatprep.subr.mxu0 0.0
    %582 = vmatpush1.msra.mxu0 0.0
    %583 = vmatprep.subr.mxu0 0.0
    %584 = vmatpush1.msra.mxu0 0.0
    %585 = vmatprep.subr.mxu0 0.0
    %586 = vmatpush1.msra.mxu0 0.0
    %587 = vmatprep.subr.mxu0 0.0
    %588 = vmatpush1.msra.mxu0 0.0
    %589 = vmatprep.subr.mxu0 0.0
    %590 = vmatpush1.msra.mxu0 0.0
    %591 = vmatprep.subr.mxu0 0.0
    %592 = vmatpush1.msra.mxu0 0.0
    %593 = vmatprep.subr.mxu0 0.0
    %594 = vmatpush1.msra.mxu0 0.0
    %595 = vmatprep.subr.mxu0 0.0
    %596 = vmatpush1.msra.mxu0 0.0
    %597 = vmatprep.subr.mxu0 0.0
    %598 = vmatpush1.msra.mxu0 0.0
    %599 = vmatprep.subr.mxu0 0.0
    %600 = vmatpush1.msra.mxu0 0.0
    %601 = vmatprep.mubr.f32.mxu0 0.0
    %602 = vmatmul.mubr.f32.gmra.mrb[0].mxu0 0.0
    %v603 = vpop.f32.mrb[0].mxu0
    %v604 = vadd.f32 %v525, %v603
    %v605 = vpop.f32.mrb[0].mxu0
    %v606 = vadd.f32 %v529, %v605
    %607 = vdwg.mxu0
    %608 = vmatprep.subr.mxu0 0.0
    %609 = vmatpush1.msra.mxu0 %v471
    %610 = vmatprep.subr.mxu0 0.0
    %611 = vmatpush1.msra.mxu0 %v474
    %612 = vmatprep.subr.mxu0 0.0
    %613 = vmatpush1.msra.mxu0 %v477
    %614 = vmatprep.subr.mxu0 0.0
    %615 = vmatpush1.msra.mxu0 %v480
    %616 = vmatprep.subr.mxu0 0.0
    %617 = vmatpush1.msra.mxu0 %v483
    %618 = vmatprep.subr.mxu0 0.0
    %619 = vmatpush1.msra.mxu0 %v486
    %620 = vmatprep.subr.mxu0 0.0
    %621 = vmatpush1.msra.mxu0 %v489
    %622 = vmatprep.subr.mxu0 0.0
    %623 = vmatpush1.msra.mxu0 %v492
    %624 = vmatprep.subr.mxu0 0.0
    %625 = vmatpush1.msra.mxu0 %v495
    %626 = vmatprep.subr.mxu0 0.0
    %627 = vmatpush1.msra.mxu0 %v498
    %628 = vmatprep.subr.mxu0 0.0
    %629 = vmatpush1.msra.mxu0 %v501
    %630 = vmatprep.subr.mxu0 0.0
    %631 = vmatpush1.msra.mxu0 %v504
    %632 = vmatprep.subr.mxu0 0.0
    %633 = vmatpush1.msra.mxu0 %v507
    %634 = vmatprep.subr.mxu0 0.0
    %635 = vmatpush1.msra.mxu0 %v510
    %636 = vmatprep.subr.mxu0 0.0
    %637 = vmatpush1.msra.mxu0 %v513
    %638 = vmatprep.subr.mxu0 0.0
    %639 = vmatpush1.msra.mxu0 %v516
    %640 = vmatprep.subr.mxu0 0.0
    %641 = vmatpush1.msra.mxu0 0.0
    %642 = vmatprep.subr.mxu0 0.0
    %643 = vmatpush1.msra.mxu0 0.0
    %644 = vmatprep.subr.mxu0 0.0
    %645 = vmatpush1.msra.mxu0 0.0
    %646 = vmatprep.subr.mxu0 0.0
    %647 = vmatpush1.msra.mxu0 0.0
    %648 = vmatprep.subr.mxu0 0.0
    %649 = vmatpush1.msra.mxu0 0.0
    %650 = vmatprep.subr.mxu0 0.0
    %651 = vmatpush1.msra.mxu0 0.0
    %652 = vmatprep.subr.mxu0 0.0
    %653 = vmatpush1.msra.mxu0 0.0
    %654 = vmatprep.subr.mxu0 0.0
    %655 = vmatpush1.msra.mxu0 0.0
    %656 = vmatprep.subr.mxu0 0.0
    %657 = vmatpush1.msra.mxu0 0.0
    %658 = vmatprep.subr.mxu0 0.0
    %659 = vmatpush1.msra.mxu0 0.0
    %660 = vmatprep.subr.mxu0 0.0
    %661 = vmatpush1.msra.mxu0 0.0
    %662 = vmatprep.subr.mxu0 0.0
    %663 = vmatpush1.msra.mxu0 0.0
    %664 = vmatprep.subr.mxu0 0.0
    %665 = vmatpush1.msra.mxu0 0.0
    %666 = vmatprep.subr.mxu0 0.0
    %667 = vmatpush1.msra.mxu0 0.0
    %668 = vmatprep.subr.mxu0 0.0
    %669 = vmatpush1.msra.mxu0 0.0
    %670 = vmatprep.subr.mxu0 0.0
    %671 = vmatpush1.msra.mxu0 0.0
    %672 = vmatprep.mubr.f32.mxu0 0.0
    %673 = vmatmul.mubr.f32.gmra.mrb[0].mxu0 0.0
    %v674 = vpop.f32.mrb[0].mxu0
    %v675 = vadd.f32 %v533, %v674
    %v676 = vpop.f32.mrb[0].mxu0
    %677 = vdwg.mxu0
    %v678 = vadd.f32 %v518, %v604
    %v679 = vxor.u32 %v678, 2147483648
    %v680 = vmul.f32 %v679, 1.442695
    %v681 = vpow.pop %v680
    %v682 = vadd.f32 %v681, 1.0
    %v683 = vrcp.pop %v682
    %v684 = vmul.f32 1.0, %v683
    %v685 = vadd.f32 %v519, %v606
    %v686 = vxor.u32 %v685, 2147483648
    %v687 = vmul.f32 %v686, 1.442695
    %v688 = vpow.pop %v687
    %v689 = vadd.f32 %v688, 1.0
    %v690 = vrcp.pop %v689
    %v691 = vmul.f32 1.0, %v690
    %v692 = vmul.f32 %v684, %v675
    %v693 = vadd.f32 %v520, %v692
    %v694 = vtanh.pop %v693
    %v695 = vsub.f32 1.0, %v691
    %v696 = vmul.f32 %v695, %v694
    %v697 = vmul.f32 %v691, 0.0
    %v698 = vadd.f32 %v696, %v697
    %699 = vst [vmem:[#allocation2] sm:$0xff] %v698
    %700 = vst [vmem:[#allocation3 + $0x38] sm:$0xff] %v698
    %v701 = vsel %vm174, %v324, %v354
    %v702 = vsel %vm175, %v326, %v356
    %v703 = vsel %vm176, %v436, %v461
    %704 = vmatprep.subr.mxu0 %v470
    %705 = vmatpush1.msra.mxu0 %v469
    %706 = vmatprep.subr.mxu0 %v473
    %707 = vmatpush1.msra.mxu0 %v472
    %708 = vmatprep.subr.mxu0 %v476
    %709 = vmatpush1.msra.mxu0 %v475
    %710 = vmatprep.subr.mxu0 %v479
    %711 = vmatpush1.msra.mxu0 %v478
    %712 = vmatprep.subr.mxu0 %v482
    %713 = vmatpush1.msra.mxu0 %v481
    %714 = vmatprep.subr.mxu0 %v485
    %715 = vmatpush1.msra.mxu0 %v484
    %716 = vmatprep.subr.mxu0 %v488
    %717 = vmatpush1.msra.mxu0 %v487
    %718 = vmatprep.subr.mxu0 %v491
    %719 = vmatpush1.msra.mxu0 %v490
    %720 = vmatprep.subr.mxu0 %v494
    %721 = vmatpush1.msra.mxu0 %v493
    %722 = vmatprep.subr.mxu0 %v497
    %723 = vmatpush1.msra.mxu0 %v496
    %724 = vmatprep.subr.mxu0 %v500
    %725 = vmatpush1.msra.mxu0 %v499
    %726 = vmatprep.subr.mxu0 %v503
    %727 = vmatpush1.msra.mxu0 %v502
    %728 = vmatprep.subr.mxu0 %v506
    %729 = vmatpush1.msra.mxu0 %v505
    %730 = vmatprep.subr.mxu0 %v509
    %731 = vmatpush1.msra.mxu0 %v508
    %732 = vmatprep.subr.mxu0 %v512
    %733 = vmatpush1.msra.mxu0 %v511
    %734 = vmatprep.subr.mxu0 %v515
    %735 = vmatpush1.msra.mxu0 %v514
    %736 = vmatprep.subr.mxu0 0.0
    %737 = vmatpush1.msra.mxu0 0.0
    %738 = vmatprep.subr.mxu0 0.0
    %739 = vmatpush1.msra.mxu0 0.0
    %740 = vmatprep.subr.mxu0 0.0
    %741 = vmatpush1.msra.mxu0 0.0
    %742 = vmatprep.subr.mxu0 0.0
    %743 = vmatpush1.msra.mxu0 0.0
    %744 = vmatprep.subr.mxu0 0.0
    %745 = vmatpush1.msra.mxu0 0.0
    %746 = vmatprep.subr.mxu0 0.0
    %747 = vmatpush1.msra.mxu0 0.0
    %748 = vmatprep.subr.mxu0 0.0
    %749 = vmatpush1.msra.mxu0 0.0
    %750 = vmatprep.subr.mxu0 0.0
    %751 = vmatpush1.msra.mxu0 0.0
    %752 = vmatprep.subr.mxu0 0.0
    %753 = vmatpush1.msra.mxu0 0.0
    %754 = vmatprep.subr.mxu0 0.0
    %755 = vmatpush1.msra.mxu0 0.0
    %756 = vmatprep.subr.mxu0 0.0
    %757 = vmatpush1.msra.mxu0 0.0
    %758 = vmatprep.subr.mxu0 0.0
    %759 = vmatpush1.msra.mxu0 0.0
    %760 = vmatprep.subr.mxu0 0.0
    %761 = vmatpush1.msra.mxu0 0.0
    %762 = vmatprep.subr.mxu0 0.0
    %763 = vmatpush1.msra.mxu0 0.0
    %764 = vmatprep.subr.mxu0 0.0
    %765 = vmatpush1.msra.mxu0 0.0
    %766 = vmatprep.subr.mxu0 0.0
    %767 = vmatpush1.msra.mxu0 0.0
    %768 = vmatprep.mubr.f32.mxu0 0.0
    %769 = vmatmul.mubr.f32.gmra.mrb[0].mxu0 %v698
    %v770 = vpop.f32.mrb[0].mxu0
    %v771 = vadd.f32 %v525, %v770
    %v772 = vpop.f32.mrb[0].mxu0
    %v773 = vadd.f32 %v529, %v772
    %774 = vdwg.mxu0
    %775 = vmatprep.subr.mxu0 0.0
    %776 = vmatpush1.msra.mxu0 %v471
    %777 = vmatprep.subr.mxu0 0.0
    %778 = vmatpush1.msra.mxu0 %v474
    %779 = vmatprep.subr.mxu0 0.0
    %780 = vmatpush1.msra.mxu0 %v477
    %781 = vmatprep.subr.mxu0 0.0
    %782 = vmatpush1.msra.mxu0 %v480
    %783 = vmatprep.subr.mxu0 0.0
    %784 = vmatpush1.msra.mxu0 %v483
    %785 = vmatprep.subr.mxu0 0.0
    %786 = vmatpush1.msra.mxu0 %v486
    %787 = vmatprep.subr.mxu0 0.0
    %788 = vmatpush1.msra.mxu0 %v489
    %789 = vmatprep.subr.mxu0 0.0
    %790 = vmatpush1.msra.mxu0 %v492
    %791 = vmatprep.subr.mxu0 0.0
    %792 = vmatpush1.msra.mxu0 %v495
    %793 = vmatprep.subr.mxu0 0.0
    %794 = vmatpush1.msra.mxu0 %v498
    %795 = vmatprep.subr.mxu0 0.0
    %796 = vmatpush1.msra.mxu0 %v501
    %797 = vmatprep.subr.mxu0 0.0
    %798 = vmatpush1.msra.mxu0 %v504
    %799 = vmatprep.subr.mxu0 0.0
    %800 = vmatpush1.msra.mxu0 %v507
    %801 = vmatprep.subr.mxu0 0.0
    %802 = vmatpush1.msra.mxu0 %v510
    %803 = vmatprep.subr.mxu0 0.0
    %804 = vmatpush1.msra.mxu0 %v513
    %805 = vmatprep.subr.mxu0 0.0
    %806 = vmatpush1.msra.mxu0 %v516
    %807 = vmatprep.subr.mxu0 0.0
    %808 = vmatpush1.msra.mxu0 0.0
    %809 = vmatprep.subr.mxu0 0.0
    %810 = vmatpush1.msra.mxu0 0.0
    %811 = vmatprep.subr.mxu0 0.0
    %812 = vmatpush1.msra.mxu0 0.0
    %813 = vmatprep.subr.mxu0 0.0
    %814 = vmatpush1.msra.mxu0 0.0
    %815 = vmatprep.subr.mxu0 0.0
    %816 = vmatpush1.msra.mxu0 0.0
    %817 = vmatprep.subr.mxu0 0.0
    %818 = vmatpush1.msra.mxu0 0.0
    %819 = vmatprep.subr.mxu0 0.0
    %820 = vmatpush1.msra.mxu0 0.0
    %821 = vmatprep.subr.mxu0 0.0
    %822 = vmatpush1.msra.mxu0 0.0
    %823 = vmatprep.subr.mxu0 0.0
    %824 = vmatpush1.msra.mxu0 0.0
    %825 = vmatprep.subr.mxu0 0.0
    %826 = vmatpush1.msra.mxu0 0.0
    %827 = vmatprep.subr.mxu0 0.0
    %828 = vmatpush1.msra.mxu0 0.0
    %829 = vmatprep.subr.mxu0 0.0
    %830 = vmatpush1.msra.mxu0 0.0
    %831 = vmatprep.subr.mxu0 0.0
    %832 = vmatpush1.msra.mxu0 0.0
    %833 = vmatprep.subr.mxu0 0.0
    %834 = vmatpush1.msra.mxu0 0.0
    %835 = vmatprep.subr.mxu0 0.0
    %836 = vmatpush1.msra.mxu0 0.0
    %837 = vmatprep.subr.mxu0 0.0
    %838 = vmatpush1.msra.mxu0 0.0
    %839 = vmatprep.mubr.f32.mxu0 0.0
    %840 = vmatmul.mubr.f32.gmra.mrb[0].mxu0 %v698
    %v841 = vpop.f32.mrb[0].mxu0
    %v842 = vadd.f32 %v533, %v841
    %v843 = vpop.f32.mrb[0].mxu0
    %844 = vdwg.mxu0
    %v845 = vadd.f32 %v701, %v771
    %v846 = vxor.u32 %v845, 2147483648
    %v847 = vmul.f32 %v846, 1.442695
    %v848 = vpow.pop %v847
    %v849 = vadd.f32 %v848, 1.0
    %v850 = vrcp.pop %v849
    %v851 = vmul.f32 1.0, %v850
    %v852 = vadd.f32 %v702, %v773
    %v853 = vxor.u32 %v852, 2147483648
    %v854 = vmul.f32 %v853, 1.442695
    %v855 = vpow.pop %v854
    %v856 = vadd.f32 %v855, 1.0
    %v857 = vrcp.pop %v856
    %v858 = vmul.f32 1.0, %v857
    %v859 = vmul.f32 %v851, %v842
    %v860 = vadd.f32 %v703, %v859
    %v861 = vtanh.pop %v860
    %v862 = vsub.f32 1.0, %v858
    %v863 = vmul.f32 %v862, %v861
    %v864 = vmul.f32 %v858, %v698
    %v865 = vadd.f32 %v863, %v864
    %866 = vst [vmem:[#allocation2 + $0x8] sm:$0xff] %v865
    %867 = vst [vmem:[#allocation3 + $0x30] sm:$0xff] %v865
    %v868 = vsel %vm174, %v330, %v348
    %v869 = vsel %vm175, %v332, %v350
    %v870 = vsel %vm176, %v441, %v456
    %871 = vmatprep.subr.mxu0 %v470
    %872 = vmatpush1.msra.mxu0 %v469
    %873 = vmatprep.subr.mxu0 %v473
    %874 = vmatpush1.msra.mxu0 %v472
    %875 = vmatprep.subr.mxu0 %v476
    %876 = vmatpush1.msra.mxu0 %v475
    %877 = vmatprep.subr.mxu0 %v479
    %878 = vmatpush1.msra.mxu0 %v478
    %879 = vmatprep.subr.mxu0 %v482
    %880 = vmatpush1.msra.mxu0 %v481
    %881 = vmatprep.subr.mxu0 %v485
    %882 = vmatpush1.msra.mxu0 %v484
    %883 = vmatprep.subr.mxu0 %v488
    %884 = vmatpush1.msra.mxu0 %v487
    %885 = vmatprep.subr.mxu0 %v491
    %886 = vmatpush1.msra.mxu0 %v490
    %887 = vmatprep.subr.mxu0 %v494
    %888 = vmatpush1.msra.mxu0 %v493
    %889 = vmatprep.subr.mxu0 %v497
    %890 = vmatpush1.msra.mxu0 %v496
    %891 = vmatprep.subr.mxu0 %v500
    %892 = vmatpush1.msra.mxu0 %v499
    %893 = vmatprep.subr.mxu0 %v503
    %894 = vmatpush1.msra.mxu0 %v502
    %895 = vmatprep.subr.mxu0 %v506
    %896 = vmatpush1.msra.mxu0 %v505
    %897 = vmatprep.subr.mxu0 %v509
    %898 = vmatpush1.msra.mxu0 %v508
    %899 = vmatprep.subr.mxu0 %v512
    %900 = vmatpush1.msra.mxu0 %v511
    %901 = vmatprep.subr.mxu0 %v515
    %902 = vmatpush1.msra.mxu0 %v514
    %903 = vmatprep.subr.mxu0 0.0
    %904 = vmatpush1.msra.mxu0 0.0
    %905 = vmatprep.subr.mxu0 0.0
    %906 = vmatpush1.msra.mxu0 0.0
    %907 = vmatprep.subr.mxu0 0.0
    %908 = vmatpush1.msra.mxu0 0.0
    %909 = vmatprep.subr.mxu0 0.0
    %910 = vmatpush1.msra.mxu0 0.0
    %911 = vmatprep.subr.mxu0 0.0
    %912 = vmatpush1.msra.mxu0 0.0
    %913 = vmatprep.subr.mxu0 0.0
    %914 = vmatpush1.msra.mxu0 0.0
    %915 = vmatprep.subr.mxu0 0.0
    %916 = vmatpush1.msra.mxu0 0.0
    %917 = vmatprep.subr.mxu0 0.0
    %918 = vmatpush1.msra.mxu0 0.0
    %919 = vmatprep.subr.mxu0 0.0
    %920 = vmatpush1.msra.mxu0 0.0
    %921 = vmatprep.subr.mxu0 0.0
    %922 = vmatpush1.msra.mxu0 0.0
    %923 = vmatprep.subr.mxu0 0.0
    %924 = vmatpush1.msra.mxu0 0.0
    %925 = vmatprep.subr.mxu0 0.0
    %926 = vmatpush1.msra.mxu0 0.0
    %927 = vmatprep.subr.mxu0 0.0
    %928 = vmatpush1.msra.mxu0 0.0
    %929 = vmatprep.subr.mxu0 0.0
    %930 = vmatpush1.msra.mxu0 0.0
    %931 = vmatprep.subr.mxu0 0.0
    %932 = vmatpush1.msra.mxu0 0.0
    %933 = vmatprep.subr.mxu0 0.0
    %934 = vmatpush1.msra.mxu0 0.0
    %935 = vmatprep.mubr.f32.mxu0 0.0
    %936 = vmatmul.mubr.f32.gmra.mrb[0].mxu0 %v865
    %v937 = vpop.f32.mrb[0].mxu0
    %v938 = vadd.f32 %v525, %v937
    %v939 = vpop.f32.mrb[0].mxu0
    %v940 = vadd.f32 %v529, %v939
    %941 = vdwg.mxu0
    %942 = vmatprep.subr.mxu0 0.0
    %943 = vmatpush1.msra.mxu0 %v471
    %944 = vmatprep.subr.mxu0 0.0
    %945 = vmatpush1.msra.mxu0 %v474
    %946 = vmatprep.subr.mxu0 0.0
    %947 = vmatpush1.msra.mxu0 %v477
    %948 = vmatprep.subr.mxu0 0.0
    %949 = vmatpush1.msra.mxu0 %v480
    %950 = vmatprep.subr.mxu0 0.0
    %951 = vmatpush1.msra.mxu0 %v483
    %952 = vmatprep.subr.mxu0 0.0
    %953 = vmatpush1.msra.mxu0 %v486
    %954 = vmatprep.subr.mxu0 0.0
    %955 = vmatpush1.msra.mxu0 %v489
    %956 = vmatprep.subr.mxu0 0.0
    %957 = vmatpush1.msra.mxu0 %v492
    %958 = vmatprep.subr.mxu0 0.0
    %959 = vmatpush1.msra.mxu0 %v495
    %960 = vmatprep.subr.mxu0 0.0
    %961 = vmatpush1.msra.mxu0 %v498
    %962 = vmatprep.subr.mxu0 0.0
    %963 = vmatpush1.msra.mxu0 %v501
    %964 = vmatprep.subr.mxu0 0.0
    %965 = vmatpush1.msra.mxu0 %v504
    %966 = vmatprep.subr.mxu0 0.0
    %967 = vmatpush1.msra.mxu0 %v507
    %968 = vmatprep.subr.mxu0 0.0
    %969 = vmatpush1.msra.mxu0 %v510
    %970 = vmatprep.subr.mxu0 0.0
    %971 = vmatpush1.msra.mxu0 %v513
    %972 = vmatprep.subr.mxu0 0.0
    %973 = vmatpush1.msra.mxu0 %v516
    %974 = vmatprep.subr.mxu0 0.0
    %975 = vmatpush1.msra.mxu0 0.0
    %976 = vmatprep.subr.mxu0 0.0
    %977 = vmatpush1.msra.mxu0 0.0
    %978 = vmatprep.subr.mxu0 0.0
    %979 = vmatpush1.msra.mxu0 0.0
    %980 = vmatprep.subr.mxu0 0.0
    %981 = vmatpush1.msra.mxu0 0.0
    %982 = vmatprep.subr.mxu0 0.0
    %983 = vmatpush1.msra.mxu0 0.0
    %984 = vmatprep.subr.mxu0 0.0
    %985 = vmatpush1.msra.mxu0 0.0
    %986 = vmatprep.subr.mxu0 0.0
    %987 = vmatpush1.msra.mxu0 0.0
    %988 = vmatprep.subr.mxu0 0.0
    %989 = vmatpush1.msra.mxu0 0.0
    %990 = vmatprep.subr.mxu0 0.0
    %991 = vmatpush1.msra.mxu0 0.0
    %992 = vmatprep.subr.mxu0 0.0
    %993 = vmatpush1.msra.mxu0 0.0
    %994 = vmatprep.subr.mxu0 0.0
    %995 = vmatpush1.msra.mxu0 0.0
    %996 = vmatprep.subr.mxu0 0.0
    %997 = vmatpush1.msra.mxu0 0.0
    %998 = vmatprep.subr.mxu0 0.0
    %999 = vmatpush1.msra.mxu0 0.0
    %1000 = vmatprep.subr.mxu0 0.0
    %1001 = vmatpush1.msra.mxu0 0.0
    %1002 = vmatprep.subr.mxu0 0.0
    %1003 = vmatpush1.msra.mxu0 0.0
    %1004 = vmatprep.subr.mxu0 0.0
    %1005 = vmatpush1.msra.mxu0 0.0
    %1006 = vmatprep.mubr.f32.mxu0 0.0
    %1007 = vmatmul.mubr.f32.gmra.mrb[0].mxu0 %v865
    %v1008 = vpop.f32.mrb[0].mxu0
    %v1009 = vadd.f32 %v533, %v1008
    %v1010 = vpop.f32.mrb[0].mxu0
    %1011 = vdwg.mxu0
    %v1012 = vadd.f32 %v868, %v938
    %v1013 = vxor.u32 %v1012, 2147483648
    %v1014 = vmul.f32 %v1013, 1.442695
    %v1015 = vpow.pop %v1014
    %v1016 = vadd.f32 %v1015, 1.0
    %v1017 = vrcp.pop %v1016
    %v1018 = vmul.f32 1.0, %v1017
    %v1019 = vadd.f32 %v869, %v940
    %v1020 = vxor.u32 %v1019, 2147483648
    %v1021 = vmul.f32 %v1020, 1.442695
    %v1022 = vpow.pop %v1021
    %v1023 = vadd.f32 %v1022, 1.0
    %v1024 = vrcp.pop %v1023
    %v1025 = vmul.f32 1.0, %v1024
    %v1026 = vmul.f32 %v1018, %v1009
    %v1027 = vadd.f32 %v870, %v1026
    %v1028 = vtanh.pop %v1027
    %v1029 = vsub.f32 1.0, %v1025
    %v1030 = vmul.f32 %v1029, %v1028
    %v1031 = vmul.f32 %v1025, %v865
    %v1032 = vadd.f32 %v1030, %v1031
    %1033 = vst [vmem:[#allocation2 + $0x10] sm:$0xff] %v1032
    %1034 = vst [vmem:[#allocation3 + $0x28] sm:$0xff] %v1032
    %v1035 = vsel %vm174, %v336, %v342
    %v1036 = vsel %vm175, %v338, %v344
    %v1037 = vsel %vm176, %v446, %v451
    %1038 = vmatprep.subr.mxu0 %v470
    %1039 = vmatpush1.msra.mxu0 %v469
    %1040 = vmatprep.subr.mxu0 %v473
    %1041 = vmatpush1.msra.mxu0 %v472
    %1042 = vmatprep.subr.mxu0 %v476
    %1043 = vmatpush1.msra.mxu0 %v475
    %1044 = vmatprep.subr.mxu0 %v479
    %1045 = vmatpush1.msra.mxu0 %v478
    %1046 = vmatprep.subr.mxu0 %v482
    %1047 = vmatpush1.msra.mxu0 %v481
    %1048 = vmatprep.subr.mxu0 %v485
    %1049 = vmatpush1.msra.mxu0 %v484
    %1050 = vmatprep.subr.mxu0 %v488
    %1051 = vmatpush1.msra.mxu0 %v487
    %1052 = vmatprep.subr.mxu0 %v491
    %1053 = vmatpush1.msra.mxu0 %v490
    %1054 = vmatprep.subr.mxu0 %v494
    %1055 = vmatpush1.msra.mxu0 %v493
    %1056 = vmatprep.subr.mxu0 %v497
    %1057 = vmatpush1.msra.mxu0 %v496
    %1058 = vmatprep.subr.mxu0 %v500
    %1059 = vmatpush1.msra.mxu0 %v499
    %1060 = vmatprep.subr.mxu0 %v503
    %1061 = vmatpush1.msra.mxu0 %v502
    %1062 = vmatprep.subr.mxu0 %v506
    %1063 = vmatpush1.msra.mxu0 %v505
    %1064 = vmatprep.subr.mxu0 %v509
    %1065 = vmatpush1.msra.mxu0 %v508
    %1066 = vmatprep.subr.mxu0 %v512
    %1067 = vmatpush1.msra.mxu0 %v511
    %1068 = vmatprep.subr.mxu0 %v515
    %1069 = vmatpush1.msra.mxu0 %v514
    %1070 = vmatprep.subr.mxu0 0.0
    %1071 = vmatpush1.msra.mxu0 0.0
    %1072 = vmatprep.subr.mxu0 0.0
    %1073 = vmatpush1.msra.mxu0 0.0
    %1074 = vmatprep.subr.mxu0 0.0
    %1075 = vmatpush1.msra.mxu0 0.0
    %1076 = vmatprep.subr.mxu0 0.0
    %1077 = vmatpush1.msra.mxu0 0.0
    %1078 = vmatprep.subr.mxu0 0.0
    %1079 = vmatpush1.msra.mxu0 0.0
    %1080 = vmatprep.subr.mxu0 0.0
    %1081 = vmatpush1.msra.mxu0 0.0
    %1082 = vmatprep.subr.mxu0 0.0
    %1083 = vmatpush1.msra.mxu0 0.0
    %1084 = vmatprep.subr.mxu0 0.0
    %1085 = vmatpush1.msra.mxu0 0.0
    %1086 = vmatprep.subr.mxu0 0.0
    %1087 = vmatpush1.msra.mxu0 0.0
    %1088 = vmatprep.subr.mxu0 0.0
    %1089 = vmatpush1.msra.mxu0 0.0
    %1090 = vmatprep.subr.mxu0 0.0
    %1091 = vmatpush1.msra.mxu0 0.0
    %1092 = vmatprep.subr.mxu0 0.0
    %1093 = vmatpush1.msra.mxu0 0.0
    %1094 = vmatprep.subr.mxu0 0.0
    %1095 = vmatpush1.msra.mxu0 0.0
    %1096 = vmatprep.subr.mxu0 0.0
    %1097 = vmatpush1.msra.mxu0 0.0
    %1098 = vmatprep.subr.mxu0 0.0
    %1099 = vmatpush1.msra.mxu0 0.0
    %1100 = vmatprep.subr.mxu0 0.0
    %1101 = vmatpush1.msra.mxu0 0.0
    %1102 = vmatprep.mubr.f32.mxu0 0.0
    %1103 = vmatmul.mubr.f32.gmra.mrb[0].mxu0 %v1032
    %v1104 = vpop.f32.mrb[0].mxu0
    %v1105 = vadd.f32 %v525, %v1104
    %v1106 = vpop.f32.mrb[0].mxu0
    %v1107 = vadd.f32 %v529, %v1106
    %1108 = vdwg.mxu0
    %1109 = vmatprep.subr.mxu0 0.0
    %1110 = vmatpush1.msra.mxu0 %v471
    %1111 = vmatprep.subr.mxu0 0.0
    %1112 = vmatpush1.msra.mxu0 %v474
    %1113 = vmatprep.subr.mxu0 0.0
    %1114 = vmatpush1.msra.mxu0 %v477
    %1115 = vmatprep.subr.mxu0 0.0
    %1116 = vmatpush1.msra.mxu0 %v480
    %1117 = vmatprep.subr.mxu0 0.0
    %1118 = vmatpush1.msra.mxu0 %v483
    %1119 = vmatprep.subr.mxu0 0.0
    %1120 = vmatpush1.msra.mxu0 %v486
    %1121 = vmatprep.subr.mxu0 0.0
    %1122 = vmatpush1.msra.mxu0 %v489
    %1123 = vmatprep.subr.mxu0 0.0
    %1124 = vmatpush1.msra.mxu0 %v492
    %1125 = vmatprep.subr.mxu0 0.0
    %1126 = vmatpush1.msra.mxu0 %v495
    %1127 = vmatprep.subr.mxu0 0.0
    %1128 = vmatpush1.msra.mxu0 %v498
    %1129 = vmatprep.subr.mxu0 0.0
    %1130 = vmatpush1.msra.mxu0 %v501
    %1131 = vmatprep.subr.mxu0 0.0
    %1132 = vmatpush1.msra.mxu0 %v504
    %1133 = vmatprep.subr.mxu0 0.0
    %1134 = vmatpush1.msra.mxu0 %v507
    %1135 = vmatprep.subr.mxu0 0.0
    %1136 = vmatpush1.msra.mxu0 %v510
    %1137 = vmatprep.subr.mxu0 0.0
    %1138 = vmatpush1.msra.mxu0 %v513
    %1139 = vmatprep.subr.mxu0 0.0
    %1140 = vmatpush1.msra.mxu0 %v516
    %1141 = vmatprep.subr.mxu0 0.0
    %1142 = vmatpush1.msra.mxu0 0.0
    %1143 = vmatprep.subr.mxu0 0.0
    %1144 = vmatpush1.msra.mxu0 0.0
    %1145 = vmatprep.subr.mxu0 0.0
    %1146 = vmatpush1.msra.mxu0 0.0
    %1147 = vmatprep.subr.mxu0 0.0
    %1148 = vmatpush1.msra.mxu0 0.0
    %1149 = vmatprep.subr.mxu0 0.0
    %1150 = vmatpush1.msra.mxu0 0.0
    %1151 = vmatprep.subr.mxu0 0.0
    %1152 = vmatpush1.msra.mxu0 0.0
    %1153 = vmatprep.subr.mxu0 0.0
    %1154 = vmatpush1.msra.mxu0 0.0
    %1155 = vmatprep.subr.mxu0 0.0
    %1156 = vmatpush1.msra.mxu0 0.0
    %1157 = vmatprep.subr.mxu0 0.0
    %1158 = vmatpush1.msra.mxu0 0.0
    %1159 = vmatprep.subr.mxu0 0.0
    %1160 = vmatpush1.msra.mxu0 0.0
    %1161 = vmatprep.subr.mxu0 0.0
    %1162 = vmatpush1.msra.mxu0 0.0
    %1163 = vmatprep.subr.mxu0 0.0
    %1164 = vmatpush1.msra.mxu0 0.0
    %1165 = vmatprep.subr.mxu0 0.0
    %1166 = vmatpush1.msra.mxu0 0.0
    %1167 = vmatprep.subr.mxu0 0.0
    %1168 = vmatpush1.msra.mxu0 0.0
    %1169 = vmatprep.subr.mxu0 0.0
    %1170 = vmatpush1.msra.mxu0 0.0
    %1171 = vmatprep.subr.mxu0 0.0
    %1172 = vmatpush1.msra.mxu0 0.0
    %1173 = vmatprep.mubr.f32.mxu0 0.0
    %1174 = vmatmul.mubr.f32.gmra.mrb[0].mxu0 %v1032
    %v1175 = vpop.f32.mrb[0].mxu0
    %v1176 = vadd.f32 %v533, %v1175
    %v1177 = vpop.f32.mrb[0].mxu0
    %1178 = vdwg.mxu0
    %v1179 = vadd.f32 %v1035, %v1105
    %v1180 = vxor.u32 %v1179, 2147483648
    %v1181 = vmul.f32 %v1180, 1.442695
    %v1182 = vpow.pop %v1181
    %v1183 = vadd.f32 %v1182, 1.0
    %v1184 = vrcp.pop %v1183
    %v1185 = vmul.f32 1.0, %v1184
    %v1186 = vadd.f32 %v1036, %v1107
    %v1187 = vxor.u32 %v1186, 2147483648
    %v1188 = vmul.f32 %v1187, 1.442695
    %v1189 = vpow.pop %v1188
    %v1190 = vadd.f32 %v1189, 1.0
    %v1191 = vrcp.pop %v1190
    %v1192 = vmul.f32 1.0, %v1191
    %v1193 = vmul.f32 %v1185, %v1176
    %v1194 = vadd.f32 %v1037, %v1193
    %v1195 = vtanh.pop %v1194
    %v1196 = vsub.f32 1.0, %v1192
    %v1197 = vmul.f32 %v1196, %v1195
    %v1198 = vmul.f32 %v1192, %v1032
    %v1199 = vadd.f32 %v1197, %v1198
    %1200 = vst [vmem:[#allocation2 + $0x18] sm:$0xff] %v1199
    %1201 = vst [vmem:[#allocation3 + $0x20] sm:$0xff] %v1199
    %v1202 = vsel %vm174, %v342, %v336
    %v1203 = vsel %vm175, %v344, %v338
    %v1204 = vsel %vm176, %v451, %v446
    %1205 = vmatprep.subr.mxu0 %v470
    %1206 = vmatpush1.msra.mxu0 %v469
    %1207 = vmatprep.subr.mxu0 %v473
    %1208 = vmatpush1.msra.mxu0 %v472
    %1209 = vmatprep.subr.mxu0 %v476
    %1210 = vmatpush1.msra.mxu0 %v475
    %1211 = vmatprep.subr.mxu0 %v479
    %1212 = vmatpush1.msra.mxu0 %v478
    %1213 = vmatprep.subr.mxu0 %v482
    %1214 = vmatpush1.msra.mxu0 %v481
    %1215 = vmatprep.subr.mxu0 %v485
    %1216 = vmatpush1.msra.mxu0 %v484
    %1217 = vmatprep.subr.mxu0 %v488
    %1218 = vmatpush1.msra.mxu0 %v487
    %1219 = vmatprep.subr.mxu0 %v491
    %1220 = vmatpush1.msra.mxu0 %v490
    %1221 = vmatprep.subr.mxu0 %v494
    %1222 = vmatpush1.msra.mxu0 %v493
    %1223 = vmatprep.subr.mxu0 %v497
    %1224 = vmatpush1.msra.mxu0 %v496
    %1225 = vmatprep.subr.mxu0 %v500
    %1226 = vmatpush1.msra.mxu0 %v499
    %1227 = vmatprep.subr.mxu0 %v503
    %1228 = vmatpush1.msra.mxu0 %v502
    %1229 = vmatprep.subr.mxu0 %v506
    %1230 = vmatpush1.msra.mxu0 %v505
    %1231 = vmatprep.subr.mxu0 %v509
    %1232 = vmatpush1.msra.mxu0 %v508
    %1233 = vmatprep.subr.mxu0 %v512
    %1234 = vmatpush1.msra.mxu0 %v511
    %1235 = vmatprep.subr.mxu0 %v515
    %1236 = vmatpush1.msra.mxu0 %v514
    %1237 = vmatprep.subr.mxu0 0.0
    %1238 = vmatpush1.msra.mxu0 0.0
    %1239 = vmatprep.subr.mxu0 0.0
    %1240 = vmatpush1.msra.mxu0 0.0
    %1241 = vmatprep.subr.mxu0 0.0
    %1242 = vmatpush1.msra.mxu0 0.0
    %1243 = vmatprep.subr.mxu0 0.0
    %1244 = vmatpush1.msra.mxu0 0.0
    %1245 = vmatprep.subr.mxu0 0.0
    %1246 = vmatpush1.msra.mxu0 0.0
    %1247 = vmatprep.subr.mxu0 0.0
    %1248 = vmatpush1.msra.mxu0 0.0
    %1249 = vmatprep.subr.mxu0 0.0
    %1250 = vmatpush1.msra.mxu0 0.0
    %1251 = vmatprep.subr.mxu0 0.0
    %1252 = vmatpush1.msra.mxu0 0.0
    %1253 = vmatprep.subr.mxu0 0.0
    %1254 = vmatpush1.msra.mxu0 0.0
    %1255 = vmatprep.subr.mxu0 0.0
    %1256 = vmatpush1.msra.mxu0 0.0
    %1257 = vmatprep.subr.mxu0 0.0
    %1258 = vmatpush1.msra.mxu0 0.0
    %1259 = vmatprep.subr.mxu0 0.0
    %1260 = vmatpush1.msra.mxu0 0.0
    %1261 = vmatprep.subr.mxu0 0.0
    %1262 = vmatpush1.msra.mxu0 0.0
    %1263 = vmatprep.subr.mxu0 0.0
    %1264 = vmatpush1.msra.mxu0 0.0
    %1265 = vmatprep.subr.mxu0 0.0
    %1266 = vmatpush1.msra.mxu0 0.0
    %1267 = vmatprep.subr.mxu0 0.0
    %1268 = vmatpush1.msra.mxu0 0.0
    %1269 = vmatprep.mubr.f32.mxu0 0.0
    %1270 = vmatmul.mubr.f32.gmra.mrb[0].mxu0 %v1199
    %v1271 = vpop.f32.mrb[0].mxu0
    %v1272 = vadd.f32 %v525, %v1271
    %v1273 = vpop.f32.mrb[0].mxu0
    %v1274 = vadd.f32 %v529, %v1273
    %1275 = vdwg.mxu0
    %1276 = vmatprep.subr.mxu0 0.0
    %1277 = vmatpush1.msra.mxu0 %v471
    %1278 = vmatprep.subr.mxu0 0.0
    %1279 = vmatpush1.msra.mxu0 %v474
    %1280 = vmatprep.subr.mxu0 0.0
    %1281 = vmatpush1.msra.mxu0 %v477
    %1282 = vmatprep.subr.mxu0 0.0
    %1283 = vmatpush1.msra.mxu0 %v480
    %1284 = vmatprep.subr.mxu0 0.0
    %1285 = vmatpush1.msra.mxu0 %v483
    %1286 = vmatprep.subr.mxu0 0.0
    %1287 = vmatpush1.msra.mxu0 %v486
    %1288 = vmatprep.subr.mxu0 0.0
    %1289 = vmatpush1.msra.mxu0 %v489
    %1290 = vmatprep.subr.mxu0 0.0
    %1291 = vmatpush1.msra.mxu0 %v492
    %1292 = vmatprep.subr.mxu0 0.0
    %1293 = vmatpush1.msra.mxu0 %v495
    %1294 = vmatprep.subr.mxu0 0.0
    %1295 = vmatpush1.msra.mxu0 %v498
    %1296 = vmatprep.subr.mxu0 0.0
    %1297 = vmatpush1.msra.mxu0 %v501
    %1298 = vmatprep.subr.mxu0 0.0
    %1299 = vmatpush1.msra.mxu0 %v504
    %1300 = vmatprep.subr.mxu0 0.0
    %1301 = vmatpush1.msra.mxu0 %v507
    %1302 = vmatprep.subr.mxu0 0.0
    %1303 = vmatpush1.msra.mxu0 %v510
    %1304 = vmatprep.subr.mxu0 0.0
    %1305 = vmatpush1.msra.mxu0 %v513
    %1306 = vmatprep.subr.mxu0 0.0
    %1307 = vmatpush1.msra.mxu0 %v516
    %1308 = vmatprep.subr.mxu0 0.0
    %1309 = vmatpush1.msra.mxu0 0.0
    %1310 = vmatprep.subr.mxu0 0.0
    %1311 = vmatpush1.msra.mxu0 0.0
    %1312 = vmatprep.subr.mxu0 0.0
    %1313 = vmatpush1.msra.mxu0 0.0
    %1314 = vmatprep.subr.mxu0 0.0
    %1315 = vmatpush1.msra.mxu0 0.0
    %1316 = vmatprep.subr.mxu0 0.0
    %1317 = vmatpush1.msra.mxu0 0.0
    %1318 = vmatprep.subr.mxu0 0.0
    %1319 = vmatpush1.msra.mxu0 0.0
    %1320 = vmatprep.subr.mxu0 0.0
    %1321 = vmatpush1.msra.mxu0 0.0
    %1322 = vmatprep.subr.mxu0 0.0
    %1323 = vmatpush1.msra.mxu0 0.0
    %1324 = vmatprep.subr.mxu0 0.0
    %1325 = vmatpush1.msra.mxu0 0.0
    %1326 = vmatprep.subr.mxu0 0.0
    %1327 = vmatpush1.msra.mxu0 0.0
    %1328 = vmatprep.subr.mxu0 0.0
    %1329 = vmatpush1.msra.mxu0 0.0
    %1330 = vmatprep.subr.mxu0 0.0
    %1331 = vmatpush1.msra.mxu0 0.0
    %1332 = vmatprep.subr.mxu0 0.0
    %1333 = vmatpush1.msra.mxu0 0.0
    %1334 = vmatprep.subr.mxu0 0.0
    %1335 = vmatpush1.msra.mxu0 0.0
    %1336 = vmatprep.subr.mxu0 0.0
    %1337 = vmatpush1.msra.mxu0 0.0
    %1338 = vmatprep.subr.mxu0 0.0
    %1339 = vmatpush1.msra.mxu0 0.0
    %1340 = vmatprep.mubr.f32.mxu0 0.0
    %1341 = vmatmul.mubr.f32.gmra.mrb[0].mxu0 %v1199
    %v1342 = vpop.f32.mrb[0].mxu0
    %v1343 = vadd.f32 %v533, %v1342
    %v1344 = vpop.f32.mrb[0].mxu0
    %1345 = vdwg.mxu0
    %v1346 = vadd.f32 %v1202, %v1272
    %v1347 = vxor.u32 %v1346, 2147483648
    %v1348 = vmul.f32 %v1347, 1.442695
    %v1349 = vpow.pop %v1348
    %v1350 = vadd.f32 %v1349, 1.0
    %v1351 = vrcp.pop %v1350
    %v1352 = vmul.f32 1.0, %v1351
    %v1353 = vadd.f32 %v1203, %v1274
    %v1354 = vxor.u32 %v1353, 2147483648
    %v1355 = vmul.f32 %v1354, 1.442695
    %v1356 = vpow.pop %v1355
    %v1357 = vadd.f32 %v1356, 1.0
    %v1358 = vrcp.pop %v1357
    %v1359 = vmul.f32 1.0, %v1358
    %v1360 = vmul.f32 %v1352, %v1343
    %v1361 = vadd.f32 %v1204, %v1360
    %v1362 = vtanh.pop %v1361
    %v1363 = vsub.f32 1.0, %v1359
    %v1364 = vmul.f32 %v1363, %v1362
    %v1365 = vmul.f32 %v1359, %v1199
    %v1366 = vadd.f32 %v1364, %v1365
    %1367 = vst [vmem:[#allocation2 + $0x20] sm:$0xff] %v1366
    %1368 = vst [vmem:[#allocation3 + $0x18] sm:$0xff] %v1366
    %v1369 = vsel %vm174, %v348, %v330
    %v1370 = vsel %vm175, %v350, %v332
    %v1371 = vsel %vm176, %v456, %v441
    %1372 = vmatprep.subr.mxu0 %v470
    %1373 = vmatpush1.msra.mxu0 %v469
    %1374 = vmatprep.subr.mxu0 %v473
    %1375 = vmatpush1.msra.mxu0 %v472
    %1376 = vmatprep.subr.mxu0 %v476
    %1377 = vmatpush1.msra.mxu0 %v475
    %1378 = vmatprep.subr.mxu0 %v479
    %1379 = vmatpush1.msra.mxu0 %v478
    %1380 = vmatprep.subr.mxu0 %v482
    %1381 = vmatpush1.msra.mxu0 %v481
    %1382 = vmatprep.subr.mxu0 %v485
    %1383 = vmatpush1.msra.mxu0 %v484
    %1384 = vmatprep.subr.mxu0 %v488
    %1385 = vmatpush1.msra.mxu0 %v487
    %1386 = vmatprep.subr.mxu0 %v491
    %1387 = vmatpush1.msra.mxu0 %v490
    %1388 = vmatprep.subr.mxu0 %v494
    %1389 = vmatpush1.msra.mxu0 %v493
    %1390 = vmatprep.subr.mxu0 %v497
    %1391 = vmatpush1.msra.mxu0 %v496
    %1392 = vmatprep.subr.mxu0 %v500
    %1393 = vmatpush1.msra.mxu0 %v499
    %1394 = vmatprep.subr.mxu0 %v503
    %1395 = vmatpush1.msra.mxu0 %v502
    %1396 = vmatprep.subr.mxu0 %v506
    %1397 = vmatpush1.msra.mxu0 %v505
    %1398 = vmatprep.subr.mxu0 %v509
    %1399 = vmatpush1.msra.mxu0 %v508
    %1400 = vmatprep.subr.mxu0 %v512
    %1401 = vmatpush1.msra.mxu0 %v511
    %1402 = vmatprep.subr.mxu0 %v515
    %1403 = vmatpush1.msra.mxu0 %v514
    %1404 = vmatprep.subr.mxu0 0.0
    %1405 = vmatpush1.msra.mxu0 0.0
    %1406 = vmatprep.subr.mxu0 0.0
    %1407 = vmatpush1.msra.mxu0 0.0
    %1408 = vmatprep.subr.mxu0 0.0
    %1409 = vmatpush1.msra.mxu0 0.0
    %1410 = vmatprep.subr.mxu0 0.0
    %1411 = vmatpush1.msra.mxu0 0.0
    %1412 = vmatprep.subr.mxu0 0.0
    %1413 = vmatpush1.msra.mxu0 0.0
    %1414 = vmatprep.subr.mxu0 0.0
    %1415 = vmatpush1.msra.mxu0 0.0
    %1416 = vmatprep.subr.mxu0 0.0
    %1417 = vmatpush1.msra.mxu0 0.0
    %1418 = vmatprep.subr.mxu0 0.0
    %1419 = vmatpush1.msra.mxu0 0.0
    %1420 = vmatprep.subr.mxu0 0.0
    %1421 = vmatpush1.msra.mxu0 0.0
    %1422 = vmatprep.subr.mxu0 0.0
    %1423 = vmatpush1.msra.mxu0 0.0
    %1424 = vmatprep.subr.mxu0 0.0
    %1425 = vmatpush1.msra.mxu0 0.0
    %1426 = vmatprep.subr.mxu0 0.0
    %1427 = vmatpush1.msra.mxu0 0.0
    %1428 = vmatprep.subr.mxu0 0.0
    %1429 = vmatpush1.msra.mxu0 0.0
    %1430 = vmatprep.subr.mxu0 0.0
    %1431 = vmatpush1.msra.mxu0 0.0
    %1432 = vmatprep.subr.mxu0 0.0
    %1433 = vmatpush1.msra.mxu0 0.0
    %1434 = vmatprep.subr.mxu0 0.0
    %1435 = vmatpush1.msra.mxu0 0.0
    %1436 = vmatprep.mubr.f32.mxu0 0.0
    %1437 = vmatmul.mubr.f32.gmra.mrb[0].mxu0 %v1366
    %v1438 = vpop.f32.mrb[0].mxu0
    %v1439 = vadd.f32 %v525, %v1438
    %v1440 = vpop.f32.mrb[0].mxu0
    %v1441 = vadd.f32 %v529, %v1440
    %1442 = vdwg.mxu0
    %1443 = vmatprep.subr.mxu0 0.0
    %1444 = vmatpush1.msra.mxu0 %v471
    %1445 = vmatprep.subr.mxu0 0.0
    %1446 = vmatpush1.msra.mxu0 %v474
    %1447 = vmatprep.subr.mxu0 0.0
    %1448 = vmatpush1.msra.mxu0 %v477
    %1449 = vmatprep.subr.mxu0 0.0
    %1450 = vmatpush1.msra.mxu0 %v480
    %1451 = vmatprep.subr.mxu0 0.0
    %1452 = vmatpush1.msra.mxu0 %v483
    %1453 = vmatprep.subr.mxu0 0.0
    %1454 = vmatpush1.msra.mxu0 %v486
    %1455 = vmatprep.subr.mxu0 0.0
    %1456 = vmatpush1.msra.mxu0 %v489
    %1457 = vmatprep.subr.mxu0 0.0
    %1458 = vmatpush1.msra.mxu0 %v492
    %1459 = vmatprep.subr.mxu0 0.0
    %1460 = vmatpush1.msra.mxu0 %v495
    %1461 = vmatprep.subr.mxu0 0.0
    %1462 = vmatpush1.msra.mxu0 %v498
    %1463 = vmatprep.subr.mxu0 0.0
    %1464 = vmatpush1.msra.mxu0 %v501
    %1465 = vmatprep.subr.mxu0 0.0
    %1466 = vmatpush1.msra.mxu0 %v504
    %1467 = vmatprep.subr.mxu0 0.0
    %1468 = vmatpush1.msra.mxu0 %v507
    %1469 = vmatprep.subr.mxu0 0.0
    %1470 = vmatpush1.msra.mxu0 %v510
    %1471 = vmatprep.subr.mxu0 0.0
    %1472 = vmatpush1.msra.mxu0 %v513
    %1473 = vmatprep.subr.mxu0 0.0
    %1474 = vmatpush1.msra.mxu0 %v516
    %1475 = vmatprep.subr.mxu0 0.0
    %1476 = vmatpush1.msra.mxu0 0.0
    %1477 = vmatprep.subr.mxu0 0.0
    %1478 = vmatpush1.msra.mxu0 0.0
    %1479 = vmatprep.subr.mxu0 0.0
    %1480 = vmatpush1.msra.mxu0 0.0
    %1481 = vmatprep.subr.mxu0 0.0
    %1482 = vmatpush1.msra.mxu0 0.0
    %1483 = vmatprep.subr.mxu0 0.0
    %1484 = vmatpush1.msra.mxu0 0.0
    %1485 = vmatprep.subr.mxu0 0.0
    %1486 = vmatpush1.msra.mxu0 0.0
    %1487 = vmatprep.subr.mxu0 0.0
    %1488 = vmatpush1.msra.mxu0 0.0
    %1489 = vmatprep.subr.mxu0 0.0
    %1490 = vmatpush1.msra.mxu0 0.0
    %1491 = vmatprep.subr.mxu0 0.0
    %1492 = vmatpush1.msra.mxu0 0.0
    %1493 = vmatprep.subr.mxu0 0.0
    %1494 = vmatpush1.msra.mxu0 0.0
    %1495 = vmatprep.subr.mxu0 0.0
    %1496 = vmatpush1.msra.mxu0 0.0
    %1497 = vmatprep.subr.mxu0 0.0
    %1498 = vmatpush1.msra.mxu0 0.0
    %1499 = vmatprep.subr.mxu0 0.0
    %1500 = vmatpush1.msra.mxu0 0.0
    %1501 = vmatprep.subr.mxu0 0.0
    %1502 = vmatpush1.msra.mxu0 0.0
    %1503 = vmatprep.subr.mxu0 0.0
    %1504 = vmatpush1.msra.mxu0 0.0
    %1505 = vmatprep.subr.mxu0 0.0
    %1506 = vmatpush1.msra.mxu0 0.0
    %1507 = vmatprep.mubr.f32.mxu0 0.0
    %1508 = vmatmul.mubr.f32.gmra.mrb[0].mxu0 %v1366
    %v1509 = vpop.f32.mrb[0].mxu0
    %v1510 = vadd.f32 %v533, %v1509
    %v1511 = vpop.f32.mrb[0].mxu0
    %1512 = vdwg.mxu0
    %v1513 = vadd.f32 %v1369, %v1439
    %v1514 = vxor.u32 %v1513, 2147483648
    %v1515 = vmul.f32 %v1514, 1.442695
    %v1516 = vpow.pop %v1515
    %v1517 = vadd.f32 %v1516, 1.0
    %v1518 = vrcp.pop %v1517
    %v1519 = vmul.f32 1.0, %v1518
    %v1520 = vadd.f32 %v1370, %v1441
    %v1521 = vxor.u32 %v1520, 2147483648
    %v1522 = vmul.f32 %v1521, 1.442695
    %v1523 = vpow.pop %v1522
    %v1524 = vadd.f32 %v1523, 1.0
    %v1525 = vrcp.pop %v1524
    %v1526 = vmul.f32 1.0, %v1525
    %v1527 = vmul.f32 %v1519, %v1510
    %v1528 = vadd.f32 %v1371, %v1527
    %v1529 = vtanh.pop %v1528
    %v1530 = vsub.f32 1.0, %v1526
    %v1531 = vmul.f32 %v1530, %v1529
    %v1532 = vmul.f32 %v1526, %v1366
    %v1533 = vadd.f32 %v1531, %v1532
    %1534 = vst [vmem:[#allocation2 + $0x28] sm:$0xff] %v1533
    %1535 = vst [vmem:[#allocation3 + $0x10] sm:$0xff] %v1533
    %v1536 = vsel %vm174, %v354, %v324
    %v1537 = vsel %vm175, %v356, %v326
    %v1538 = vsel %vm176, %v461, %v436
    %1539 = vmatprep.subr.mxu0 %v470
    %1540 = vmatpush1.msra.mxu0 %v469
    %1541 = vmatprep.subr.mxu0 %v473
    %1542 = vmatpush1.msra.mxu0 %v472
    %1543 = vmatprep.subr.mxu0 %v476
    %1544 = vmatpush1.msra.mxu0 %v475
    %1545 = vmatprep.subr.mxu0 %v479
    %1546 = vmatpush1.msra.mxu0 %v478
    %1547 = vmatprep.subr.mxu0 %v482
    %1548 = vmatpush1.msra.mxu0 %v481
    %1549 = vmatprep.subr.mxu0 %v485
    %1550 = vmatpush1.msra.mxu0 %v484
    %1551 = vmatprep.subr.mxu0 %v488
    %1552 = vmatpush1.msra.mxu0 %v487
    %1553 = vmatprep.subr.mxu0 %v491
    %1554 = vmatpush1.msra.mxu0 %v490
    %1555 = vmatprep.subr.mxu0 %v494
    %1556 = vmatpush1.msra.mxu0 %v493
    %1557 = vmatprep.subr.mxu0 %v497
    %1558 = vmatpush1.msra.mxu0 %v496
    %1559 = vmatprep.subr.mxu0 %v500
    %1560 = vmatpush1.msra.mxu0 %v499
    %1561 = vmatprep.subr.mxu0 %v503
    %1562 = vmatpush1.msra.mxu0 %v502
    %1563 = vmatprep.subr.mxu0 %v506
    %1564 = vmatpush1.msra.mxu0 %v505
    %1565 = vmatprep.subr.mxu0 %v509
    %1566 = vmatpush1.msra.mxu0 %v508
    %1567 = vmatprep.subr.mxu0 %v512
    %1568 = vmatpush1.msra.mxu0 %v511
    %1569 = vmatprep.subr.mxu0 %v515
    %1570 = vmatpush1.msra.mxu0 %v514
    %1571 = vmatprep.subr.mxu0 0.0
    %1572 = vmatpush1.msra.mxu0 0.0
    %1573 = vmatprep.subr.mxu0 0.0
    %1574 = vmatpush1.msra.mxu0 0.0
    %1575 = vmatprep.subr.mxu0 0.0
    %1576 = vmatpush1.msra.mxu0 0.0
    %1577 = vmatprep.subr.mxu0 0.0
    %1578 = vmatpush1.msra.mxu0 0.0
    %1579 = vmatprep.subr.mxu0 0.0
    %1580 = vmatpush1.msra.mxu0 0.0
    %1581 = vmatprep.subr.mxu0 0.0
    %1582 = vmatpush1.msra.mxu0 0.0
    %1583 = vmatprep.subr.mxu0 0.0
    %1584 = vmatpush1.msra.mxu0 0.0
    %1585 = vmatprep.subr.mxu0 0.0
    %1586 = vmatpush1.msra.mxu0 0.0
    %1587 = vmatprep.subr.mxu0 0.0
    %1588 = vmatpush1.msra.mxu0 0.0
    %1589 = vmatprep.subr.mxu0 0.0
    %1590 = vmatpush1.msra.mxu0 0.0
    %1591 = vmatprep.subr.mxu0 0.0
    %1592 = vmatpush1.msra.mxu0 0.0
    %1593 = vmatprep.subr.mxu0 0.0
    %1594 = vmatpush1.msra.mxu0 0.0
    %1595 = vmatprep.subr.mxu0 0.0
    %1596 = vmatpush1.msra.mxu0 0.0
    %1597 = vmatprep.subr.mxu0 0.0
    %1598 = vmatpush1.msra.mxu0 0.0
    %1599 = vmatprep.subr.mxu0 0.0
    %1600 = vmatpush1.msra.mxu0 0.0
    %1601 = vmatprep.subr.mxu0 0.0
    %1602 = vmatpush1.msra.mxu0 0.0
    %1603 = vmatprep.mubr.f32.mxu0 0.0
    %1604 = vmatmul.mubr.f32.gmra.mrb[0].mxu0 %v1533
    %v1605 = vpop.f32.mrb[0].mxu0
    %v1606 = vadd.f32 %v525, %v1605
    %v1607 = vpop.f32.mrb[0].mxu0
    %v1608 = vadd.f32 %v529, %v1607
    %1609 = vdwg.mxu0
    %1610 = vmatprep.subr.mxu0 0.0
    %1611 = vmatpush1.msra.mxu0 %v471
    %1612 = vmatprep.subr.mxu0 0.0
    %1613 = vmatpush1.msra.mxu0 %v474
    %1614 = vmatprep.subr.mxu0 0.0
    %1615 = vmatpush1.msra.mxu0 %v477
    %1616 = vmatprep.subr.mxu0 0.0
    %1617 = vmatpush1.msra.mxu0 %v480
    %1618 = vmatprep.subr.mxu0 0.0
    %1619 = vmatpush1.msra.mxu0 %v483
    %1620 = vmatprep.subr.mxu0 0.0
    %1621 = vmatpush1.msra.mxu0 %v486
    %1622 = vmatprep.subr.mxu0 0.0
    %1623 = vmatpush1.msra.mxu0 %v489
    %1624 = vmatprep.subr.mxu0 0.0
    %1625 = vmatpush1.msra.mxu0 %v492
    %1626 = vmatprep.subr.mxu0 0.0
    %1627 = vmatpush1.msra.mxu0 %v495
    %1628 = vmatprep.subr.mxu0 0.0
    %1629 = vmatpush1.msra.mxu0 %v498
    %1630 = vmatprep.subr.mxu0 0.0
    %1631 = vmatpush1.msra.mxu0 %v501
    %1632 = vmatprep.subr.mxu0 0.0
    %1633 = vmatpush1.msra.mxu0 %v504
    %1634 = vmatprep.subr.mxu0 0.0
    %1635 = vmatpush1.msra.mxu0 %v507
    %1636 = vmatprep.subr.mxu0 0.0
    %1637 = vmatpush1.msra.mxu0 %v510
    %1638 = vmatprep.subr.mxu0 0.0
    %1639 = vmatpush1.msra.mxu0 %v513
    %1640 = vmatprep.subr.mxu0 0.0
    %1641 = vmatpush1.msra.mxu0 %v516
    %1642 = vmatprep.subr.mxu0 0.0
    %1643 = vmatpush1.msra.mxu0 0.0
    %1644 = vmatprep.subr.mxu0 0.0
    %1645 = vmatpush1.msra.mxu0 0.0
    %1646 = vmatprep.subr.mxu0 0.0
    %1647 = vmatpush1.msra.mxu0 0.0
    %1648 = vmatprep.subr.mxu0 0.0
    %1649 = vmatpush1.msra.mxu0 0.0
    %1650 = vmatprep.subr.mxu0 0.0
    %1651 = vmatpush1.msra.mxu0 0.0
    %1652 = vmatprep.subr.mxu0 0.0
    %1653 = vmatpush1.msra.mxu0 0.0
    %1654 = vmatprep.subr.mxu0 0.0
    %1655 = vmatpush1.msra.mxu0 0.0
    %1656 = vmatprep.subr.mxu0 0.0
    %1657 = vmatpush1.msra.mxu0 0.0
    %1658 = vmatprep.subr.mxu0 0.0
    %1659 = vmatpush1.msra.mxu0 0.0
    %1660 = vmatprep.subr.mxu0 0.0
    %1661 = vmatpush1.msra.mxu0 0.0
    %1662 = vmatprep.subr.mxu0 0.0
    %1663 = vmatpush1.msra.mxu0 0.0
    %1664 = vmatprep.subr.mxu0 0.0
    %1665 = vmatpush1.msra.mxu0 0.0
    %1666 = vmatprep.subr.mxu0 0.0
    %1667 = vmatpush1.msra.mxu0 0.0
    %1668 = vmatprep.subr.mxu0 0.0
    %1669 = vmatpush1.msra.mxu0 0.0
    %1670 = vmatprep.subr.mxu0 0.0
    %1671 = vmatpush1.msra.mxu0 0.0
    %1672 = vmatprep.subr.mxu0 0.0
    %1673 = vmatpush1.msra.mxu0 0.0
    %1674 = vmatprep.mubr.f32.mxu0 0.0
    %1675 = vmatmul.mubr.f32.gmra.mrb[0].mxu0 %v1533
    %v1676 = vpop.f32.mrb[0].mxu0
    %v1677 = vadd.f32 %v533, %v1676
    %v1678 = vpop.f32.mrb[0].mxu0
    %1679 = vdwg.mxu0
    %v1680 = vadd.f32 %v1536, %v1606
    %v1681 = vxor.u32 %v1680, 2147483648
    %v1682 = vmul.f32 %v1681, 1.442695
    %v1683 = vpow.pop %v1682
    %v1684 = vadd.f32 %v1683, 1.0
    %v1685 = vrcp.pop %v1684
    %v1686 = vmul.f32 1.0, %v1685
    %v1687 = vadd.f32 %v1537, %v1608
    %v1688 = vxor.u32 %v1687, 2147483648
    %v1689 = vmul.f32 %v1688, 1.442695
    %v1690 = vpow.pop %v1689
    %v1691 = vadd.f32 %v1690, 1.0
    %v1692 = vrcp.pop %v1691
    %v1693 = vmul.f32 1.0, %v1692
    %v1694 = vmul.f32 %v1686, %v1677
    %v1695 = vadd.f32 %v1538, %v1694
    %v1696 = vtanh.pop %v1695
    %v1697 = vsub.f32 1.0, %v1693
    %v1698 = vmul.f32 %v1697, %v1696
    %v1699 = vmul.f32 %v1693, %v1533
    %v1700 = vadd.f32 %v1698, %v1699
    %1701 = vst [vmem:[#allocation2 + $0x30] sm:$0xff] %v1700
    %1702 = vst [vmem:[#allocation3 + $0x8] sm:$0xff] %v1700
    %v1703 = vsel %vm174, %v360, %v318
    %v1704 = vsel %vm175, %v362, %v320
    %v1705 = vsel %vm176, %v466, %v431
    %1706 = vmatprep.subr.mxu0 %v470
    %1707 = vmatpush1.msra.mxu0 %v469
    %1708 = vmatprep.subr.mxu0 %v473
    %1709 = vmatpush1.msra.mxu0 %v472
    %1710 = vmatprep.subr.mxu0 %v476
    %1711 = vmatpush1.msra.mxu0 %v475
    %1712 = vmatprep.subr.mxu0 %v479
    %1713 = vmatpush1.msra.mxu0 %v478
    %1714 = vmatprep.subr.mxu0 %v482
    %1715 = vmatpush1.msra.mxu0 %v481
    %1716 = vmatprep.subr.mxu0 %v485
    %1717 = vmatpush1.msra.mxu0 %v484
    %1718 = vmatprep.subr.mxu0 %v488
    %1719 = vmatpush1.msra.mxu0 %v487
    %1720 = vmatprep.subr.mxu0 %v491
    %1721 = vmatpush1.msra.mxu0 %v490
    %1722 = vmatprep.subr.mxu0 %v494
    %1723 = vmatpush1.msra.mxu0 %v493
    %1724 = vmatprep.subr.mxu0 %v497
    %1725 = vmatpush1.msra.mxu0 %v496
    %1726 = vmatprep.subr.mxu0 %v500
    %1727 = vmatpush1.msra.mxu0 %v499
    %1728 = vmatprep.subr.mxu0 %v503
    %1729 = vmatpush1.msra.mxu0 %v502
    %1730 = vmatprep.subr.mxu0 %v506
    %1731 = vmatpush1.msra.mxu0 %v505
    %1732 = vmatprep.subr.mxu0 %v509
    %1733 = vmatpush1.msra.mxu0 %v508
    %1734 = vmatprep.subr.mxu0 %v512
    %1735 = vmatpush1.msra.mxu0 %v511
    %1736 = vmatprep.subr.mxu0 %v515
    %1737 = vmatpush1.msra.mxu0 %v514
    %1738 = vmatprep.subr.mxu0 0.0
    %1739 = vmatpush1.msra.mxu0 0.0
    %1740 = vmatprep.subr.mxu0 0.0
    %1741 = vmatpush1.msra.mxu0 0.0
    %1742 = vmatprep.subr.mxu0 0.0
    %1743 = vmatpush1.msra.mxu0 0.0
    %1744 = vmatprep.subr.mxu0 0.0
    %1745 = vmatpush1.msra.mxu0 0.0
    %1746 = vmatprep.subr.mxu0 0.0
    %1747 = vmatpush1.msra.mxu0 0.0
    %1748 = vmatprep.subr.mxu0 0.0
    %1749 = vmatpush1.msra.mxu0 0.0
    %1750 = vmatprep.subr.mxu0 0.0
    %1751 = vmatpush1.msra.mxu0 0.0
    %1752 = vmatprep.subr.mxu0 0.0
    %1753 = vmatpush1.msra.mxu0 0.0
    %1754 = vmatprep.subr.mxu0 0.0
    %1755 = vmatpush1.msra.mxu0 0.0
    %1756 = vmatprep.subr.mxu0 0.0
    %1757 = vmatpush1.msra.mxu0 0.0
    %1758 = vmatprep.subr.mxu0 0.0
    %1759 = vmatpush1.msra.mxu0 0.0
    %1760 = vmatprep.subr.mxu0 0.0
    %1761 = vmatpush1.msra.mxu0 0.0
    %1762 = vmatprep.subr.mxu0 0.0
    %1763 = vmatpush1.msra.mxu0 0.0
    %1764 = vmatprep.subr.mxu0 0.0
    %1765 = vmatpush1.msra.mxu0 0.0
    %1766 = vmatprep.subr.mxu0 0.0
    %1767 = vmatpush1.msra.mxu0 0.0
    %1768 = vmatprep.subr.mxu0 0.0
    %1769 = vmatpush1.msra.mxu0 0.0
    %1770 = vmatprep.mubr.f32.mxu0 0.0
    %1771 = vmatmul.mubr.f32.gmra.mrb[0].mxu0 %v1700
    %v1772 = vpop.f32.mrb[0].mxu0
    %v1773 = vadd.f32 %v525, %v1772
    %v1774 = vpop.f32.mrb[0].mxu0
    %v1775 = vadd.f32 %v529, %v1774
    %1776 = vdwg.mxu0
    %1777 = vmatprep.subr.mxu0 0.0
    %1778 = vmatpush1.msra.mxu0 %v471
    %1779 = vmatprep.subr.mxu0 0.0
    %1780 = vmatpush1.msra.mxu0 %v474
    %1781 = vmatprep.subr.mxu0 0.0
    %1782 = vmatpush1.msra.mxu0 %v477
    %1783 = vmatprep.subr.mxu0 0.0
    %1784 = vmatpush1.msra.mxu0 %v480
    %1785 = vmatprep.subr.mxu0 0.0
    %1786 = vmatpush1.msra.mxu0 %v483
    %1787 = vmatprep.subr.mxu0 0.0
    %1788 = vmatpush1.msra.mxu0 %v486
    %1789 = vmatprep.subr.mxu0 0.0
    %1790 = vmatpush1.msra.mxu0 %v489
    %1791 = vmatprep.subr.mxu0 0.0
    %1792 = vmatpush1.msra.mxu0 %v492
    %1793 = vmatprep.subr.mxu0 0.0
    %1794 = vmatpush1.msra.mxu0 %v495
    %1795 = vmatprep.subr.mxu0 0.0
    %1796 = vmatpush1.msra.mxu0 %v498
    %1797 = vmatprep.subr.mxu0 0.0
    %1798 = vmatpush1.msra.mxu0 %v501
    %1799 = vmatprep.subr.mxu0 0.0
    %1800 = vmatpush1.msra.mxu0 %v504
    %1801 = vmatprep.subr.mxu0 0.0
    %1802 = vmatpush1.msra.mxu0 %v507
    %1803 = vmatprep.subr.mxu0 0.0
    %1804 = vmatpush1.msra.mxu0 %v510
    %1805 = vmatprep.subr.mxu0 0.0
    %1806 = vmatpush1.msra.mxu0 %v513
    %1807 = vmatprep.subr.mxu0 0.0
    %1808 = vmatpush1.msra.mxu0 %v516
    %1809 = vmatprep.subr.mxu0 0.0
    %1810 = vmatpush1.msra.mxu0 0.0
    %1811 = vmatprep.subr.mxu0 0.0
    %1812 = vmatpush1.msra.mxu0 0.0
    %1813 = vmatprep.subr.mxu0 0.0
    %1814 = vmatpush1.msra.mxu0 0.0
    %1815 = vmatprep.subr.mxu0 0.0
    %1816 = vmatpush1.msra.mxu0 0.0
    %1817 = vmatprep.subr.mxu0 0.0
    %1818 = vmatpush1.msra.mxu0 0.0
    %1819 = vmatprep.subr.mxu0 0.0
    %1820 = vmatpush1.msra.mxu0 0.0
    %1821 = vmatprep.subr.mxu0 0.0
    %1822 = vmatpush1.msra.mxu0 0.0
    %1823 = vmatprep.subr.mxu0 0.0
    %1824 = vmatpush1.msra.mxu0 0.0
    %1825 = vmatprep.subr.mxu0 0.0
    %1826 = vmatpush1.msra.mxu0 0.0
    %1827 = vmatprep.subr.mxu0 0.0
    %1828 = vmatpush1.msra.mxu0 0.0
    %1829 = vmatprep.subr.mxu0 0.0
    %1830 = vmatpush1.msra.mxu0 0.0
    %1831 = vmatprep.subr.mxu0 0.0
    %1832 = vmatpush1.msra.mxu0 0.0
    %1833 = vmatprep.subr.mxu0 0.0
    %1834 = vmatpush1.msra.mxu0 0.0
    %1835 = vmatprep.subr.mxu0 0.0
    %1836 = vmatpush1.msra.mxu0 0.0
    %1837 = vmatprep.subr.mxu0 0.0
    %1838 = vmatpush1.msra.mxu0 0.0
    %1839 = vmatprep.subr.mxu0 0.0
    %1840 = vmatpush1.msra.mxu0 0.0
    %1841 = vmatprep.mubr.f32.mxu0 0.0
    %1842 = vmatmul.mubr.f32.gmra.mrb[0].mxu0 %v1700
    %v1843 = vpop.f32.mrb[0].mxu0
    %v1844 = vadd.f32 %v533, %v1843
    %v1845 = vpop.f32.mrb[0].mxu0
    %1846 = vdwg.mxu0
    %v1847 = vadd.f32 %v1703, %v1773
    %v1848 = vxor.u32 %v1847, 2147483648
    %v1849 = vmul.f32 %v1848, 1.442695
    %v1850 = vpow.pop %v1849
    %v1851 = vadd.f32 %v1850, 1.0
    %v1852 = vrcp.pop %v1851
    %v1853 = vmul.f32 1.0, %v1852
    %v1854 = vadd.f32 %v1704, %v1775
    %v1855 = vxor.u32 %v1854, 2147483648
    %v1856 = vmul.f32 %v1855, 1.442695
    %v1857 = vpow.pop %v1856
    %v1858 = vadd.f32 %v1857, 1.0
    %v1859 = vrcp.pop %v1858
    %v1860 = vmul.f32 1.0, %v1859
    %v1861 = vmul.f32 %v1853, %v1844
    %v1862 = vadd.f32 %v1705, %v1861
    %v1863 = vtanh.pop %v1862
    %v1864 = vsub.f32 1.0, %v1860
    %v1865 = vmul.f32 %v1864, %v1863
    %v1866 = vmul.f32 %v1860, %v1700
    %v1867 = vadd.f32 %v1865, %v1866
    %1868 = vst [vmem:[#allocation2 + $0x38] sm:$0xff] %v1867
    %1869 = vst [vmem:[#allocation3] sm:$0xff] %v1867
    %v1870 = vld [vmem:[#allocation2] sm:$0xff]
    %v1871 = vld [vmem:[#allocation2 + $0x8] sm:$0xff]
    %v1872 = vld [vmem:[#allocation2 + $0x10] sm:$0xff]
    %v1873 = vld [vmem:[#allocation2 + $0x18] sm:$0xff]
    %v1874 = vld [vmem:[#allocation2 + $0x20] sm:$0xff]
    %v1875 = vld [vmem:[#allocation2 + $0x28] sm:$0xff]
    %v1876 = vld [vmem:[#allocation2 + $0x30] sm:$0xff]
    %v1877 = vld [vmem:[#allocation2 + $0x38] sm:$0xff]
    %v1878 = vld [vmem:[#allocation9] sm:$0xff]
    %v1879 = vld [vmem:[#allocation9 + $0x8] sm:$0xff]
    %v1880 = vld [vmem:[#allocation9 + $0x10] sm:$0xff]
    %v1881 = vld [vmem:[#allocation9 + $0x18] sm:$0xff]
    %v1882 = vld [vmem:[#allocation9 + $0x20] sm:$0xff]
    %v1883 = vld [vmem:[#allocation9 + $0x28] sm:$0xff]
    %v1884 = vld [vmem:[#allocation9 + $0x30] sm:$0xff]
    %v1885 = vld [vmem:[#allocation9 + $0x38] sm:$0xff]
    %v1886 = vld [vmem:[#allocation9 + $0x40] sm:$0xff]
    %v1887 = vld [vmem:[#allocation9 + $0x48] sm:$0xff]
    %v1888 = vld [vmem:[#allocation9 + $0x50] sm:$0xff]
    %v1889 = vld [vmem:[#allocation9 + $0x58] sm:$0xff]
    %v1890 = vld [vmem:[#allocation9 + $0x60] sm:$0xff]
    %v1891 = vld [vmem:[#allocation9 + $0x68] sm:$0xff]
    %v1892 = vld [vmem:[#allocation9 + $0x70] sm:$0xff]
    %v1893 = vld [vmem:[#allocation9 + $0x78] sm:$0xff]
    %v1894 = vld [vmem:[#allocation9 + $0x80] sm:$0xff]
    %v1895 = vld [vmem:[#allocation9 + $0x88] sm:$0xff]
    %v1896 = vld [vmem:[#allocation9 + $0x90] sm:$0xff]
    %v1897 = vld [vmem:[#allocation9 + $0x98] sm:$0xff]
    %v1898 = vld [vmem:[#allocation9 + $0xa0] sm:$0xff]
    %v1899 = vld [vmem:[#allocation9 + $0xa8] sm:$0xff]
    %v1900 = vld [vmem:[#allocation9 + $0xb0] sm:$0xff]
    %v1901 = vld [vmem:[#allocation9 + $0xb8] sm:$0xff]
    %v1902 = vld [vmem:[#allocation9 + $0xc0] sm:$0xff]
    %v1903 = vld [vmem:[#allocation9 + $0xc8] sm:$0xff]
    %v1904 = vld [vmem:[#allocation9 + $0xd0] sm:$0xff]
    %v1905 = vld [vmem:[#allocation9 + $0xd8] sm:$0xff]
    %v1906 = vld [vmem:[#allocation9 + $0xe0] sm:$0xff]
    %v1907 = vld [vmem:[#allocation9 + $0xe8] sm:$0xff]
    %v1908 = vld [vmem:[#allocation9 + $0xf0] sm:$0xff]
    %v1909 = vld [vmem:[#allocation9 + $0xf8] sm:$0xff]
    %v1910 = vld [vmem:[#allocation9 + $0x100] sm:$0xff]
    %v1911 = vld [vmem:[#allocation9 + $0x108] sm:$0xff]
    %v1912 = vld [vmem:[#allocation9 + $0x110] sm:$0xff]
    %v1913 = vld [vmem:[#allocation9 + $0x118] sm:$0xff]
    %v1914 = vld [vmem:[#allocation9 + $0x120] sm:$0xff]
    %v1915 = vld [vmem:[#allocation9 + $0x128] sm:$0xff]
    %v1916 = vld [vmem:[#allocation9 + $0x130] sm:$0xff]
    %v1917 = vld [vmem:[#allocation9 + $0x138] sm:$0xff]
    %v1918 = vld [vmem:[#allocation9 + $0x140] sm:$0xff]
    %v1919 = vld [vmem:[#allocation9 + $0x148] sm:$0xff]
    %v1920 = vld [vmem:[#allocation9 + $0x150] sm:$0xff]
    %v1921 = vld [vmem:[#allocation9 + $0x158] sm:$0xff]
    %v1922 = vld [vmem:[#allocation9 + $0x160] sm:$0xff]
    %v1923 = vld [vmem:[#allocation9 + $0x168] sm:$0xff]
    %v1924 = vld [vmem:[#allocation9 + $0x170] sm:$0xff]
    %v1925 = vld [vmem:[#allocation9 + $0x178] sm:$0xff]
    %v1926 = vld [vmem:[#allocation3] sm:$0xff]
    %v1927 = vld [vmem:[#allocation3 + $0x8] sm:$0xff]
    %v1928 = vld [vmem:[#allocation3 + $0x10] sm:$0xff]
    %v1929 = vld [vmem:[#allocation3 + $0x18] sm:$0xff]
    %v1930 = vld [vmem:[#allocation3 + $0x20] sm:$0xff]
    %v1931 = vld [vmem:[#allocation3 + $0x28] sm:$0xff]
    %v1932 = vld [vmem:[#allocation3 + $0x30] sm:$0xff]
    %v1933 = vld [vmem:[#allocation3 + $0x38] sm:$0xff]
    %v1934 = vld [vmem:[#allocation11] sm:$0xff]
    %v1935 = vld [vmem:[#allocation11 + $0x8] sm:$0xff]
    %v1936 = vld [vmem:[#allocation11 + $0x10] sm:$0xff]
    %v1937 = vld [vmem:[#allocation11 + $0x18] sm:$0xff]
    %v1938 = vld [vmem:[#allocation11 + $0x20] sm:$0xff]
    %v1939 = vld [vmem:[#allocation11 + $0x28] sm:$0xff]
    %v1940 = vld [vmem:[#allocation11 + $0x30] sm:$0xff]
    %v1941 = vld [vmem:[#allocation11 + $0x38] sm:$0xff]
    %v1942 = vld [vmem:[#allocation11 + $0x40] sm:$0xff]
    %v1943 = vld [vmem:[#allocation11 + $0x48] sm:$0xff]
    %v1944 = vld [vmem:[#allocation11 + $0x50] sm:$0xff]
    %v1945 = vld [vmem:[#allocation11 + $0x58] sm:$0xff]
    %v1946 = vld [vmem:[#allocation11 + $0x60] sm:$0xff]
    %v1947 = vld [vmem:[#allocation11 + $0x68] sm:$0xff]
    %v1948 = vld [vmem:[#allocation11 + $0x70] sm:$0xff]
    %v1949 = vld [vmem:[#allocation11 + $0x78] sm:$0xff]
    %v1950 = vld [vmem:[#allocation11 + $0x80] sm:$0xff]
    %v1951 = vld [vmem:[#allocation11 + $0x88] sm:$0xff]
    %v1952 = vld [vmem:[#allocation11 + $0x90] sm:$0xff]
    %v1953 = vld [vmem:[#allocation11 + $0x98] sm:$0xff]
    %v1954 = vld [vmem:[#allocation11 + $0xa0] sm:$0xff]
    %v1955 = vld [vmem:[#allocation11 + $0xa8] sm:$0xff]
    %v1956 = vld [vmem:[#allocation11 + $0xb0] sm:$0xff]
    %v1957 = vld [vmem:[#allocation11 + $0xb8] sm:$0xff]
    %v1958 = vld [vmem:[#allocation11 + $0xc0] sm:$0xff]
    %v1959 = vld [vmem:[#allocation11 + $0xc8] sm:$0xff]
    %v1960 = vld [vmem:[#allocation11 + $0xd0] sm:$0xff]
    %v1961 = vld [vmem:[#allocation11 + $0xd8] sm:$0xff]
    %v1962 = vld [vmem:[#allocation11 + $0xe0] sm:$0xff]
    %v1963 = vld [vmem:[#allocation11 + $0xe8] sm:$0xff]
    %v1964 = vld [vmem:[#allocation11 + $0xf0] sm:$0xff]
    %v1965 = vld [vmem:[#allocation11 + $0xf8] sm:$0xff]
    %v1966 = vld [vmem:[#allocation11 + $0x100] sm:$0xff]
    %v1967 = vld [vmem:[#allocation11 + $0x108] sm:$0xff]
    %v1968 = vld [vmem:[#allocation11 + $0x110] sm:$0xff]
    %v1969 = vld [vmem:[#allocation11 + $0x118] sm:$0xff]
    %v1970 = vld [vmem:[#allocation11 + $0x120] sm:$0xff]
    %v1971 = vld [vmem:[#allocation11 + $0x128] sm:$0xff]
    %v1972 = vld [vmem:[#allocation11 + $0x130] sm:$0xff]
    %v1973 = vld [vmem:[#allocation11 + $0x138] sm:$0xff]
    %v1974 = vld [vmem:[#allocation11 + $0x140] sm:$0xff]
    %v1975 = vld [vmem:[#allocation11 + $0x148] sm:$0xff]
    %v1976 = vld [vmem:[#allocation11 + $0x150] sm:$0xff]
    %v1977 = vld [vmem:[#allocation11 + $0x158] sm:$0xff]
    %v1978 = vld [vmem:[#allocation11 + $0x160] sm:$0xff]
    %v1979 = vld [vmem:[#allocation11 + $0x168] sm:$0xff]
    %v1980 = vld [vmem:[#allocation11 + $0x170] sm:$0xff]
    %v1981 = vld [vmem:[#allocation11 + $0x178] sm:$0xff]
    %1982 = vmatprep.subr.mxu0 %v1935
    %1983 = vmatpush1.msra.mxu0 %v1934
    %1984 = vmatprep.subr.mxu0 %v1938
    %1985 = vmatpush1.msra.mxu0 %v1937
    %1986 = vmatprep.subr.mxu0 %v1941
    %1987 = vmatpush1.msra.mxu0 %v1940
    %1988 = vmatprep.subr.mxu0 %v1944
    %1989 = vmatpush1.msra.mxu0 %v1943
    %1990 = vmatprep.subr.mxu0 %v1947
    %1991 = vmatpush1.msra.mxu0 %v1946
    %1992 = vmatprep.subr.mxu0 %v1950
    %1993 = vmatpush1.msra.mxu0 %v1949
    %1994 = vmatprep.subr.mxu0 %v1953
    %1995 = vmatpush1.msra.mxu0 %v1952
    %1996 = vmatprep.subr.mxu0 %v1956
    %1997 = vmatpush1.msra.mxu0 %v1955
    %1998 = vmatprep.subr.mxu0 %v1959
    %1999 = vmatpush1.msra.mxu0 %v1958
    %2000 = vmatprep.subr.mxu0 %v1962
    %2001 = vmatpush1.msra.mxu0 %v1961
    %2002 = vmatprep.subr.mxu0 %v1965
    %2003 = vmatpush1.msra.mxu0 %v1964
    %2004 = vmatprep.subr.mxu0 %v1968
    %2005 = vmatpush1.msra.mxu0 %v1967
    %2006 = vmatprep.subr.mxu0 %v1971
    %2007 = vmatpush1.msra.mxu0 %v1970
    %2008 = vmatprep.subr.mxu0 %v1974
    %2009 = vmatpush1.msra.mxu0 %v1973
    %2010 = vmatprep.subr.mxu0 %v1977
    %2011 = vmatpush1.msra.mxu0 %v1976
    %2012 = vmatprep.subr.mxu0 %v1980
    %2013 = vmatpush1.msra.mxu0 %v1979
    %2014 = vmatprep.subr.mxu0 0.0
    %2015 = vmatpush1.msra.mxu0 0.0
    %2016 = vmatprep.subr.mxu0 0.0
    %2017 = vmatpush1.msra.mxu0 0.0
    %2018 = vmatprep.subr.mxu0 0.0
    %2019 = vmatpush1.msra.mxu0 0.0
    %2020 = vmatprep.subr.mxu0 0.0
    %2021 = vmatpush1.msra.mxu0 0.0
    %2022 = vmatprep.subr.mxu0 0.0
    %2023 = vmatpush1.msra.mxu0 0.0
    %2024 = vmatprep.subr.mxu0 0.0
    %2025 = vmatpush1.msra.mxu0 0.0
    %2026 = vmatprep.subr.mxu0 0.0
    %2027 = vmatpush1.msra.mxu0 0.0
    %2028 = vmatprep.subr.mxu0 0.0
    %2029 = vmatpush1.msra.mxu0 0.0
    %2030 = vmatprep.subr.mxu0 0.0
    %2031 = vmatpush1.msra.mxu0 0.0
    %2032 = vmatprep.subr.mxu0 0.0
    %2033 = vmatpush1.msra.mxu0 0.0
    %2034 = vmatprep.subr.mxu0 0.0
    %2035 = vmatpush1.msra.mxu0 0.0
    %2036 = vmatprep.subr.mxu0 0.0
    %2037 = vmatpush1.msra.mxu0 0.0
    %2038 = vmatprep.subr.mxu0 0.0
    %2039 = vmatpush1.msra.mxu0 0.0
    %2040 = vmatprep.subr.mxu0 0.0
    %2041 = vmatpush1.msra.mxu0 0.0
    %2042 = vmatprep.subr.mxu0 0.0
    %2043 = vmatpush1.msra.mxu0 0.0
    %2044 = vmatprep.subr.mxu0 0.0
    %2045 = vmatpush1.msra.mxu0 0.0
    %2046 = vmatprep.mubr.f32.mxu0 0.0
    %2047 = vmatmul.mubr.f32.gmra.mrb[0].mxu0 %v1926
    %v2048 = vpop.f32.mrb[0].mxu0
    %v2049 = vadd.f32 0.0, %v2048
    %v2050 = vpop.f32.mrb[0].mxu0
    %v2051 = vadd.f32 0.0, %v2050
    %2052 = vmatprep.mubr.f32.mxu0 0.0
    %2053 = vmatmul.mubr.f32.gmra.mrb[0].mxu0 %v1927
    %v2054 = vpop.f32.mrb[0].mxu0
    %v2055 = vadd.f32 0.0, %v2054
    %v2056 = vpop.f32.mrb[0].mxu0
    %v2057 = vadd.f32 0.0, %v2056
    %2058 = vmatprep.mubr.f32.mxu0 0.0
    %2059 = vmatmul.mubr.f32.gmra.mrb[0].mxu0 %v1928
    %v2060 = vpop.f32.mrb[0].mxu0
    %v2061 = vadd.f32 0.0, %v2060
    %v2062 = vpop.f32.mrb[0].mxu0
    %v2063 = vadd.f32 0.0, %v2062
    %2064 = vmatprep.mubr.f32.mxu0 0.0
    %2065 = vmatmul.mubr.f32.gmra.mrb[0].mxu0 %v1929
    %v2066 = vpop.f32.mrb[0].mxu0
    %v2067 = vadd.f32 0.0, %v2066
    %v2068 = vpop.f32.mrb[0].mxu0
    %v2069 = vadd.f32 0.0, %v2068
    %2070 = vmatprep.mubr.f32.mxu0 0.0
    %2071 = vmatmul.mubr.f32.gmra.mrb[0].mxu0 %v1930
    %v2072 = vpop.f32.mrb[0].mxu0
    %v2073 = vadd.f32 0.0, %v2072
    %v2074 = vpop.f32.mrb[0].mxu0
    %v2075 = vadd.f32 0.0, %v2074
    %2076 = vmatprep.mubr.f32.mxu0 0.0
    %2077 = vmatmul.mubr.f32.gmra.mrb[0].mxu0 %v1931
    %v2078 = vpop.f32.mrb[0].mxu0
    %v2079 = vadd.f32 0.0, %v2078
    %v2080 = vpop.f32.mrb[0].mxu0
    %v2081 = vadd.f32 0.0, %v2080
    %2082 = vmatprep.mubr.f32.mxu0 0.0
    %2083 = vmatmul.mubr.f32.gmra.mrb[0].mxu0 %v1932
    %v2084 = vpop.f32.mrb[0].mxu0
    %v2085 = vadd.f32 0.0, %v2084
    %v2086 = vpop.f32.mrb[0].mxu0
    %v2087 = vadd.f32 0.0, %v2086
    %2088 = vmatprep.mubr.f32.mxu0 0.0
    %2089 = vmatmul.mubr.f32.gmra.mrb[0].mxu0 %v1933
    %v2090 = vpop.f32.mrb[0].mxu0
    %v2091 = vadd.f32 0.0, %v2090
    %v2092 = vpop.f32.mrb[0].mxu0
    %v2093 = vadd.f32 0.0, %v2092
    %2094 = vdwg.mxu0
    %2095 = vmatprep.subr.mxu0 0.0
    %2096 = vmatpush1.msra.mxu0 %v1936
    %2097 = vmatprep.subr.mxu0 0.0
    %2098 = vmatpush1.msra.mxu0 %v1939
    %2099 = vmatprep.subr.mxu0 0.0
    %2100 = vmatpush1.msra.mxu0 %v1942
    %2101 = vmatprep.subr.mxu0 0.0
    %2102 = vmatpush1.msra.mxu0 %v1945
    %2103 = vmatprep.subr.mxu0 0.0
    %2104 = vmatpush1.msra.mxu0 %v1948
    %2105 = vmatprep.subr.mxu0 0.0
    %2106 = vmatpush1.msra.mxu0 %v1951
    %2107 = vmatprep.subr.mxu0 0.0
    %2108 = vmatpush1.msra.mxu0 %v1954
    %2109 = vmatprep.subr.mxu0 0.0
    %2110 = vmatpush1.msra.mxu0 %v1957
    %2111 = vmatprep.subr.mxu0 0.0
    %2112 = vmatpush1.msra.mxu0 %v1960
    %2113 = vmatprep.subr.mxu0 0.0
    %2114 = vmatpush1.msra.mxu0 %v1963
    %2115 = vmatprep.subr.mxu0 0.0
    %2116 = vmatpush1.msra.mxu0 %v1966
    %2117 = vmatprep.subr.mxu0 0.0
    %2118 = vmatpush1.msra.mxu0 %v1969
    %2119 = vmatprep.subr.mxu0 0.0
    %2120 = vmatpush1.msra.mxu0 %v1972
    %2121 = vmatprep.subr.mxu0 0.0
    %2122 = vmatpush1.msra.mxu0 %v1975
    %2123 = vmatprep.subr.mxu0 0.0
    %2124 = vmatpush1.msra.mxu0 %v1978
    %2125 = vmatprep.subr.mxu0 0.0
    %2126 = vmatpush1.msra.mxu0 %v1981
    %2127 = vmatprep.subr.mxu0 0.0
    %2128 = vmatpush1.msra.mxu0 0.0
    %2129 = vmatprep.subr.mxu0 0.0
    %2130 = vmatpush1.msra.mxu0 0.0
    %2131 = vmatprep.subr.mxu0 0.0
    %2132 = vmatpush1.msra.mxu0 0.0
    %2133 = vmatprep.subr.mxu0 0.0
    %2134 = vmatpush1.msra.mxu0 0.0
    %2135 = vmatprep.subr.mxu0 0.0
    %2136 = vmatpush1.msra.mxu0 0.0
    %2137 = vmatprep.subr.mxu0 0.0
    %2138 = vmatpush1.msra.mxu0 0.0
    %2139 = vmatprep.subr.mxu0 0.0
    %2140 = vmatpush1.msra.mxu0 0.0
    %2141 = vmatprep.subr.mxu0 0.0
    %2142 = vmatpush1.msra.mxu0 0.0
    %2143 = vmatprep.subr.mxu0 0.0
    %2144 = vmatpush1.msra.mxu0 0.0
    %2145 = vmatprep.subr.mxu0 0.0
    %2146 = vmatpush1.msra.mxu0 0.0
    %2147 = vmatprep.subr.mxu0 0.0
    %2148 = vmatpush1.msra.mxu0 0.0
    %2149 = vmatprep.subr.mxu0 0.0
    %2150 = vmatpush1.msra.mxu0 0.0
    %2151 = vmatprep.subr.mxu0 0.0
    %2152 = vmatpush1.msra.mxu0 0.0
    %2153 = vmatprep.subr.mxu0 0.0
    %2154 = vmatpush1.msra.mxu0 0.0
    %2155 = vmatprep.subr.mxu0 0.0
    %2156 = vmatpush1.msra.mxu0 0.0
    %2157 = vmatprep.subr.mxu0 0.0
    %2158 = vmatpush1.msra.mxu0 0.0
    %2159 = vmatprep.mubr.f32.mxu0 0.0
    %2160 = vmatmul.mubr.f32.gmra.mrb[0].mxu0 %v1926
    %v2161 = vpop.f32.mrb[0].mxu0
    %v2162 = vadd.f32 0.0, %v2161
    %v2163 = vpop.f32.mrb[0].mxu0
    %2164 = vmatprep.mubr.f32.mxu0 0.0
    %2165 = vmatmul.mubr.f32.gmra.mrb[0].mxu0 %v1927
    %v2166 = vpop.f32.mrb[0].mxu0
    %v2167 = vadd.f32 0.0, %v2166
    %v2168 = vpop.f32.mrb[0].mxu0
    %2169 = vmatprep.mubr.f32.mxu0 0.0
    %2170 = vmatmul.mubr.f32.gmra.mrb[0].mxu0 %v1928
    %v2171 = vpop.f32.mrb[0].mxu0
    %v2172 = vadd.f32 0.0, %v2171
    %v2173 = vpop.f32.mrb[0].mxu0
    %2174 = vmatprep.mubr.f32.mxu0 0.0
    %2175 = vmatmul.mubr.f32.gmra.mrb[0].mxu0 %v1929
    %v2176 = vpop.f32.mrb[0].mxu0
    %v2177 = vadd.f32 0.0, %v2176
    %v2178 = vpop.f32.mrb[0].mxu0
    %2179 = vmatprep.mubr.f32.mxu0 0.0
    %2180 = vmatmul.mubr.f32.gmra.mrb[0].mxu0 %v1930
    %v2181 = vpop.f32.mrb[0].mxu0
    %v2182 = vadd.f32 0.0, %v2181
    %v2183 = vpop.f32.mrb[0].mxu0
    %2184 = vmatprep.mubr.f32.mxu0 0.0
    %2185 = vmatmul.mubr.f32.gmra.mrb[0].mxu0 %v1931
    %v2186 = vpop.f32.mrb[0].mxu0
    %v2187 = vadd.f32 0.0, %v2186
    %v2188 = vpop.f32.mrb[0].mxu0
    %2189 = vmatprep.mubr.f32.mxu0 0.0
    %2190 = vmatmul.mubr.f32.gmra.mrb[0].mxu0 %v1932
    %v2191 = vpop.f32.mrb[0].mxu0
    %v2192 = vadd.f32 0.0, %v2191
    %v2193 = vpop.f32.mrb[0].mxu0
    %2194 = vmatprep.mubr.f32.mxu0 0.0
    %2195 = vmatmul.mubr.f32.gmra.mrb[0].mxu0 %v1933
    %v2196 = vpop.f32.mrb[0].mxu0
    %v2197 = vadd.f32 0.0, %v2196
    %v2198 = vpop.f32.mrb[0].mxu0
    %2199 = vdwg.mxu0
    %2200 = vmatprep.subr.mxu0 %v1879
    %2201 = vmatpush1.msra.mxu0 %v1878
    %2202 = vmatprep.subr.mxu0 %v1882
    %2203 = vmatpush1.msra.mxu0 %v1881
    %2204 = vmatprep.subr.mxu0 %v1885
    %2205 = vmatpush1.msra.mxu0 %v1884
    %2206 = vmatprep.subr.mxu0 %v1888
    %2207 = vmatpush1.msra.mxu0 %v1887
    %2208 = vmatprep.subr.mxu0 %v1891
    %2209 = vmatpush1.msra.mxu0 %v1890
    %2210 = vmatprep.subr.mxu0 %v1894
    %2211 = vmatpush1.msra.mxu0 %v1893
    %2212 = vmatprep.subr.mxu0 %v1897
    %2213 = vmatpush1.msra.mxu0 %v1896
    %2214 = vmatprep.subr.mxu0 %v1900
    %2215 = vmatpush1.msra.mxu0 %v1899
    %2216 = vmatprep.subr.mxu0 %v1903
    %2217 = vmatpush1.msra.mxu0 %v1902
    %2218 = vmatprep.subr.mxu0 %v1906
    %2219 = vmatpush1.msra.mxu0 %v1905
    %2220 = vmatprep.subr.mxu0 %v1909
    %2221 = vmatpush1.msra.mxu0 %v1908
    %2222 = vmatprep.subr.mxu0 %v1912
    %2223 = vmatpush1.msra.mxu0 %v1911
    %2224 = vmatprep.subr.mxu0 %v1915
    %2225 = vmatpush1.msra.mxu0 %v1914
    %2226 = vmatprep.subr.mxu0 %v1918
    %2227 = vmatpush1.msra.mxu0 %v1917
    %2228 = vmatprep.subr.mxu0 %v1921
    %2229 = vmatpush1.msra.mxu0 %v1920
    %2230 = vmatprep.subr.mxu0 %v1924
    %2231 = vmatpush1.msra.mxu0 %v1923
    %2232 = vmatprep.subr.mxu0 0.0
    %2233 = vmatpush1.msra.mxu0 0.0
    %2234 = vmatprep.subr.mxu0 0.0
    %2235 = vmatpush1.msra.mxu0 0.0
    %2236 = vmatprep.subr.mxu0 0.0
    %2237 = vmatpush1.msra.mxu0 0.0
    %2238 = vmatprep.subr.mxu0 0.0
    %2239 = vmatpush1.msra.mxu0 0.0
    %2240 = vmatprep.subr.mxu0 0.0
    %2241 = vmatpush1.msra.mxu0 0.0
    %2242 = vmatprep.subr.mxu0 0.0
    %2243 = vmatpush1.msra.mxu0 0.0
    %2244 = vmatprep.subr.mxu0 0.0
    %2245 = vmatpush1.msra.mxu0 0.0
    %2246 = vmatprep.subr.mxu0 0.0
    %2247 = vmatpush1.msra.mxu0 0.0
    %2248 = vmatprep.subr.mxu0 0.0
    %2249 = vmatpush1.msra.mxu0 0.0
    %2250 = vmatprep.subr.mxu0 0.0
    %2251 = vmatpush1.msra.mxu0 0.0
    %2252 = vmatprep.subr.mxu0 0.0
    %2253 = vmatpush1.msra.mxu0 0.0
    %2254 = vmatprep.subr.mxu0 0.0
    %2255 = vmatpush1.msra.mxu0 0.0
    %2256 = vmatprep.subr.mxu0 0.0
    %2257 = vmatpush1.msra.mxu0 0.0
    %2258 = vmatprep.subr.mxu0 0.0
    %2259 = vmatpush1.msra.mxu0 0.0
    %2260 = vmatprep.subr.mxu0 0.0
    %2261 = vmatpush1.msra.mxu0 0.0
    %2262 = vmatprep.subr.mxu0 0.0
    %2263 = vmatpush1.msra.mxu0 0.0
    %2264 = vmatprep.mubr.f32.mxu0 0.0
    %2265 = vmatmul.mubr.f32.gmra.mrb[0].mxu0 %v1870
    %v2266 = vpop.f32.mrb[0].mxu0
    %v2267 = vadd.f32 %v2049, %v2266
    %v2268 = vpop.f32.mrb[0].mxu0
    %v2269 = vadd.f32 %v2051, %v2268
    %2270 = vmatprep.mubr.f32.mxu0 0.0
    %2271 = vmatmul.mubr.f32.gmra.mrb[0].mxu0 %v1871
    %v2272 = vpop.f32.mrb[0].mxu0
    %v2273 = vadd.f32 %v2055, %v2272
    %v2274 = vpop.f32.mrb[0].mxu0
    %v2275 = vadd.f32 %v2057, %v2274
    %2276 = vmatprep.mubr.f32.mxu0 0.0
    %2277 = vmatmul.mubr.f32.gmra.mrb[0].mxu0 %v1872
    %v2278 = vpop.f32.mrb[0].mxu0
    %v2279 = vadd.f32 %v2061, %v2278
    %v2280 = vpop.f32.mrb[0].mxu0
    %v2281 = vadd.f32 %v2063, %v2280
    %2282 = vmatprep.mubr.f32.mxu0 0.0
    %2283 = vmatmul.mubr.f32.gmra.mrb[0].mxu0 %v1873
    %v2284 = vpop.f32.mrb[0].mxu0
    %v2285 = vadd.f32 %v2067, %v2284
    %v2286 = vpop.f32.mrb[0].mxu0
    %v2287 = vadd.f32 %v2069, %v2286
    %2288 = vmatprep.mubr.f32.mxu0 0.0
    %2289 = vmatmul.mubr.f32.gmra.mrb[0].mxu0 %v1874
    %v2290 = vpop.f32.mrb[0].mxu0
    %v2291 = vadd.f32 %v2073, %v2290
    %v2292 = vpop.f32.mrb[0].mxu0
    %v2293 = vadd.f32 %v2075, %v2292
    %2294 = vmatprep.mubr.f32.mxu0 0.0
    %2295 = vmatmul.mubr.f32.gmra.mrb[0].mxu0 %v1875
    %v2296 = vpop.f32.mrb[0].mxu0
    %v2297 = vadd.f32 %v2079, %v2296
    %v2298 = vpop.f32.mrb[0].mxu0
    %v2299 = vadd.f32 %v2081, %v2298
    %2300 = vmatprep.mubr.f32.mxu0 0.0
    %2301 = vmatmul.mubr.f32.gmra.mrb[0].mxu0 %v1876
    %v2302 = vpop.f32.mrb[0].mxu0
    %v2303 = vadd.f32 %v2085, %v2302
    %v2304 = vpop.f32.mrb[0].mxu0
    %v2305 = vadd.f32 %v2087, %v2304
    %2306 = vmatprep.mubr.f32.mxu0 0.0
    %2307 = vmatmul.mubr.f32.gmra.mrb[0].mxu0 %v1877
    %v2308 = vpop.f32.mrb[0].mxu0
    %v2309 = vadd.f32 %v2091, %v2308
    %v2310 = vpop.f32.mrb[0].mxu0
    %v2311 = vadd.f32 %v2093, %v2310
    %2312 = vdwg.mxu0
    %2313 = vmatprep.subr.mxu0 0.0
    %2314 = vmatpush1.msra.mxu0 %v1880
    %2315 = vmatprep.subr.mxu0 0.0
    %2316 = vmatpush1.msra.mxu0 %v1883
    %2317 = vmatprep.subr.mxu0 0.0
    %2318 = vmatpush1.msra.mxu0 %v1886
    %2319 = vmatprep.subr.mxu0 0.0
    %2320 = vmatpush1.msra.mxu0 %v1889
    %2321 = vmatprep.subr.mxu0 0.0
    %2322 = vmatpush1.msra.mxu0 %v1892
    %2323 = vmatprep.subr.mxu0 0.0
    %2324 = vmatpush1.msra.mxu0 %v1895
    %2325 = vmatprep.subr.mxu0 0.0
    %2326 = vmatpush1.msra.mxu0 %v1898
    %2327 = vmatprep.subr.mxu0 0.0
    %2328 = vmatpush1.msra.mxu0 %v1901
    %2329 = vmatprep.subr.mxu0 0.0
    %2330 = vmatpush1.msra.mxu0 %v1904
    %2331 = vmatprep.subr.mxu0 0.0
    %2332 = vmatpush1.msra.mxu0 %v1907
    %2333 = vmatprep.subr.mxu0 0.0
    %2334 = vmatpush1.msra.mxu0 %v1910
    %2335 = vmatprep.subr.mxu0 0.0
    %2336 = vmatpush1.msra.mxu0 %v1913
    %2337 = vmatprep.subr.mxu0 0.0
    %2338 = vmatpush1.msra.mxu0 %v1916
    %2339 = vmatprep.subr.mxu0 0.0
    %2340 = vmatpush1.msra.mxu0 %v1919
    %2341 = vmatprep.subr.mxu0 0.0
    %2342 = vmatpush1.msra.mxu0 %v1922
    %2343 = vmatprep.subr.mxu0 0.0
    %2344 = vmatpush1.msra.mxu0 %v1925
    %2345 = vmatprep.subr.mxu0 0.0
    %2346 = vmatpush1.msra.mxu0 0.0
    %2347 = vmatprep.subr.mxu0 0.0
    %2348 = vmatpush1.msra.mxu0 0.0
    %2349 = vmatprep.subr.mxu0 0.0
    %2350 = vmatpush1.msra.mxu0 0.0
    %2351 = vmatprep.subr.mxu0 0.0
    %2352 = vmatpush1.msra.mxu0 0.0
    %2353 = vmatprep.subr.mxu0 0.0
    %2354 = vmatpush1.msra.mxu0 0.0
    %2355 = vmatprep.subr.mxu0 0.0
    %2356 = vmatpush1.msra.mxu0 0.0
    %2357 = vmatprep.subr.mxu0 0.0
    %2358 = vmatpush1.msra.mxu0 0.0
    %2359 = vmatprep.subr.mxu0 0.0
    %2360 = vmatpush1.msra.mxu0 0.0
    %2361 = vmatprep.subr.mxu0 0.0
    %2362 = vmatpush1.msra.mxu0 0.0
    %2363 = vmatprep.subr.mxu0 0.0
    %2364 = vmatpush1.msra.mxu0 0.0
    %2365 = vmatprep.subr.mxu0 0.0
    %2366 = vmatpush1.msra.mxu0 0.0
    %2367 = vmatprep.subr.mxu0 0.0
    %2368 = vmatpush1.msra.mxu0 0.0
    %2369 = vmatprep.subr.mxu0 0.0
    %2370 = vmatpush1.msra.mxu0 0.0
    %2371 = vmatprep.subr.mxu0 0.0
    %2372 = vmatpush1.msra.mxu0 0.0
    %2373 = vmatprep.subr.mxu0 0.0
    %2374 = vmatpush1.msra.mxu0 0.0
    %2375 = vmatprep.subr.mxu0 0.0
    %2376 = vmatpush1.msra.mxu0 0.0
    %2377 = vmatprep.mubr.f32.mxu0 0.0
    %2378 = vmatmul.mubr.f32.gmra.mrb[0].mxu0 %v1870
    %v2379 = vpop.f32.mrb[0].mxu0
    %v2380 = vadd.f32 %v2162, %v2379
    %v2381 = vpop.f32.mrb[0].mxu0
    %2382 = vmatprep.mubr.f32.mxu0 0.0
    %2383 = vmatmul.mubr.f32.gmra.mrb[0].mxu0 %v1871
    %v2384 = vpop.f32.mrb[0].mxu0
    %v2385 = vadd.f32 %v2167, %v2384
    %v2386 = vpop.f32.mrb[0].mxu0
    %2387 = vmatprep.mubr.f32.mxu0 0.0
    %2388 = vmatmul.mubr.f32.gmra.mrb[0].mxu0 %v1872
    %v2389 = vpop.f32.mrb[0].mxu0
    %v2390 = vadd.f32 %v2172, %v2389
    %v2391 = vpop.f32.mrb[0].mxu0
    %2392 = vmatprep.mubr.f32.mxu0 0.0
    %2393 = vmatmul.mubr.f32.gmra.mrb[0].mxu0 %v1873
    %v2394 = vpop.f32.mrb[0].mxu0
    %v2395 = vadd.f32 %v2177, %v2394
    %v2396 = vpop.f32.mrb[0].mxu0
    %2397 = vmatprep.mubr.f32.mxu0 0.0
    %2398 = vmatmul.mubr.f32.gmra.mrb[0].mxu0 %v1874
    %v2399 = vpop.f32.mrb[0].mxu0
    %v2400 = vadd.f32 %v2182, %v2399
    %v2401 = vpop.f32.mrb[0].mxu0
    %2402 = vmatprep.mubr.f32.mxu0 0.0
    %2403 = vmatmul.mubr.f32.gmra.mrb[0].mxu0 %v1875
    %v2404 = vpop.f32.mrb[0].mxu0
    %v2405 = vadd.f32 %v2187, %v2404
    %v2406 = vpop.f32.mrb[0].mxu0
    %2407 = vmatprep.mubr.f32.mxu0 0.0
    %2408 = vmatmul.mubr.f32.gmra.mrb[0].mxu0 %v1876
    %v2409 = vpop.f32.mrb[0].mxu0
    %v2410 = vadd.f32 %v2192, %v2409
    %v2411 = vpop.f32.mrb[0].mxu0
    %2412 = vmatprep.mubr.f32.mxu0 0.0
    %2413 = vmatmul.mubr.f32.gmra.mrb[0].mxu0 %v1877
    %v2414 = vpop.f32.mrb[0].mxu0
    %v2415 = vadd.f32 %v2197, %v2414
    %v2416 = vpop.f32.mrb[0].mxu0
    %2417 = vdwg.mxu0
    %v2418 = vld [vmem:[#allocation12] sm:$0x7]
    %v2420 = vlaneseq
    %v2421 = vshrl.u32 %v2420, 7
    %v2422 = vsub.s32 0, %v2421
    %v2423 = vrot.slane %v2418, %v2422
    %v2424 = vlaneseq
    %v2425 = vshrl.u32 %v2424, 7
    %v2426 = vsub.s32 1, %v2425
    %v2427 = vrot.slane %v2418, %v2426
    %v2428 = vlaneseq
    %v2429 = vshrl.u32 %v2428, 7
    %v2430 = vsub.s32 2, %v2429
    %v2431 = vrot.slane %v2418, %v2430
    %v2435 = vadd.f32 %v2267, %v2423
    %v2436 = vadd.f32 %v2269, %v2427
    %v2437 = vadd.f32 %v2380, %v2431
    %v2438 = vadd.f32 %v2273, %v2423
    %v2439 = vadd.f32 %v2275, %v2427
    %v2440 = vadd.f32 %v2385, %v2431
    %v2441 = vadd.f32 %v2279, %v2423
    %v2442 = vadd.f32 %v2281, %v2427
    %v2443 = vadd.f32 %v2390, %v2431
    %v2444 = vadd.f32 %v2285, %v2423
    %v2445 = vadd.f32 %v2287, %v2427
    %v2446 = vadd.f32 %v2395, %v2431
    %v2447 = vadd.f32 %v2291, %v2423
    %v2448 = vadd.f32 %v2293, %v2427
    %v2449 = vadd.f32 %v2400, %v2431
    %v2450 = vadd.f32 %v2297, %v2423
    %v2451 = vadd.f32 %v2299, %v2427
    %v2452 = vadd.f32 %v2405, %v2431
    %v2453 = vadd.f32 %v2303, %v2423
    %v2454 = vadd.f32 %v2305, %v2427
    %v2455 = vadd.f32 %v2410, %v2431
    %v2456 = vadd.f32 %v2309, %v2423
    %v2457 = vadd.f32 %v2311, %v2427
    %v2458 = vadd.f32 %v2415, %v2431
    %v2459 = vld [vmem:[#allocation14] sm:$0xff]
    %v2460 = vld [vmem:[#allocation14 + $0x8] sm:$0xff]
    %v2461 = vld [vmem:[#allocation14 + $0x10] sm:$0xff]
    %v2462 = vld [vmem:[#allocation14 + $0x18] sm:$0xff]
    %v2463 = vld [vmem:[#allocation14 + $0x20] sm:$0xff]
    %v2464 = vld [vmem:[#allocation14 + $0x28] sm:$0xff]
    %v2465 = vld [vmem:[#allocation14 + $0x30] sm:$0xff]
    %v2466 = vld [vmem:[#allocation14 + $0x38] sm:$0xff]
    %v2467 = vld [vmem:[#allocation14 + $0x40] sm:$0xff]
    %v2468 = vld [vmem:[#allocation14 + $0x48] sm:$0xff]
    %v2469 = vld [vmem:[#allocation14 + $0x50] sm:$0xff]
    %v2470 = vld [vmem:[#allocation14 + $0x58] sm:$0xff]
    %v2471 = vld [vmem:[#allocation14 + $0x60] sm:$0xff]
    %v2472 = vld [vmem:[#allocation14 + $0x68] sm:$0xff]
    %v2473 = vld [vmem:[#allocation14 + $0x70] sm:$0xff]
    %v2474 = vld [vmem:[#allocation14 + $0x78] sm:$0xff]
    %v2475 = vld [vmem:[#allocation14 + $0x80] sm:$0xff]
    %v2476 = vld [vmem:[#allocation14 + $0x88] sm:$0xff]
    %v2477 = vld [vmem:[#allocation14 + $0x90] sm:$0xff]
    %v2478 = vld [vmem:[#allocation14 + $0x98] sm:$0xff]
    %v2479 = vld [vmem:[#allocation14 + $0xa0] sm:$0xff]
    %v2480 = vld [vmem:[#allocation14 + $0xa8] sm:$0xff]
    %v2481 = vld [vmem:[#allocation14 + $0xb0] sm:$0xff]
    %v2482 = vld [vmem:[#allocation14 + $0xb8] sm:$0xff]
    %v2483 = vld [vmem:[#allocation14 + $0xc0] sm:$0xff]
    %v2484 = vld [vmem:[#allocation14 + $0xc8] sm:$0xff]
    %v2485 = vld [vmem:[#allocation14 + $0xd0] sm:$0xff]
    %v2486 = vld [vmem:[#allocation14 + $0xd8] sm:$0xff]
    %v2487 = vld [vmem:[#allocation14 + $0xe0] sm:$0xff]
    %v2488 = vld [vmem:[#allocation14 + $0xe8] sm:$0xff]
    %v2489 = vld [vmem:[#allocation14 + $0xf0] sm:$0xff]
    %v2490 = vld [vmem:[#allocation14 + $0xf8] sm:$0xff]
    %v2491 = vld [vmem:[#allocation14 + $0x100] sm:$0xff]
    %v2492 = vld [vmem:[#allocation14 + $0x108] sm:$0xff]
    %v2493 = vld [vmem:[#allocation14 + $0x110] sm:$0xff]
    %v2494 = vld [vmem:[#allocation14 + $0x118] sm:$0xff]
    %v2495 = vld [vmem:[#allocation14 + $0x120] sm:$0xff]
    %v2496 = vld [vmem:[#allocation14 + $0x128] sm:$0xff]
    %v2497 = vld [vmem:[#allocation14 + $0x130] sm:$0xff]
    %v2498 = vld [vmem:[#allocation14 + $0x138] sm:$0xff]
    %v2499 = vld [vmem:[#allocation14 + $0x140] sm:$0xff]
    %v2500 = vld [vmem:[#allocation14 + $0x148] sm:$0xff]
    %v2501 = vld [vmem:[#allocation14 + $0x150] sm:$0xff]
    %v2502 = vld [vmem:[#allocation14 + $0x158] sm:$0xff]
    %v2503 = vld [vmem:[#allocation14 + $0x160] sm:$0xff]
    %v2504 = vld [vmem:[#allocation14 + $0x168] sm:$0xff]
    %v2505 = vld [vmem:[#allocation14 + $0x170] sm:$0xff]
    %v2506 = vld [vmem:[#allocation14 + $0x178] sm:$0xff]
    %v2507 = vld [vmem:[#allocation15] sm:$0x7]
    %v2508 = vsel %vm174, %v2435, %v2456
    %v2509 = vsel %vm175, %v2436, %v2457
    %v2510 = vsel %vm176, %v2437, %v2458
    %v2512 = vlaneseq
    %v2513 = vshrl.u32 %v2512, 7
    %v2514 = vsub.s32 0, %v2513
    %v2515 = vrot.slane %v2507, %v2514
    %v2516 = vlaneseq
    %v2517 = vshrl.u32 %v2516, 7
    %v2518 = vsub.s32 1, %v2517
    %v2519 = vrot.slane %v2507, %v2518
    %v2520 = vlaneseq
    %v2521 = vshrl.u32 %v2520, 7
    %v2522 = vsub.s32 2, %v2521
    %v2523 = vrot.slane %v2507, %v2522
    %2527 = vmatprep.subr.mxu0 %v2460
    %2528 = vmatpush1.msra.mxu0 %v2459
    %2529 = vmatprep.subr.mxu0 %v2463
    %2530 = vmatpush1.msra.mxu0 %v2462
    %2531 = vmatprep.subr.mxu0 %v2466
    %2532 = vmatpush1.msra.mxu0 %v2465
    %2533 = vmatprep.subr.mxu0 %v2469
    %2534 = vmatpush1.msra.mxu0 %v2468
    %2535 = vmatprep.subr.mxu0 %v2472
    %2536 = vmatpush1.msra.mxu0 %v2471
    %2537 = vmatprep.subr.mxu0 %v2475
    %2538 = vmatpush1.msra.mxu0 %v2474
    %2539 = vmatprep.subr.mxu0 %v2478
    %2540 = vmatpush1.msra.mxu0 %v2477
    %2541 = vmatprep.subr.mxu0 %v2481
    %2542 = vmatpush1.msra.mxu0 %v2480
    %2543 = vmatprep.subr.mxu0 %v2484
    %2544 = vmatpush1.msra.mxu0 %v2483
    %2545 = vmatprep.subr.mxu0 %v2487
    %2546 = vmatpush1.msra.mxu0 %v2486
    %2547 = vmatprep.subr.mxu0 %v2490
    %2548 = vmatpush1.msra.mxu0 %v2489
    %2549 = vmatprep.subr.mxu0 %v2493
    %2550 = vmatpush1.msra.mxu0 %v2492
    %2551 = vmatprep.subr.mxu0 %v2496
    %2552 = vmatpush1.msra.mxu0 %v2495
    %2553 = vmatprep.subr.mxu0 %v2499
    %2554 = vmatpush1.msra.mxu0 %v2498
    %2555 = vmatprep.subr.mxu0 %v2502
    %2556 = vmatpush1.msra.mxu0 %v2501
    %2557 = vmatprep.subr.mxu0 %v2505
    %2558 = vmatpush1.msra.mxu0 %v2504
    %2559 = vmatprep.subr.mxu0 0.0
    %2560 = vmatpush1.msra.mxu0 0.0
    %2561 = vmatprep.subr.mxu0 0.0
    %2562 = vmatpush1.msra.mxu0 0.0
    %2563 = vmatprep.subr.mxu0 0.0
    %2564 = vmatpush1.msra.mxu0 0.0
    %2565 = vmatprep.subr.mxu0 0.0
    %2566 = vmatpush1.msra.mxu0 0.0
    %2567 = vmatprep.subr.mxu0 0.0
    %2568 = vmatpush1.msra.mxu0 0.0
    %2569 = vmatprep.subr.mxu0 0.0
    %2570 = vmatpush1.msra.mxu0 0.0
    %2571 = vmatprep.subr.mxu0 0.0
    %2572 = vmatpush1.msra.mxu0 0.0
    %2573 = vmatprep.subr.mxu0 0.0
    %2574 = vmatpush1.msra.mxu0 0.0
    %2575 = vmatprep.subr.mxu0 0.0
    %2576 = vmatpush1.msra.mxu0 0.0
    %2577 = vmatprep.subr.mxu0 0.0
    %2578 = vmatpush1.msra.mxu0 0.0
    %2579 = vmatprep.subr.mxu0 0.0
    %2580 = vmatpush1.msra.mxu0 0.0
    %2581 = vmatprep.subr.mxu0 0.0
    %2582 = vmatpush1.msra.mxu0 0.0
    %2583 = vmatprep.subr.mxu0 0.0
    %2584 = vmatpush1.msra.mxu0 0.0
    %2585 = vmatprep.subr.mxu0 0.0
    %2586 = vmatpush1.msra.mxu0 0.0
    %2587 = vmatprep.subr.mxu0 0.0
    %2588 = vmatpush1.msra.mxu0 0.0
    %2589 = vmatprep.subr.mxu0 0.0
    %2590 = vmatpush1.msra.mxu0 0.0
    %2591 = vmatprep.mubr.f32.mxu0 0.0
    %2592 = vmatmul.mubr.f32.gmra.mrb[0].mxu0 0.0
    %v2593 = vpop.f32.mrb[0].mxu0
    %v2594 = vadd.f32 %v2515, %v2593
    %v2595 = vpop.f32.mrb[0].mxu0
    %v2596 = vadd.f32 %v2519, %v2595
    %2597 = vdwg.mxu0
    %2598 = vmatprep.subr.mxu0 0.0
    %2599 = vmatpush1.msra.mxu0 %v2461
    %2600 = vmatprep.subr.mxu0 0.0
    %2601 = vmatpush1.msra.mxu0 %v2464
    %2602 = vmatprep.subr.mxu0 0.0
    %2603 = vmatpush1.msra.mxu0 %v2467
    %2604 = vmatprep.subr.mxu0 0.0
    %2605 = vmatpush1.msra.mxu0 %v2470
    %2606 = vmatprep.subr.mxu0 0.0
    %2607 = vmatpush1.msra.mxu0 %v2473
    %2608 = vmatprep.subr.mxu0 0.0
    %2609 = vmatpush1.msra.mxu0 %v2476
    %2610 = vmatprep.subr.mxu0 0.0
    %2611 = vmatpush1.msra.mxu0 %v2479
    %2612 = vmatprep.subr.mxu0 0.0
    %2613 = vmatpush1.msra.mxu0 %v2482
    %2614 = vmatprep.subr.mxu0 0.0
    %2615 = vmatpush1.msra.mxu0 %v2485
    %2616 = vmatprep.subr.mxu0 0.0
    %2617 = vmatpush1.msra.mxu0 %v2488
    %2618 = vmatprep.subr.mxu0 0.0
    %2619 = vmatpush1.msra.mxu0 %v2491
    %2620 = vmatprep.subr.mxu0 0.0
    %2621 = vmatpush1.msra.mxu0 %v2494
    %2622 = vmatprep.subr.mxu0 0.0
    %2623 = vmatpush1.msra.mxu0 %v2497
    %2624 = vmatprep.subr.mxu0 0.0
    %2625 = vmatpush1.msra.mxu0 %v2500
    %2626 = vmatprep.subr.mxu0 0.0
    %2627 = vmatpush1.msra.mxu0 %v2503
    %2628 = vmatprep.subr.mxu0 0.0
    %2629 = vmatpush1.msra.mxu0 %v2506
    %2630 = vmatprep.subr.mxu0 0.0
    %2631 = vmatpush1.msra.mxu0 0.0
    %2632 = vmatprep.subr.mxu0 0.0
    %2633 = vmatpush1.msra.mxu0 0.0
    %2634 = vmatprep.subr.mxu0 0.0
    %2635 = vmatpush1.msra.mxu0 0.0
    %2636 = vmatprep.subr.mxu0 0.0
    %2637 = vmatpush1.msra.mxu0 0.0
    %2638 = vmatprep.subr.mxu0 0.0
    %2639 = vmatpush1.msra.mxu0 0.0
    %2640 = vmatprep.subr.mxu0 0.0
    %2641 = vmatpush1.msra.mxu0 0.0
    %2642 = vmatprep.subr.mxu0 0.0
    %2643 = vmatpush1.msra.mxu0 0.0
    %2644 = vmatprep.subr.mxu0 0.0
    %2645 = vmatpush1.msra.mxu0 0.0
    %2646 = vmatprep.subr.mxu0 0.0
    %2647 = vmatpush1.msra.mxu0 0.0
    %2648 = vmatprep.subr.mxu0 0.0
    %2649 = vmatpush1.msra.mxu0 0.0
    %2650 = vmatprep.subr.mxu0 0.0
    %2651 = vmatpush1.msra.mxu0 0.0
    %2652 = vmatprep.subr.mxu0 0.0
    %2653 = vmatpush1.msra.mxu0 0.0
    %2654 = vmatprep.subr.mxu0 0.0
    %2655 = vmatpush1.msra.mxu0 0.0
    %2656 = vmatprep.subr.mxu0 0.0
    %2657 = vmatpush1.msra.mxu0 0.0
    %2658 = vmatprep.subr.mxu0 0.0
    %2659 = vmatpush1.msra.mxu0 0.0
    %2660 = vmatprep.subr.mxu0 0.0
    %2661 = vmatpush1.msra.mxu0 0.0
    %2662 = vmatprep.mubr.f32.mxu0 0.0
    %2663 = vmatmul.mubr.f32.gmra.mrb[0].mxu0 0.0
    %v2664 = vpop.f32.mrb[0].mxu0
    %v2665 = vadd.f32 %v2523, %v2664
    %v2666 = vpop.f32.mrb[0].mxu0
    %2667 = vdwg.mxu0
    %v2668 = vadd.f32 %v2508, %v2594
    %v2669 = vxor.u32 %v2668, 2147483648
    %v2670 = vmul.f32 %v2669, 1.442695
    %v2671 = vpow.pop %v2670
    %v2672 = vadd.f32 %v2671, 1.0
    %v2673 = vrcp.pop %v2672
    %v2674 = vmul.f32 1.0, %v2673
    %v2675 = vadd.f32 %v2509, %v2596
    %v2676 = vxor.u32 %v2675, 2147483648
    %v2677 = vmul.f32 %v2676, 1.442695
    %v2678 = vpow.pop %v2677
    %v2679 = vadd.f32 %v2678, 1.0
    %v2680 = vrcp.pop %v2679
    %v2681 = vmul.f32 1.0, %v2680
    %v2682 = vmul.f32 %v2674, %v2665
    %v2683 = vadd.f32 %v2510, %v2682
    %v2684 = vtanh.pop %v2683
    %v2685 = vsub.f32 1.0, %v2681
    %v2686 = vmul.f32 %v2685, %v2684
    %v2687 = vmul.f32 %v2681, 0.0
    %v2688 = vadd.f32 %v2686, %v2687
    %v2689 = vsel %vm174, %v2438, %v2453
    %v2690 = vsel %vm175, %v2439, %v2454
    %v2691 = vsel %vm176, %v2440, %v2455
    %2692 = vmatprep.subr.mxu0 %v2460
    %2693 = vmatpush1.msra.mxu0 %v2459
    %2694 = vmatprep.subr.mxu0 %v2463
    %2695 = vmatpush1.msra.mxu0 %v2462
    %2696 = vmatprep.subr.mxu0 %v2466
    %2697 = vmatpush1.msra.mxu0 %v2465
    %2698 = vmatprep.subr.mxu0 %v2469
    %2699 = vmatpush1.msra.mxu0 %v2468
    %2700 = vmatprep.subr.mxu0 %v2472
    %2701 = vmatpush1.msra.mxu0 %v2471
    %2702 = vmatprep.subr.mxu0 %v2475
    %2703 = vmatpush1.msra.mxu0 %v2474
    %2704 = vmatprep.subr.mxu0 %v2478
    %2705 = vmatpush1.msra.mxu0 %v2477
    %2706 = vmatprep.subr.mxu0 %v2481
    %2707 = vmatpush1.msra.mxu0 %v2480
    %2708 = vmatprep.subr.mxu0 %v2484
    %2709 = vmatpush1.msra.mxu0 %v2483
    %2710 = vmatprep.subr.mxu0 %v2487
    %2711 = vmatpush1.msra.mxu0 %v2486
    %2712 = vmatprep.subr.mxu0 %v2490
    %2713 = vmatpush1.msra.mxu0 %v2489
    %2714 = vmatprep.subr.mxu0 %v2493
    %2715 = vmatpush1.msra.mxu0 %v2492
    %2716 = vmatprep.subr.mxu0 %v2496
    %2717 = vmatpush1.msra.mxu0 %v2495
    %2718 = vmatprep.subr.mxu0 %v2499
    %2719 = vmatpush1.msra.mxu0 %v2498
    %2720 = vmatprep.subr.mxu0 %v2502
    %2721 = vmatpush1.msra.mxu0 %v2501
    %2722 = vmatprep.subr.mxu0 %v2505
    %2723 = vmatpush1.msra.mxu0 %v2504
    %2724 = vmatprep.subr.mxu0 0.0
    %2725 = vmatpush1.msra.mxu0 0.0
    %2726 = vmatprep.subr.mxu0 0.0
    %2727 = vmatpush1.msra.mxu0 0.0
    %2728 = vmatprep.subr.mxu0 0.0
    %2729 = vmatpush1.msra.mxu0 0.0
    %2730 = vmatprep.subr.mxu0 0.0
    %2731 = vmatpush1.msra.mxu0 0.0
    %2732 = vmatprep.subr.mxu0 0.0
    %2733 = vmatpush1.msra.mxu0 0.0
    %2734 = vmatprep.subr.mxu0 0.0
    %2735 = vmatpush1.msra.mxu0 0.0
    %2736 = vmatprep.subr.mxu0 0.0
    %2737 = vmatpush1.msra.mxu0 0.0
    %2738 = vmatprep.subr.mxu0 0.0
    %2739 = vmatpush1.msra.mxu0 0.0
    %2740 = vmatprep.subr.mxu0 0.0
    %2741 = vmatpush1.msra.mxu0 0.0
    %2742 = vmatprep.subr.mxu0 0.0
    %2743 = vmatpush1.msra.mxu0 0.0
    %2744 = vmatprep.subr.mxu0 0.0
    %2745 = vmatpush1.msra.mxu0 0.0
    %2746 = vmatprep.subr.mxu0 0.0
    %2747 = vmatpush1.msra.mxu0 0.0
    %2748 = vmatprep.subr.mxu0 0.0
    %2749 = vmatpush1.msra.mxu0 0.0
    %2750 = vmatprep.subr.mxu0 0.0
    %2751 = vmatpush1.msra.mxu0 0.0
    %2752 = vmatprep.subr.mxu0 0.0
    %2753 = vmatpush1.msra.mxu0 0.0
    %2754 = vmatprep.subr.mxu0 0.0
    %2755 = vmatpush1.msra.mxu0 0.0
    %2756 = vmatprep.mubr.f32.mxu0 0.0
    %2757 = vmatmul.mubr.f32.gmra.mrb[0].mxu0 %v2688
    %v2758 = vpop.f32.mrb[0].mxu0
    %v2759 = vadd.f32 %v2515, %v2758
    %v2760 = vpop.f32.mrb[0].mxu0
    %v2761 = vadd.f32 %v2519, %v2760
    %2762 = vdwg.mxu0
    %2763 = vmatprep.subr.mxu0 0.0
    %2764 = vmatpush1.msra.mxu0 %v2461
    %2765 = vmatprep.subr.mxu0 0.0
    %2766 = vmatpush1.msra.mxu0 %v2464
    %2767 = vmatprep.subr.mxu0 0.0
    %2768 = vmatpush1.msra.mxu0 %v2467
    %2769 = vmatprep.subr.mxu0 0.0
    %2770 = vmatpush1.msra.mxu0 %v2470
    %2771 = vmatprep.subr.mxu0 0.0
    %2772 = vmatpush1.msra.mxu0 %v2473
    %2773 = vmatprep.subr.mxu0 0.0
    %2774 = vmatpush1.msra.mxu0 %v2476
    %2775 = vmatprep.subr.mxu0 0.0
    %2776 = vmatpush1.msra.mxu0 %v2479
    %2777 = vmatprep.subr.mxu0 0.0
    %2778 = vmatpush1.msra.mxu0 %v2482
    %2779 = vmatprep.subr.mxu0 0.0
    %2780 = vmatpush1.msra.mxu0 %v2485
    %2781 = vmatprep.subr.mxu0 0.0
    %2782 = vmatpush1.msra.mxu0 %v2488
    %2783 = vmatprep.subr.mxu0 0.0
    %2784 = vmatpush1.msra.mxu0 %v2491
    %2785 = vmatprep.subr.mxu0 0.0
    %2786 = vmatpush1.msra.mxu0 %v2494
    %2787 = vmatprep.subr.mxu0 0.0
    %2788 = vmatpush1.msra.mxu0 %v2497
    %2789 = vmatprep.subr.mxu0 0.0
    %2790 = vmatpush1.msra.mxu0 %v2500
    %2791 = vmatprep.subr.mxu0 0.0
    %2792 = vmatpush1.msra.mxu0 %v2503
    %2793 = vmatprep.subr.mxu0 0.0
    %2794 = vmatpush1.msra.mxu0 %v2506
    %2795 = vmatprep.subr.mxu0 0.0
    %2796 = vmatpush1.msra.mxu0 0.0
    %2797 = vmatprep.subr.mxu0 0.0
    %2798 = vmatpush1.msra.mxu0 0.0
    %2799 = vmatprep.subr.mxu0 0.0
    %2800 = vmatpush1.msra.mxu0 0.0
    %2801 = vmatprep.subr.mxu0 0.0
    %2802 = vmatpush1.msra.mxu0 0.0
    %2803 = vmatprep.subr.mxu0 0.0
    %2804 = vmatpush1.msra.mxu0 0.0
    %2805 = vmatprep.subr.mxu0 0.0
    %2806 = vmatpush1.msra.mxu0 0.0
    %2807 = vmatprep.subr.mxu0 0.0
    %2808 = vmatpush1.msra.mxu0 0.0
    %2809 = vmatprep.subr.mxu0 0.0
    %2810 = vmatpush1.msra.mxu0 0.0
    %2811 = vmatprep.subr.mxu0 0.0
    %2812 = vmatpush1.msra.mxu0 0.0
    %2813 = vmatprep.subr.mxu0 0.0
    %2814 = vmatpush1.msra.mxu0 0.0
    %2815 = vmatprep.subr.mxu0 0.0
    %2816 = vmatpush1.msra.mxu0 0.0
    %2817 = vmatprep.subr.mxu0 0.0
    %2818 = vmatpush1.msra.mxu0 0.0
    %2819 = vmatprep.subr.mxu0 0.0
    %2820 = vmatpush1.msra.mxu0 0.0
    %2821 = vmatprep.subr.mxu0 0.0
    %2822 = vmatpush1.msra.mxu0 0.0
    %2823 = vmatprep.subr.mxu0 0.0
    %2824 = vmatpush1.msra.mxu0 0.0
    %2825 = vmatprep.subr.mxu0 0.0
    %2826 = vmatpush1.msra.mxu0 0.0
    %2827 = vmatprep.mubr.f32.mxu0 0.0
    %2828 = vmatmul.mubr.f32.gmra.mrb[0].mxu0 %v2688
    %v2829 = vpop.f32.mrb[0].mxu0
    %v2830 = vadd.f32 %v2523, %v2829
    %v2831 = vpop.f32.mrb[0].mxu0
    %2832 = vdwg.mxu0
    %v2833 = vadd.f32 %v2689, %v2759
    %v2834 = vxor.u32 %v2833, 2147483648
    %v2835 = vmul.f32 %v2834, 1.442695
    %v2836 = vpow.pop %v2835
    %v2837 = vadd.f32 %v2836, 1.0
    %v2838 = vrcp.pop %v2837
    %v2839 = vmul.f32 1.0, %v2838
    %v2840 = vadd.f32 %v2690, %v2761
    %v2841 = vxor.u32 %v2840, 2147483648
    %v2842 = vmul.f32 %v2841, 1.442695
    %v2843 = vpow.pop %v2842
    %v2844 = vadd.f32 %v2843, 1.0
    %v2845 = vrcp.pop %v2844
    %v2846 = vmul.f32 1.0, %v2845
    %v2847 = vmul.f32 %v2839, %v2830
    %v2848 = vadd.f32 %v2691, %v2847
    %v2849 = vtanh.pop %v2848
    %v2850 = vsub.f32 1.0, %v2846
    %v2851 = vmul.f32 %v2850, %v2849
    %v2852 = vmul.f32 %v2846, %v2688
    %v2853 = vadd.f32 %v2851, %v2852
    %v2854 = vsel %vm174, %v2441, %v2450
    %v2855 = vsel %vm175, %v2442, %v2451
    %v2856 = vsel %vm176, %v2443, %v2452
    %2857 = vmatprep.subr.mxu0 %v2460
    %2858 = vmatpush1.msra.mxu0 %v2459
    %2859 = vmatprep.subr.mxu0 %v2463
    %2860 = vmatpush1.msra.mxu0 %v2462
    %2861 = vmatprep.subr.mxu0 %v2466
    %2862 = vmatpush1.msra.mxu0 %v2465
    %2863 = vmatprep.subr.mxu0 %v2469
    %2864 = vmatpush1.msra.mxu0 %v2468
    %2865 = vmatprep.subr.mxu0 %v2472
    %2866 = vmatpush1.msra.mxu0 %v2471
    %2867 = vmatprep.subr.mxu0 %v2475
    %2868 = vmatpush1.msra.mxu0 %v2474
    %2869 = vmatprep.subr.mxu0 %v2478
    %2870 = vmatpush1.msra.mxu0 %v2477
    %2871 = vmatprep.subr.mxu0 %v2481
    %2872 = vmatpush1.msra.mxu0 %v2480
    %2873 = vmatprep.subr.mxu0 %v2484
    %2874 = vmatpush1.msra.mxu0 %v2483
    %2875 = vmatprep.subr.mxu0 %v2487
    %2876 = vmatpush1.msra.mxu0 %v2486
    %2877 = vmatprep.subr.mxu0 %v2490
    %2878 = vmatpush1.msra.mxu0 %v2489
    %2879 = vmatprep.subr.mxu0 %v2493
    %2880 = vmatpush1.msra.mxu0 %v2492
    %2881 = vmatprep.subr.mxu0 %v2496
    %2882 = vmatpush1.msra.mxu0 %v2495
    %2883 = vmatprep.subr.mxu0 %v2499
    %2884 = vmatpush1.msra.mxu0 %v2498
    %2885 = vmatprep.subr.mxu0 %v2502
    %2886 = vmatpush1.msra.mxu0 %v2501
    %2887 = vmatprep.subr.mxu0 %v2505
    %2888 = vmatpush1.msra.mxu0 %v2504
    %2889 = vmatprep.subr.mxu0 0.0
    %2890 = vmatpush1.msra.mxu0 0.0
    %2891 = vmatprep.subr.mxu0 0.0
    %2892 = vmatpush1.msra.mxu0 0.0
    %2893 = vmatprep.subr.mxu0 0.0
    %2894 = vmatpush1.msra.mxu0 0.0
    %2895 = vmatprep.subr.mxu0 0.0
    %2896 = vmatpush1.msra.mxu0 0.0
    %2897 = vmatprep.subr.mxu0 0.0
    %2898 = vmatpush1.msra.mxu0 0.0
    %2899 = vmatprep.subr.mxu0 0.0
    %2900 = vmatpush1.msra.mxu0 0.0
    %2901 = vmatprep.subr.mxu0 0.0
    %2902 = vmatpush1.msra.mxu0 0.0
    %2903 = vmatprep.subr.mxu0 0.0
    %2904 = vmatpush1.msra.mxu0 0.0
    %2905 = vmatprep.subr.mxu0 0.0
    %2906 = vmatpush1.msra.mxu0 0.0
    %2907 = vmatprep.subr.mxu0 0.0
    %2908 = vmatpush1.msra.mxu0 0.0
    %2909 = vmatprep.subr.mxu0 0.0
    %2910 = vmatpush1.msra.mxu0 0.0
    %2911 = vmatprep.subr.mxu0 0.0
    %2912 = vmatpush1.msra.mxu0 0.0
    %2913 = vmatprep.subr.mxu0 0.0
    %2914 = vmatpush1.msra.mxu0 0.0
    %2915 = vmatprep.subr.mxu0 0.0
    %2916 = vmatpush1.msra.mxu0 0.0
    %2917 = vmatprep.subr.mxu0 0.0
    %2918 = vmatpush1.msra.mxu0 0.0
    %2919 = vmatprep.subr.mxu0 0.0
    %2920 = vmatpush1.msra.mxu0 0.0
    %2921 = vmatprep.mubr.f32.mxu0 0.0
    %2922 = vmatmul.mubr.f32.gmra.mrb[0].mxu0 %v2853
    %v2923 = vpop.f32.mrb[0].mxu0
    %v2924 = vadd.f32 %v2515, %v2923
    %v2925 = vpop.f32.mrb[0].mxu0
    %v2926 = vadd.f32 %v2519, %v2925
    %2927 = vdwg.mxu0
    %2928 = vmatprep.subr.mxu0 0.0
    %2929 = vmatpush1.msra.mxu0 %v2461
    %2930 = vmatprep.subr.mxu0 0.0
    %2931 = vmatpush1.msra.mxu0 %v2464
    %2932 = vmatprep.subr.mxu0 0.0
    %2933 = vmatpush1.msra.mxu0 %v2467
    %2934 = vmatprep.subr.mxu0 0.0
    %2935 = vmatpush1.msra.mxu0 %v2470
    %2936 = vmatprep.subr.mxu0 0.0
    %2937 = vmatpush1.msra.mxu0 %v2473
    %2938 = vmatprep.subr.mxu0 0.0
    %2939 = vmatpush1.msra.mxu0 %v2476
    %2940 = vmatprep.subr.mxu0 0.0
    %2941 = vmatpush1.msra.mxu0 %v2479
    %2942 = vmatprep.subr.mxu0 0.0
    %2943 = vmatpush1.msra.mxu0 %v2482
    %2944 = vmatprep.subr.mxu0 0.0
    %2945 = vmatpush1.msra.mxu0 %v2485
    %2946 = vmatprep.subr.mxu0 0.0
    %2947 = vmatpush1.msra.mxu0 %v2488
    %2948 = vmatprep.subr.mxu0 0.0
    %2949 = vmatpush1.msra.mxu0 %v2491
    %2950 = vmatprep.subr.mxu0 0.0
    %2951 = vmatpush1.msra.mxu0 %v2494
    %2952 = vmatprep.subr.mxu0 0.0
    %2953 = vmatpush1.msra.mxu0 %v2497
    %2954 = vmatprep.subr.mxu0 0.0
    %2955 = vmatpush1.msra.mxu0 %v2500
    %2956 = vmatprep.subr.mxu0 0.0
    %2957 = vmatpush1.msra.mxu0 %v2503
    %2958 = vmatprep.subr.mxu0 0.0
    %2959 = vmatpush1.msra.mxu0 %v2506
    %2960 = vmatprep.subr.mxu0 0.0
    %2961 = vmatpush1.msra.mxu0 0.0
    %2962 = vmatprep.subr.mxu0 0.0
    %2963 = vmatpush1.msra.mxu0 0.0
    %2964 = vmatprep.subr.mxu0 0.0
    %2965 = vmatpush1.msra.mxu0 0.0
    %2966 = vmatprep.subr.mxu0 0.0
    %2967 = vmatpush1.msra.mxu0 0.0
    %2968 = vmatprep.subr.mxu0 0.0
    %2969 = vmatpush1.msra.mxu0 0.0
    %2970 = vmatprep.subr.mxu0 0.0
    %2971 = vmatpush1.msra.mxu0 0.0
    %2972 = vmatprep.subr.mxu0 0.0
    %2973 = vmatpush1.msra.mxu0 0.0
    %2974 = vmatprep.subr.mxu0 0.0
    %2975 = vmatpush1.msra.mxu0 0.0
    %2976 = vmatprep.subr.mxu0 0.0
    %2977 = vmatpush1.msra.mxu0 0.0
    %2978 = vmatprep.subr.mxu0 0.0
    %2979 = vmatpush1.msra.mxu0 0.0
    %2980 = vmatprep.subr.mxu0 0.0
    %2981 = vmatpush1.msra.mxu0 0.0
    %2982 = vmatprep.subr.mxu0 0.0
    %2983 = vmatpush1.msra.mxu0 0.0
    %2984 = vmatprep.subr.mxu0 0.0
    %2985 = vmatpush1.msra.mxu0 0.0
    %2986 = vmatprep.subr.mxu0 0.0
    %2987 = vmatpush1.msra.mxu0 0.0
    %2988 = vmatprep.subr.mxu0 0.0
    %2989 = vmatpush1.msra.mxu0 0.0
    %2990 = vmatprep.subr.mxu0 0.0
    %2991 = vmatpush1.msra.mxu0 0.0
    %2992 = vmatprep.mubr.f32.mxu0 0.0
    %2993 = vmatmul.mubr.f32.gmra.mrb[0].mxu0 %v2853
    %v2994 = vpop.f32.mrb[0].mxu0
    %v2995 = vadd.f32 %v2523, %v2994
    %v2996 = vpop.f32.mrb[0].mxu0
    %2997 = vdwg.mxu0
    %v2998 = vadd.f32 %v2854, %v2924
    %v2999 = vxor.u32 %v2998, 2147483648
    %v3000 = vmul.f32 %v2999, 1.442695
    %v3001 = vpow.pop %v3000
    %v3002 = vadd.f32 %v3001, 1.0
    %v3003 = vrcp.pop %v3002
    %v3004 = vmul.f32 1.0, %v3003
    %v3005 = vadd.f32 %v2855, %v2926
    %v3006 = vxor.u32 %v3005, 2147483648
    %v3007 = vmul.f32 %v3006, 1.442695
    %v3008 = vpow.pop %v3007
    %v3009 = vadd.f32 %v3008, 1.0
    %v3010 = vrcp.pop %v3009
    %v3011 = vmul.f32 1.0, %v3010
    %v3012 = vmul.f32 %v3004, %v2995
    %v3013 = vadd.f32 %v2856, %v3012
    %v3014 = vtanh.pop %v3013
    %v3015 = vsub.f32 1.0, %v3011
    %v3016 = vmul.f32 %v3015, %v3014
    %v3017 = vmul.f32 %v3011, %v2853
    %v3018 = vadd.f32 %v3016, %v3017
    %v3019 = vsel %vm174, %v2444, %v2447
    %v3020 = vsel %vm175, %v2445, %v2448
    %v3021 = vsel %vm176, %v2446, %v2449
    %3022 = vmatprep.subr.mxu0 %v2460
    %3023 = vmatpush1.msra.mxu0 %v2459
    %3024 = vmatprep.subr.mxu0 %v2463
    %3025 = vmatpush1.msra.mxu0 %v2462
    %3026 = vmatprep.subr.mxu0 %v2466
    %3027 = vmatpush1.msra.mxu0 %v2465
    %3028 = vmatprep.subr.mxu0 %v2469
    %3029 = vmatpush1.msra.mxu0 %v2468
    %3030 = vmatprep.subr.mxu0 %v2472
    %3031 = vmatpush1.msra.mxu0 %v2471
    %3032 = vmatprep.subr.mxu0 %v2475
    %3033 = vmatpush1.msra.mxu0 %v2474
    %3034 = vmatprep.subr.mxu0 %v2478
    %3035 = vmatpush1.msra.mxu0 %v2477
    %3036 = vmatprep.subr.mxu0 %v2481
    %3037 = vmatpush1.msra.mxu0 %v2480
    %3038 = vmatprep.subr.mxu0 %v2484
    %3039 = vmatpush1.msra.mxu0 %v2483
    %3040 = vmatprep.subr.mxu0 %v2487
    %3041 = vmatpush1.msra.mxu0 %v2486
    %3042 = vmatprep.subr.mxu0 %v2490
    %3043 = vmatpush1.msra.mxu0 %v2489
    %3044 = vmatprep.subr.mxu0 %v2493
    %3045 = vmatpush1.msra.mxu0 %v2492
    %3046 = vmatprep.subr.mxu0 %v2496
    %3047 = vmatpush1.msra.mxu0 %v2495
    %3048 = vmatprep.subr.mxu0 %v2499
    %3049 = vmatpush1.msra.mxu0 %v2498
    %3050 = vmatprep.subr.mxu0 %v2502
    %3051 = vmatpush1.msra.mxu0 %v2501
    %3052 = vmatprep.subr.mxu0 %v2505
    %3053 = vmatpush1.msra.mxu0 %v2504
    %3054 = vmatprep.subr.mxu0 0.0
    %3055 = vmatpush1.msra.mxu0 0.0
    %3056 = vmatprep.subr.mxu0 0.0
    %3057 = vmatpush1.msra.mxu0 0.0
    %3058 = vmatprep.subr.mxu0 0.0
    %3059 = vmatpush1.msra.mxu0 0.0
    %3060 = vmatprep.subr.mxu0 0.0
    %3061 = vmatpush1.msra.mxu0 0.0
    %3062 = vmatprep.subr.mxu0 0.0
    %3063 = vmatpush1.msra.mxu0 0.0
    %3064 = vmatprep.subr.mxu0 0.0
    %3065 = vmatpush1.msra.mxu0 0.0
    %3066 = vmatprep.subr.mxu0 0.0
    %3067 = vmatpush1.msra.mxu0 0.0
    %3068 = vmatprep.subr.mxu0 0.0
    %3069 = vmatpush1.msra.mxu0 0.0
    %3070 = vmatprep.subr.mxu0 0.0
    %3071 = vmatpush1.msra.mxu0 0.0
    %3072 = vmatprep.subr.mxu0 0.0
    %3073 = vmatpush1.msra.mxu0 0.0
    %3074 = vmatprep.subr.mxu0 0.0
    %3075 = vmatpush1.msra.mxu0 0.0
    %3076 = vmatprep.subr.mxu0 0.0
    %3077 = vmatpush1.msra.mxu0 0.0
    %3078 = vmatprep.subr.mxu0 0.0
    %3079 = vmatpush1.msra.mxu0 0.0
    %3080 = vmatprep.subr.mxu0 0.0
    %3081 = vmatpush1.msra.mxu0 0.0
    %3082 = vmatprep.subr.mxu0 0.0
    %3083 = vmatpush1.msra.mxu0 0.0
    %3084 = vmatprep.subr.mxu0 0.0
    %3085 = vmatpush1.msra.mxu0 0.0
    %3086 = vmatprep.mubr.f32.mxu0 0.0
    %3087 = vmatmul.mubr.f32.gmra.mrb[0].mxu0 %v3018
    %v3088 = vpop.f32.mrb[0].mxu0
    %v3089 = vadd.f32 %v2515, %v3088
    %v3090 = vpop.f32.mrb[0].mxu0
    %v3091 = vadd.f32 %v2519, %v3090
    %3092 = vdwg.mxu0
    %3093 = vmatprep.subr.mxu0 0.0
    %3094 = vmatpush1.msra.mxu0 %v2461
    %3095 = vmatprep.subr.mxu0 0.0
    %3096 = vmatpush1.msra.mxu0 %v2464
    %3097 = vmatprep.subr.mxu0 0.0
    %3098 = vmatpush1.msra.mxu0 %v2467
    %3099 = vmatprep.subr.mxu0 0.0
    %3100 = vmatpush1.msra.mxu0 %v2470
    %3101 = vmatprep.subr.mxu0 0.0
    %3102 = vmatpush1.msra.mxu0 %v2473
    %3103 = vmatprep.subr.mxu0 0.0
    %3104 = vmatpush1.msra.mxu0 %v2476
    %3105 = vmatprep.subr.mxu0 0.0
    %3106 = vmatpush1.msra.mxu0 %v2479
    %3107 = vmatprep.subr.mxu0 0.0
    %3108 = vmatpush1.msra.mxu0 %v2482
    %3109 = vmatprep.subr.mxu0 0.0
    %3110 = vmatpush1.msra.mxu0 %v2485
    %3111 = vmatprep.subr.mxu0 0.0
    %3112 = vmatpush1.msra.mxu0 %v2488
    %3113 = vmatprep.subr.mxu0 0.0
    %3114 = vmatpush1.msra.mxu0 %v2491
    %3115 = vmatprep.subr.mxu0 0.0
    %3116 = vmatpush1.msra.mxu0 %v2494
    %3117 = vmatprep.subr.mxu0 0.0
    %3118 = vmatpush1.msra.mxu0 %v2497
    %3119 = vmatprep.subr.mxu0 0.0
    %3120 = vmatpush1.msra.mxu0 %v2500
    %3121 = vmatprep.subr.mxu0 0.0
    %3122 = vmatpush1.msra.mxu0 %v2503
    %3123 = vmatprep.subr.mxu0 0.0
    %3124 = vmatpush1.msra.mxu0 %v2506
    %3125 = vmatprep.subr.mxu0 0.0
    %3126 = vmatpush1.msra.mxu0 0.0
    %3127 = vmatprep.subr.mxu0 0.0
    %3128 = vmatpush1.msra.mxu0 0.0
    %3129 = vmatprep.subr.mxu0 0.0
    %3130 = vmatpush1.msra.mxu0 0.0
    %3131 = vmatprep.subr.mxu0 0.0
    %3132 = vmatpush1.msra.mxu0 0.0
    %3133 = vmatprep.subr.mxu0 0.0
    %3134 = vmatpush1.msra.mxu0 0.0
    %3135 = vmatprep.subr.mxu0 0.0
    %3136 = vmatpush1.msra.mxu0 0.0
    %3137 = vmatprep.subr.mxu0 0.0
    %3138 = vmatpush1.msra.mxu0 0.0
    %3139 = vmatprep.subr.mxu0 0.0
    %3140 = vmatpush1.msra.mxu0 0.0
    %3141 = vmatprep.subr.mxu0 0.0
    %3142 = vmatpush1.msra.mxu0 0.0
    %3143 = vmatprep.subr.mxu0 0.0
    %3144 = vmatpush1.msra.mxu0 0.0
    %3145 = vmatprep.subr.mxu0 0.0
    %3146 = vmatpush1.msra.mxu0 0.0
    %3147 = vmatprep.subr.mxu0 0.0
    %3148 = vmatpush1.msra.mxu0 0.0
    %3149 = vmatprep.subr.mxu0 0.0
    %3150 = vmatpush1.msra.mxu0 0.0
    %3151 = vmatprep.subr.mxu0 0.0
    %3152 = vmatpush1.msra.mxu0 0.0
    %3153 = vmatprep.subr.mxu0 0.0
    %3154 = vmatpush1.msra.mxu0 0.0
    %3155 = vmatprep.subr.mxu0 0.0
    %3156 = vmatpush1.msra.mxu0 0.0
    %3157 = vmatprep.mubr.f32.mxu0 0.0
    %3158 = vmatmul.mubr.f32.gmra.mrb[0].mxu0 %v3018
    %v3159 = vpop.f32.mrb[0].mxu0
    %v3160 = vadd.f32 %v2523, %v3159
    %v3161 = vpop.f32.mrb[0].mxu0
    %3162 = vdwg.mxu0
    %v3163 = vadd.f32 %v3019, %v3089
    %v3164 = vxor.u32 %v3163, 2147483648
    %v3165 = vmul.f32 %v3164, 1.442695
    %v3166 = vpow.pop %v3165
    %v3167 = vadd.f32 %v3166, 1.0
    %v3168 = vrcp.pop %v3167
    %v3169 = vmul.f32 1.0, %v3168
    %v3170 = vadd.f32 %v3020, %v3091
    %v3171 = vxor.u32 %v3170, 2147483648
    %v3172 = vmul.f32 %v3171, 1.442695
    %v3173 = vpow.pop %v3172
    %v3174 = vadd.f32 %v3173, 1.0
    %v3175 = vrcp.pop %v3174
    %v3176 = vmul.f32 1.0, %v3175
    %v3177 = vmul.f32 %v3169, %v3160
    %v3178 = vadd.f32 %v3021, %v3177
    %v3179 = vtanh.pop %v3178
    %v3180 = vsub.f32 1.0, %v3176
    %v3181 = vmul.f32 %v3180, %v3179
    %v3182 = vmul.f32 %v3176, %v3018
    %v3183 = vadd.f32 %v3181, %v3182
    %v3184 = vsel %vm174, %v2447, %v2444
    %v3185 = vsel %vm175, %v2448, %v2445
    %v3186 = vsel %vm176, %v2449, %v2446
    %3187 = vmatprep.subr.mxu0 %v2460
    %3188 = vmatpush1.msra.mxu0 %v2459
    %3189 = vmatprep.subr.mxu0 %v2463
    %3190 = vmatpush1.msra.mxu0 %v2462
    %3191 = vmatprep.subr.mxu0 %v2466
    %3192 = vmatpush1.msra.mxu0 %v2465
    %3193 = vmatprep.subr.mxu0 %v2469
    %3194 = vmatpush1.msra.mxu0 %v2468
    %3195 = vmatprep.subr.mxu0 %v2472
    %3196 = vmatpush1.msra.mxu0 %v2471
    %3197 = vmatprep.subr.mxu0 %v2475
    %3198 = vmatpush1.msra.mxu0 %v2474
    %3199 = vmatprep.subr.mxu0 %v2478
    %3200 = vmatpush1.msra.mxu0 %v2477
    %3201 = vmatprep.subr.mxu0 %v2481
    %3202 = vmatpush1.msra.mxu0 %v2480
    %3203 = vmatprep.subr.mxu0 %v2484
    %3204 = vmatpush1.msra.mxu0 %v2483
    %3205 = vmatprep.subr.mxu0 %v2487
    %3206 = vmatpush1.msra.mxu0 %v2486
    %3207 = vmatprep.subr.mxu0 %v2490
    %3208 = vmatpush1.msra.mxu0 %v2489
    %3209 = vmatprep.subr.mxu0 %v2493
    %3210 = vmatpush1.msra.mxu0 %v2492
    %3211 = vmatprep.subr.mxu0 %v2496
    %3212 = vmatpush1.msra.mxu0 %v2495
    %3213 = vmatprep.subr.mxu0 %v2499
    %3214 = vmatpush1.msra.mxu0 %v2498
    %3215 = vmatprep.subr.mxu0 %v2502
    %3216 = vmatpush1.msra.mxu0 %v2501
    %3217 = vmatprep.subr.mxu0 %v2505
    %3218 = vmatpush1.msra.mxu0 %v2504
    %3219 = vmatprep.subr.mxu0 0.0
    %3220 = vmatpush1.msra.mxu0 0.0
    %3221 = vmatprep.subr.mxu0 0.0
    %3222 = vmatpush1.msra.mxu0 0.0
    %3223 = vmatprep.subr.mxu0 0.0
    %3224 = vmatpush1.msra.mxu0 0.0
    %3225 = vmatprep.subr.mxu0 0.0
    %3226 = vmatpush1.msra.mxu0 0.0
    %3227 = vmatprep.subr.mxu0 0.0
    %3228 = vmatpush1.msra.mxu0 0.0
    %3229 = vmatprep.subr.mxu0 0.0
    %3230 = vmatpush1.msra.mxu0 0.0
    %3231 = vmatprep.subr.mxu0 0.0
    %3232 = vmatpush1.msra.mxu0 0.0
    %3233 = vmatprep.subr.mxu0 0.0
    %3234 = vmatpush1.msra.mxu0 0.0
    %3235 = vmatprep.subr.mxu0 0.0
    %3236 = vmatpush1.msra.mxu0 0.0
    %3237 = vmatprep.subr.mxu0 0.0
    %3238 = vmatpush1.msra.mxu0 0.0
    %3239 = vmatprep.subr.mxu0 0.0
    %3240 = vmatpush1.msra.mxu0 0.0
    %3241 = vmatprep.subr.mxu0 0.0
    %3242 = vmatpush1.msra.mxu0 0.0
    %3243 = vmatprep.subr.mxu0 0.0
    %3244 = vmatpush1.msra.mxu0 0.0
    %3245 = vmatprep.subr.mxu0 0.0
    %3246 = vmatpush1.msra.mxu0 0.0
    %3247 = vmatprep.subr.mxu0 0.0
    %3248 = vmatpush1.msra.mxu0 0.0
    %3249 = vmatprep.subr.mxu0 0.0
    %3250 = vmatpush1.msra.mxu0 0.0
    %3251 = vmatprep.mubr.f32.mxu0 0.0
    %3252 = vmatmul.mubr.f32.gmra.mrb[0].mxu0 %v3183
    %v3253 = vpop.f32.mrb[0].mxu0
    %v3254 = vadd.f32 %v2515, %v3253
    %v3255 = vpop.f32.mrb[0].mxu0
    %v3256 = vadd.f32 %v2519, %v3255
    %3257 = vdwg.mxu0
    %3258 = vmatprep.subr.mxu0 0.0
    %3259 = vmatpush1.msra.mxu0 %v2461
    %3260 = vmatprep.subr.mxu0 0.0
    %3261 = vmatpush1.msra.mxu0 %v2464
    %3262 = vmatprep.subr.mxu0 0.0
    %3263 = vmatpush1.msra.mxu0 %v2467
    %3264 = vmatprep.subr.mxu0 0.0
    %3265 = vmatpush1.msra.mxu0 %v2470
    %3266 = vmatprep.subr.mxu0 0.0
    %3267 = vmatpush1.msra.mxu0 %v2473
    %3268 = vmatprep.subr.mxu0 0.0
    %3269 = vmatpush1.msra.mxu0 %v2476
    %3270 = vmatprep.subr.mxu0 0.0
    %3271 = vmatpush1.msra.mxu0 %v2479
    %3272 = vmatprep.subr.mxu0 0.0
    %3273 = vmatpush1.msra.mxu0 %v2482
    %3274 = vmatprep.subr.mxu0 0.0
    %3275 = vmatpush1.msra.mxu0 %v2485
    %3276 = vmatprep.subr.mxu0 0.0
    %3277 = vmatpush1.msra.mxu0 %v2488
    %3278 = vmatprep.subr.mxu0 0.0
    %3279 = vmatpush1.msra.mxu0 %v2491
    %3280 = vmatprep.subr.mxu0 0.0
    %3281 = vmatpush1.msra.mxu0 %v2494
    %3282 = vmatprep.subr.mxu0 0.0
    %3283 = vmatpush1.msra.mxu0 %v2497
    %3284 = vmatprep.subr.mxu0 0.0
    %3285 = vmatpush1.msra.mxu0 %v2500
    %3286 = vmatprep.subr.mxu0 0.0
    %3287 = vmatpush1.msra.mxu0 %v2503
    %3288 = vmatprep.subr.mxu0 0.0
    %3289 = vmatpush1.msra.mxu0 %v2506
    %3290 = vmatprep.subr.mxu0 0.0
    %3291 = vmatpush1.msra.mxu0 0.0
    %3292 = vmatprep.subr.mxu0 0.0
    %3293 = vmatpush1.msra.mxu0 0.0
    %3294 = vmatprep.subr.mxu0 0.0
    %3295 = vmatpush1.msra.mxu0 0.0
    %3296 = vmatprep.subr.mxu0 0.0
    %3297 = vmatpush1.msra.mxu0 0.0
    %3298 = vmatprep.subr.mxu0 0.0
    %3299 = vmatpush1.msra.mxu0 0.0
    %3300 = vmatprep.subr.mxu0 0.0
    %3301 = vmatpush1.msra.mxu0 0.0
    %3302 = vmatprep.subr.mxu0 0.0
    %3303 = vmatpush1.msra.mxu0 0.0
    %3304 = vmatprep.subr.mxu0 0.0
    %3305 = vmatpush1.msra.mxu0 0.0
    %3306 = vmatprep.subr.mxu0 0.0
    %3307 = vmatpush1.msra.mxu0 0.0
    %3308 = vmatprep.subr.mxu0 0.0
    %3309 = vmatpush1.msra.mxu0 0.0
    %3310 = vmatprep.subr.mxu0 0.0
    %3311 = vmatpush1.msra.mxu0 0.0
    %3312 = vmatprep.subr.mxu0 0.0
    %3313 = vmatpush1.msra.mxu0 0.0
    %3314 = vmatprep.subr.mxu0 0.0
    %3315 = vmatpush1.msra.mxu0 0.0
    %3316 = vmatprep.subr.mxu0 0.0
    %3317 = vmatpush1.msra.mxu0 0.0
    %3318 = vmatprep.subr.mxu0 0.0
    %3319 = vmatpush1.msra.mxu0 0.0
    %3320 = vmatprep.subr.mxu0 0.0
    %3321 = vmatpush1.msra.mxu0 0.0
    %3322 = vmatprep.mubr.f32.mxu0 0.0
    %3323 = vmatmul.mubr.f32.gmra.mrb[0].mxu0 %v3183
    %v3324 = vpop.f32.mrb[0].mxu0
    %v3325 = vadd.f32 %v2523, %v3324
    %v3326 = vpop.f32.mrb[0].mxu0
    %3327 = vdwg.mxu0
    %v3328 = vadd.f32 %v3184, %v3254
    %v3329 = vxor.u32 %v3328, 2147483648
    %v3330 = vmul.f32 %v3329, 1.442695
    %v3331 = vpow.pop %v3330
    %v3332 = vadd.f32 %v3331, 1.0
    %v3333 = vrcp.pop %v3332
    %v3334 = vmul.f32 1.0, %v3333
    %v3335 = vadd.f32 %v3185, %v3256
    %v3336 = vxor.u32 %v3335, 2147483648
    %v3337 = vmul.f32 %v3336, 1.442695
    %v3338 = vpow.pop %v3337
    %v3339 = vadd.f32 %v3338, 1.0
    %v3340 = vrcp.pop %v3339
    %v3341 = vmul.f32 1.0, %v3340
    %v3342 = vmul.f32 %v3334, %v3325
    %v3343 = vadd.f32 %v3186, %v3342
    %v3344 = vtanh.pop %v3343
    %v3345 = vsub.f32 1.0, %v3341
    %v3346 = vmul.f32 %v3345, %v3344
    %v3347 = vmul.f32 %v3341, %v3183
    %v3348 = vadd.f32 %v3346, %v3347
    %v3349 = vsel %vm174, %v2450, %v2441
    %v3350 = vsel %vm175, %v2451, %v2442
    %v3351 = vsel %vm176, %v2452, %v2443
    %3352 = vmatprep.subr.mxu0 %v2460
    %3353 = vmatpush1.msra.mxu0 %v2459
    %3354 = vmatprep.subr.mxu0 %v2463
    %3355 = vmatpush1.msra.mxu0 %v2462
    %3356 = vmatprep.subr.mxu0 %v2466
    %3357 = vmatpush1.msra.mxu0 %v2465
    %3358 = vmatprep.subr.mxu0 %v2469
    %3359 = vmatpush1.msra.mxu0 %v2468
    %3360 = vmatprep.subr.mxu0 %v2472
    %3361 = vmatpush1.msra.mxu0 %v2471
    %3362 = vmatprep.subr.mxu0 %v2475
    %3363 = vmatpush1.msra.mxu0 %v2474
    %3364 = vmatprep.subr.mxu0 %v2478
    %3365 = vmatpush1.msra.mxu0 %v2477
    %3366 = vmatprep.subr.mxu0 %v2481
    %3367 = vmatpush1.msra.mxu0 %v2480
    %3368 = vmatprep.subr.mxu0 %v2484
    %3369 = vmatpush1.msra.mxu0 %v2483
    %3370 = vmatprep.subr.mxu0 %v2487
    %3371 = vmatpush1.msra.mxu0 %v2486
    %3372 = vmatprep.subr.mxu0 %v2490
    %3373 = vmatpush1.msra.mxu0 %v2489
    %3374 = vmatprep.subr.mxu0 %v2493
    %3375 = vmatpush1.msra.mxu0 %v2492
    %3376 = vmatprep.subr.mxu0 %v2496
    %3377 = vmatpush1.msra.mxu0 %v2495
    %3378 = vmatprep.subr.mxu0 %v2499
    %3379 = vmatpush1.msra.mxu0 %v2498
    %3380 = vmatprep.subr.mxu0 %v2502
    %3381 = vmatpush1.msra.mxu0 %v2501
    %3382 = vmatprep.subr.mxu0 %v2505
    %3383 = vmatpush1.msra.mxu0 %v2504
    %3384 = vmatprep.subr.mxu0 0.0
    %3385 = vmatpush1.msra.mxu0 0.0
    %3386 = vmatprep.subr.mxu0 0.0
    %3387 = vmatpush1.msra.mxu0 0.0
    %3388 = vmatprep.subr.mxu0 0.0
    %3389 = vmatpush1.msra.mxu0 0.0
    %3390 = vmatprep.subr.mxu0 0.0
    %3391 = vmatpush1.msra.mxu0 0.0
    %3392 = vmatprep.subr.mxu0 0.0
    %3393 = vmatpush1.msra.mxu0 0.0
    %3394 = vmatprep.subr.mxu0 0.0
    %3395 = vmatpush1.msra.mxu0 0.0
    %3396 = vmatprep.subr.mxu0 0.0
    %3397 = vmatpush1.msra.mxu0 0.0
    %3398 = vmatprep.subr.mxu0 0.0
    %3399 = vmatpush1.msra.mxu0 0.0
    %3400 = vmatprep.subr.mxu0 0.0
    %3401 = vmatpush1.msra.mxu0 0.0
    %3402 = vmatprep.subr.mxu0 0.0
    %3403 = vmatpush1.msra.mxu0 0.0
    %3404 = vmatprep.subr.mxu0 0.0
    %3405 = vmatpush1.msra.mxu0 0.0
    %3406 = vmatprep.subr.mxu0 0.0
    %3407 = vmatpush1.msra.mxu0 0.0
    %3408 = vmatprep.subr.mxu0 0.0
    %3409 = vmatpush1.msra.mxu0 0.0
    %3410 = vmatprep.subr.mxu0 0.0
    %3411 = vmatpush1.msra.mxu0 0.0
    %3412 = vmatprep.subr.mxu0 0.0
    %3413 = vmatpush1.msra.mxu0 0.0
    %3414 = vmatprep.subr.mxu0 0.0
    %3415 = vmatpush1.msra.mxu0 0.0
    %3416 = vmatprep.mubr.f32.mxu0 0.0
    %3417 = vmatmul.mubr.f32.gmra.mrb[0].mxu0 %v3348
    %v3418 = vpop.f32.mrb[0].mxu0
    %v3419 = vadd.f32 %v2515, %v3418
    %v3420 = vpop.f32.mrb[0].mxu0
    %v3421 = vadd.f32 %v2519, %v3420
    %3422 = vdwg.mxu0
    %3423 = vmatprep.subr.mxu0 0.0
    %3424 = vmatpush1.msra.mxu0 %v2461
    %3425 = vmatprep.subr.mxu0 0.0
    %3426 = vmatpush1.msra.mxu0 %v2464
    %3427 = vmatprep.subr.mxu0 0.0
    %3428 = vmatpush1.msra.mxu0 %v2467
    %3429 = vmatprep.subr.mxu0 0.0
    %3430 = vmatpush1.msra.mxu0 %v2470
    %3431 = vmatprep.subr.mxu0 0.0
    %3432 = vmatpush1.msra.mxu0 %v2473
    %3433 = vmatprep.subr.mxu0 0.0
    %3434 = vmatpush1.msra.mxu0 %v2476
    %3435 = vmatprep.subr.mxu0 0.0
    %3436 = vmatpush1.msra.mxu0 %v2479
    %3437 = vmatprep.subr.mxu0 0.0
    %3438 = vmatpush1.msra.mxu0 %v2482
    %3439 = vmatprep.subr.mxu0 0.0
    %3440 = vmatpush1.msra.mxu0 %v2485
    %3441 = vmatprep.subr.mxu0 0.0
    %3442 = vmatpush1.msra.mxu0 %v2488
    %3443 = vmatprep.subr.mxu0 0.0
    %3444 = vmatpush1.msra.mxu0 %v2491
    %3445 = vmatprep.subr.mxu0 0.0
    %3446 = vmatpush1.msra.mxu0 %v2494
    %3447 = vmatprep.subr.mxu0 0.0
    %3448 = vmatpush1.msra.mxu0 %v2497
    %3449 = vmatprep.subr.mxu0 0.0
    %3450 = vmatpush1.msra.mxu0 %v2500
    %3451 = vmatprep.subr.mxu0 0.0
    %3452 = vmatpush1.msra.mxu0 %v2503
    %3453 = vmatprep.subr.mxu0 0.0
    %3454 = vmatpush1.msra.mxu0 %v2506
    %3455 = vmatprep.subr.mxu0 0.0
    %3456 = vmatpush1.msra.mxu0 0.0
    %3457 = vmatprep.subr.mxu0 0.0
    %3458 = vmatpush1.msra.mxu0 0.0
    %3459 = vmatprep.subr.mxu0 0.0
    %3460 = vmatpush1.msra.mxu0 0.0
    %3461 = vmatprep.subr.mxu0 0.0
    %3462 = vmatpush1.msra.mxu0 0.0
    %3463 = vmatprep.subr.mxu0 0.0
    %3464 = vmatpush1.msra.mxu0 0.0
    %3465 = vmatprep.subr.mxu0 0.0
    %3466 = vmatpush1.msra.mxu0 0.0
    %3467 = vmatprep.subr.mxu0 0.0
    %3468 = vmatpush1.msra.mxu0 0.0
    %3469 = vmatprep.subr.mxu0 0.0
    %3470 = vmatpush1.msra.mxu0 0.0
    %3471 = vmatprep.subr.mxu0 0.0
    %3472 = vmatpush1.msra.mxu0 0.0
    %3473 = vmatprep.subr.mxu0 0.0
    %3474 = vmatpush1.msra.mxu0 0.0
    %3475 = vmatprep.subr.mxu0 0.0
    %3476 = vmatpush1.msra.mxu0 0.0
    %3477 = vmatprep.subr.mxu0 0.0
    %3478 = vmatpush1.msra.mxu0 0.0
    %3479 = vmatprep.subr.mxu0 0.0
    %3480 = vmatpush1.msra.mxu0 0.0
    %3481 = vmatprep.subr.mxu0 0.0
    %3482 = vmatpush1.msra.mxu0 0.0
    %3483 = vmatprep.subr.mxu0 0.0
    %3484 = vmatpush1.msra.mxu0 0.0
    %3485 = vmatprep.subr.mxu0 0.0
    %3486 = vmatpush1.msra.mxu0 0.0
    %3487 = vmatprep.mubr.f32.mxu0 0.0
    %3488 = vmatmul.mubr.f32.gmra.mrb[0].mxu0 %v3348
    %v3489 = vpop.f32.mrb[0].mxu0
    %v3490 = vadd.f32 %v2523, %v3489
    %v3491 = vpop.f32.mrb[0].mxu0
    %3492 = vdwg.mxu0
    %v3493 = vadd.f32 %v3349, %v3419
    %v3494 = vxor.u32 %v3493, 2147483648
    %v3495 = vmul.f32 %v3494, 1.442695
    %v3496 = vpow.pop %v3495
    %v3497 = vadd.f32 %v3496, 1.0
    %v3498 = vrcp.pop %v3497
    %v3499 = vmul.f32 1.0, %v3498
    %v3500 = vadd.f32 %v3350, %v3421
    %v3501 = vxor.u32 %v3500, 2147483648
    %v3502 = vmul.f32 %v3501, 1.442695
    %v3503 = vpow.pop %v3502
    %v3504 = vadd.f32 %v3503, 1.0
    %v3505 = vrcp.pop %v3504
    %v3506 = vmul.f32 1.0, %v3505
    %v3507 = vmul.f32 %v3499, %v3490
    %v3508 = vadd.f32 %v3351, %v3507
    %v3509 = vtanh.pop %v3508
    %v3510 = vsub.f32 1.0, %v3506
    %v3511 = vmul.f32 %v3510, %v3509
    %v3512 = vmul.f32 %v3506, %v3348
    %v3513 = vadd.f32 %v3511, %v3512
    %v3514 = vsel %vm174, %v2453, %v2438
    %v3515 = vsel %vm175, %v2454, %v2439
    %v3516 = vsel %vm176, %v2455, %v2440
    %3517 = vmatprep.subr.mxu0 %v2460
    %3518 = vmatpush1.msra.mxu0 %v2459
    %3519 = vmatprep.subr.mxu0 %v2463
    %3520 = vmatpush1.msra.mxu0 %v2462
    %3521 = vmatprep.subr.mxu0 %v2466
    %3522 = vmatpush1.msra.mxu0 %v2465
    %3523 = vmatprep.subr.mxu0 %v2469
    %3524 = vmatpush1.msra.mxu0 %v2468
    %3525 = vmatprep.subr.mxu0 %v2472
    %3526 = vmatpush1.msra.mxu0 %v2471
    %3527 = vmatprep.subr.mxu0 %v2475
    %3528 = vmatpush1.msra.mxu0 %v2474
    %3529 = vmatprep.subr.mxu0 %v2478
    %3530 = vmatpush1.msra.mxu0 %v2477
    %3531 = vmatprep.subr.mxu0 %v2481
    %3532 = vmatpush1.msra.mxu0 %v2480
    %3533 = vmatprep.subr.mxu0 %v2484
    %3534 = vmatpush1.msra.mxu0 %v2483
    %3535 = vmatprep.subr.mxu0 %v2487
    %3536 = vmatpush1.msra.mxu0 %v2486
    %3537 = vmatprep.subr.mxu0 %v2490
    %3538 = vmatpush1.msra.mxu0 %v2489
    %3539 = vmatprep.subr.mxu0 %v2493
    %3540 = vmatpush1.msra.mxu0 %v2492
    %3541 = vmatprep.subr.mxu0 %v2496
    %3542 = vmatpush1.msra.mxu0 %v2495
    %3543 = vmatprep.subr.mxu0 %v2499
    %3544 = vmatpush1.msra.mxu0 %v2498
    %3545 = vmatprep.subr.mxu0 %v2502
    %3546 = vmatpush1.msra.mxu0 %v2501
    %3547 = vmatprep.subr.mxu0 %v2505
    %3548 = vmatpush1.msra.mxu0 %v2504
    %3549 = vmatprep.subr.mxu0 0.0
    %3550 = vmatpush1.msra.mxu0 0.0
    %3551 = vmatprep.subr.mxu0 0.0
    %3552 = vmatpush1.msra.mxu0 0.0
    %3553 = vmatprep.subr.mxu0 0.0
    %3554 = vmatpush1.msra.mxu0 0.0
    %3555 = vmatprep.subr.mxu0 0.0
    %3556 = vmatpush1.msra.mxu0 0.0
    %3557 = vmatprep.subr.mxu0 0.0
    %3558 = vmatpush1.msra.mxu0 0.0
    %3559 = vmatprep.subr.mxu0 0.0
    %3560 = vmatpush1.msra.mxu0 0.0
    %3561 = vmatprep.subr.mxu0 0.0
    %3562 = vmatpush1.msra.mxu0 0.0
    %3563 = vmatprep.subr.mxu0 0.0
    %3564 = vmatpush1.msra.mxu0 0.0
    %3565 = vmatprep.subr.mxu0 0.0
    %3566 = vmatpush1.msra.mxu0 0.0
    %3567 = vmatprep.subr.mxu0 0.0
    %3568 = vmatpush1.msra.mxu0 0.0
    %3569 = vmatprep.subr.mxu0 0.0
    %3570 = vmatpush1.msra.mxu0 0.0
    %3571 = vmatprep.subr.mxu0 0.0
    %3572 = vmatpush1.msra.mxu0 0.0
    %3573 = vmatprep.subr.mxu0 0.0
    %3574 = vmatpush1.msra.mxu0 0.0
    %3575 = vmatprep.subr.mxu0 0.0
    %3576 = vmatpush1.msra.mxu0 0.0
    %3577 = vmatprep.subr.mxu0 0.0
    %3578 = vmatpush1.msra.mxu0 0.0
    %3579 = vmatprep.subr.mxu0 0.0
    %3580 = vmatpush1.msra.mxu0 0.0
    %3581 = vmatprep.mubr.f32.mxu0 0.0
    %3582 = vmatmul.mubr.f32.gmra.mrb[0].mxu0 %v3513
    %v3583 = vpop.f32.mrb[0].mxu0
    %v3584 = vadd.f32 %v2515, %v3583
    %v3585 = vpop.f32.mrb[0].mxu0
    %v3586 = vadd.f32 %v2519, %v3585
    %3587 = vdwg.mxu0
    %3588 = vmatprep.subr.mxu0 0.0
    %3589 = vmatpush1.msra.mxu0 %v2461
    %3590 = vmatprep.subr.mxu0 0.0
    %3591 = vmatpush1.msra.mxu0 %v2464
    %3592 = vmatprep.subr.mxu0 0.0
    %3593 = vmatpush1.msra.mxu0 %v2467
    %3594 = vmatprep.subr.mxu0 0.0
    %3595 = vmatpush1.msra.mxu0 %v2470
    %3596 = vmatprep.subr.mxu0 0.0
    %3597 = vmatpush1.msra.mxu0 %v2473
    %3598 = vmatprep.subr.mxu0 0.0
    %3599 = vmatpush1.msra.mxu0 %v2476
    %3600 = vmatprep.subr.mxu0 0.0
    %3601 = vmatpush1.msra.mxu0 %v2479
    %3602 = vmatprep.subr.mxu0 0.0
    %3603 = vmatpush1.msra.mxu0 %v2482
    %3604 = vmatprep.subr.mxu0 0.0
    %3605 = vmatpush1.msra.mxu0 %v2485
    %3606 = vmatprep.subr.mxu0 0.0
    %3607 = vmatpush1.msra.mxu0 %v2488
    %3608 = vmatprep.subr.mxu0 0.0
    %3609 = vmatpush1.msra.mxu0 %v2491
    %3610 = vmatprep.subr.mxu0 0.0
    %3611 = vmatpush1.msra.mxu0 %v2494
    %3612 = vmatprep.subr.mxu0 0.0
    %3613 = vmatpush1.msra.mxu0 %v2497
    %3614 = vmatprep.subr.mxu0 0.0
    %3615 = vmatpush1.msra.mxu0 %v2500
    %3616 = vmatprep.subr.mxu0 0.0
    %3617 = vmatpush1.msra.mxu0 %v2503
    %3618 = vmatprep.subr.mxu0 0.0
    %3619 = vmatpush1.msra.mxu0 %v2506
    %3620 = vmatprep.subr.mxu0 0.0
    %3621 = vmatpush1.msra.mxu0 0.0
    %3622 = vmatprep.subr.mxu0 0.0
    %3623 = vmatpush1.msra.mxu0 0.0
    %3624 = vmatprep.subr.mxu0 0.0
    %3625 = vmatpush1.msra.mxu0 0.0
    %3626 = vmatprep.subr.mxu0 0.0
    %3627 = vmatpush1.msra.mxu0 0.0
    %3628 = vmatprep.subr.mxu0 0.0
    %3629 = vmatpush1.msra.mxu0 0.0
    %3630 = vmatprep.subr.mxu0 0.0
    %3631 = vmatpush1.msra.mxu0 0.0
    %3632 = vmatprep.subr.mxu0 0.0
    %3633 = vmatpush1.msra.mxu0 0.0
    %3634 = vmatprep.subr.mxu0 0.0
    %3635 = vmatpush1.msra.mxu0 0.0
    %3636 = vmatprep.subr.mxu0 0.0
    %3637 = vmatpush1.msra.mxu0 0.0
    %3638 = vmatprep.subr.mxu0 0.0
    %3639 = vmatpush1.msra.mxu0 0.0
    %3640 = vmatprep.subr.mxu0 0.0
    %3641 = vmatpush1.msra.mxu0 0.0
    %3642 = vmatprep.subr.mxu0 0.0
    %3643 = vmatpush1.msra.mxu0 0.0
    %3644 = vmatprep.subr.mxu0 0.0
    %3645 = vmatpush1.msra.mxu0 0.0
    %3646 = vmatprep.subr.mxu0 0.0
    %3647 = vmatpush1.msra.mxu0 0.0
    %3648 = vmatprep.subr.mxu0 0.0
    %3649 = vmatpush1.msra.mxu0 0.0
    %3650 = vmatprep.subr.mxu0 0.0
    %3651 = vmatpush1.msra.mxu0 0.0
    %3652 = vmatprep.mubr.f32.mxu0 0.0
    %3653 = vmatmul.mubr.f32.gmra.mrb[0].mxu0 %v3513
    %v3654 = vpop.f32.mrb[0].mxu0
    %v3655 = vadd.f32 %v2523, %v3654
    %v3656 = vpop.f32.mrb[0].mxu0
    %3657 = vdwg.mxu0
    %v3658 = vadd.f32 %v3514, %v3584
    %v3659 = vxor.u32 %v3658, 2147483648
    %v3660 = vmul.f32 %v3659, 1.442695
    %v3661 = vpow.pop %v3660
    %v3662 = vadd.f32 %v3661, 1.0
    %v3663 = vrcp.pop %v3662
    %v3664 = vmul.f32 1.0, %v3663
    %v3665 = vadd.f32 %v3515, %v3586
    %v3666 = vxor.u32 %v3665, 2147483648
    %v3667 = vmul.f32 %v3666, 1.442695
    %v3668 = vpow.pop %v3667
    %v3669 = vadd.f32 %v3668, 1.0
    %v3670 = vrcp.pop %v3669
    %v3671 = vmul.f32 1.0, %v3670
    %v3672 = vmul.f32 %v3664, %v3655
    %v3673 = vadd.f32 %v3516, %v3672
    %v3674 = vtanh.pop %v3673
    %v3675 = vsub.f32 1.0, %v3671
    %v3676 = vmul.f32 %v3675, %v3674
    %v3677 = vmul.f32 %v3671, %v3513
    %v3678 = vadd.f32 %v3676, %v3677
    %v3679 = vsel %vm174, %v2456, %v2435
    %v3680 = vsel %vm175, %v2457, %v2436
    %v3681 = vsel %vm176, %v2458, %v2437
    %3682 = vmatprep.subr.mxu0 %v2460
    %3683 = vmatpush1.msra.mxu0 %v2459
    %3684 = vmatprep.subr.mxu0 %v2463
    %3685 = vmatpush1.msra.mxu0 %v2462
    %3686 = vmatprep.subr.mxu0 %v2466
    %3687 = vmatpush1.msra.mxu0 %v2465
    %3688 = vmatprep.subr.mxu0 %v2469
    %3689 = vmatpush1.msra.mxu0 %v2468
    %3690 = vmatprep.subr.mxu0 %v2472
    %3691 = vmatpush1.msra.mxu0 %v2471
    %3692 = vmatprep.subr.mxu0 %v2475
    %3693 = vmatpush1.msra.mxu0 %v2474
    %3694 = vmatprep.subr.mxu0 %v2478
    %3695 = vmatpush1.msra.mxu0 %v2477
    %3696 = vmatprep.subr.mxu0 %v2481
    %3697 = vmatpush1.msra.mxu0 %v2480
    %3698 = vmatprep.subr.mxu0 %v2484
    %3699 = vmatpush1.msra.mxu0 %v2483
    %3700 = vmatprep.subr.mxu0 %v2487
    %3701 = vmatpush1.msra.mxu0 %v2486
    %3702 = vmatprep.subr.mxu0 %v2490
    %3703 = vmatpush1.msra.mxu0 %v2489
    %3704 = vmatprep.subr.mxu0 %v2493
    %3705 = vmatpush1.msra.mxu0 %v2492
    %3706 = vmatprep.subr.mxu0 %v2496
    %3707 = vmatpush1.msra.mxu0 %v2495
    %3708 = vmatprep.subr.mxu0 %v2499
    %3709 = vmatpush1.msra.mxu0 %v2498
    %3710 = vmatprep.subr.mxu0 %v2502
    %3711 = vmatpush1.msra.mxu0 %v2501
    %3712 = vmatprep.subr.mxu0 %v2505
    %3713 = vmatpush1.msra.mxu0 %v2504
    %3714 = vmatprep.subr.mxu0 0.0
    %3715 = vmatpush1.msra.mxu0 0.0
    %3716 = vmatprep.subr.mxu0 0.0
    %3717 = vmatpush1.msra.mxu0 0.0
    %3718 = vmatprep.subr.mxu0 0.0
    %3719 = vmatpush1.msra.mxu0 0.0
    %3720 = vmatprep.subr.mxu0 0.0
    %3721 = vmatpush1.msra.mxu0 0.0
    %3722 = vmatprep.subr.mxu0 0.0
    %3723 = vmatpush1.msra.mxu0 0.0
    %3724 = vmatprep.subr.mxu0 0.0
    %3725 = vmatpush1.msra.mxu0 0.0
    %3726 = vmatprep.subr.mxu0 0.0
    %3727 = vmatpush1.msra.mxu0 0.0
    %3728 = vmatprep.subr.mxu0 0.0
    %3729 = vmatpush1.msra.mxu0 0.0
    %3730 = vmatprep.subr.mxu0 0.0
    %3731 = vmatpush1.msra.mxu0 0.0
    %3732 = vmatprep.subr.mxu0 0.0
    %3733 = vmatpush1.msra.mxu0 0.0
    %3734 = vmatprep.subr.mxu0 0.0
    %3735 = vmatpush1.msra.mxu0 0.0
    %3736 = vmatprep.subr.mxu0 0.0
    %3737 = vmatpush1.msra.mxu0 0.0
    %3738 = vmatprep.subr.mxu0 0.0
    %3739 = vmatpush1.msra.mxu0 0.0
    %3740 = vmatprep.subr.mxu0 0.0
    %3741 = vmatpush1.msra.mxu0 0.0
    %3742 = vmatprep.subr.mxu0 0.0
    %3743 = vmatpush1.msra.mxu0 0.0
    %3744 = vmatprep.subr.mxu0 0.0
    %3745 = vmatpush1.msra.mxu0 0.0
    %3746 = vmatprep.mubr.f32.mxu0 0.0
    %3747 = vmatmul.mubr.f32.gmra.mrb[0].mxu0 %v3678
    %v3748 = vpop.f32.mrb[0].mxu0
    %v3749 = vadd.f32 %v2515, %v3748
    %v3750 = vpop.f32.mrb[0].mxu0
    %v3751 = vadd.f32 %v2519, %v3750
    %3752 = vdwg.mxu0
    %3753 = vmatprep.subr.mxu0 0.0
    %3754 = vmatpush1.msra.mxu0 %v2461
    %3755 = vmatprep.subr.mxu0 0.0
    %3756 = vmatpush1.msra.mxu0 %v2464
    %3757 = vmatprep.subr.mxu0 0.0
    %3758 = vmatpush1.msra.mxu0 %v2467
    %3759 = vmatprep.subr.mxu0 0.0
    %3760 = vmatpush1.msra.mxu0 %v2470
    %3761 = vmatprep.subr.mxu0 0.0
    %3762 = vmatpush1.msra.mxu0 %v2473
    %3763 = vmatprep.subr.mxu0 0.0
    %3764 = vmatpush1.msra.mxu0 %v2476
    %3765 = vmatprep.subr.mxu0 0.0
    %3766 = vmatpush1.msra.mxu0 %v2479
    %3767 = vmatprep.subr.mxu0 0.0
    %3768 = vmatpush1.msra.mxu0 %v2482
    %3769 = vmatprep.subr.mxu0 0.0
    %3770 = vmatpush1.msra.mxu0 %v2485
    %3771 = vmatprep.subr.mxu0 0.0
    %3772 = vmatpush1.msra.mxu0 %v2488
    %3773 = vmatprep.subr.mxu0 0.0
    %3774 = vmatpush1.msra.mxu0 %v2491
    %3775 = vmatprep.subr.mxu0 0.0
    %3776 = vmatpush1.msra.mxu0 %v2494
    %3777 = vmatprep.subr.mxu0 0.0
    %3778 = vmatpush1.msra.mxu0 %v2497
    %3779 = vmatprep.subr.mxu0 0.0
    %3780 = vmatpush1.msra.mxu0 %v2500
    %3781 = vmatprep.subr.mxu0 0.0
    %3782 = vmatpush1.msra.mxu0 %v2503
    %3783 = vmatprep.subr.mxu0 0.0
    %3784 = vmatpush1.msra.mxu0 %v2506
    %3785 = vmatprep.subr.mxu0 0.0
    %3786 = vmatpush1.msra.mxu0 0.0
    %3787 = vmatprep.subr.mxu0 0.0
    %3788 = vmatpush1.msra.mxu0 0.0
    %3789 = vmatprep.subr.mxu0 0.0
    %3790 = vmatpush1.msra.mxu0 0.0
    %3791 = vmatprep.subr.mxu0 0.0
    %3792 = vmatpush1.msra.mxu0 0.0
    %3793 = vmatprep.subr.mxu0 0.0
    %3794 = vmatpush1.msra.mxu0 0.0
    %3795 = vmatprep.subr.mxu0 0.0
    %3796 = vmatpush1.msra.mxu0 0.0
    %3797 = vmatprep.subr.mxu0 0.0
    %3798 = vmatpush1.msra.mxu0 0.0
    %3799 = vmatprep.subr.mxu0 0.0
    %3800 = vmatpush1.msra.mxu0 0.0
    %3801 = vmatprep.subr.mxu0 0.0
    %3802 = vmatpush1.msra.mxu0 0.0
    %3803 = vmatprep.subr.mxu0 0.0
    %3804 = vmatpush1.msra.mxu0 0.0
    %3805 = vmatprep.subr.mxu0 0.0
    %3806 = vmatpush1.msra.mxu0 0.0
    %3807 = vmatprep.subr.mxu0 0.0
    %3808 = vmatpush1.msra.mxu0 0.0
    %3809 = vmatprep.subr.mxu0 0.0
    %3810 = vmatpush1.msra.mxu0 0.0
    %3811 = vmatprep.subr.mxu0 0.0
    %3812 = vmatpush1.msra.mxu0 0.0
    %3813 = vmatprep.subr.mxu0 0.0
    %3814 = vmatpush1.msra.mxu0 0.0
    %3815 = vmatprep.subr.mxu0 0.0
    %3816 = vmatpush1.msra.mxu0 0.0
    %3817 = vmatprep.mubr.f32.mxu0 0.0
    %3818 = vmatmul.mubr.f32.gmra.mrb[0].mxu0 %v3678
    %v3819 = vpop.f32.mrb[0].mxu0
    %v3820 = vadd.f32 %v2523, %v3819
    %v3821 = vpop.f32.mrb[0].mxu0
    %3822 = vdwg.mxu0
    %v3823 = vadd.f32 %v3679, %v3749
    %v3824 = vxor.u32 %v3823, 2147483648
    %v3825 = vmul.f32 %v3824, 1.442695
    %v3826 = vpow.pop %v3825
    %v3827 = vadd.f32 %v3826, 1.0
    %v3828 = vrcp.pop %v3827
    %v3829 = vmul.f32 1.0, %v3828
    %v3830 = vadd.f32 %v3680, %v3751
    %v3831 = vxor.u32 %v3830, 2147483648
    %v3832 = vmul.f32 %v3831, 1.442695
    %v3833 = vpow.pop %v3832
    %v3834 = vadd.f32 %v3833, 1.0
    %v3835 = vrcp.pop %v3834
    %v3836 = vmul.f32 1.0, %v3835
    %v3837 = vmul.f32 %v3829, %v3820
    %v3838 = vadd.f32 %v3681, %v3837
    %v3839 = vtanh.pop %v3838
    %v3840 = vsub.f32 1.0, %v3836
    %v3841 = vmul.f32 %v3840, %v3839
    %v3842 = vmul.f32 %v3836, %v3678
    %v3843 = vadd.f32 %v3841, %v3842
    %v3844 = vld [vmem:[%s11] sm:$0xff]
    %v3845 = vld [vmem:[%s11 + $0x8] sm:$0xff]
    %v3846 = vld [vmem:[%s11 + $0x10] sm:$0xff]
    %v3847 = vld [vmem:[%s11 + $0x18] sm:$0xff]
    %v3848 = vld [vmem:[%s11 + $0x20] sm:$0xff]
    %v3849 = vld [vmem:[%s11 + $0x28] sm:$0xff]
    %v3850 = vld [vmem:[%s11 + $0x30] sm:$0xff]
    %v3851 = vld [vmem:[%s11 + $0x38] sm:$0xff]
    %v3852 = vld [vmem:[%s11 + $0x40] sm:$0xff]
    %v3853 = vld [vmem:[%s11 + $0x48] sm:$0xff]
    %v3854 = vld [vmem:[%s11 + $0x50] sm:$0xff]
    %v3855 = vld [vmem:[%s11 + $0x58] sm:$0xff]
    %v3856 = vld [vmem:[%s11 + $0x60] sm:$0xff]
    %v3857 = vld [vmem:[%s11 + $0x68] sm:$0xff]
    %v3858 = vld [vmem:[%s11 + $0x70] sm:$0xff]
    %v3859 = vld [vmem:[%s11 + $0x78] sm:$0xff]
    %v3860 = vld [vmem:[%s12] sm:$0x1]
    %v3862 = vlaneseq
    %v3863 = vshrl.u32 %v3862, 7
    %v3864 = vsub.s32 0, %v3863
    %v3865 = vrot.slane %v3860, %v3864
    %3867 = vmatprep.subr.mxu0 0.0
    %3868 = vmatpush1.msra.mxu0 %v3844
    %3869 = vmatprep.subr.mxu0 0.0
    %3870 = vmatpush1.msra.mxu0 %v3845
    %3871 = vmatprep.subr.mxu0 0.0
    %3872 = vmatpush1.msra.mxu0 %v3846
    %3873 = vmatprep.subr.mxu0 0.0
    %3874 = vmatpush1.msra.mxu0 %v3847
    %3875 = vmatprep.subr.mxu0 0.0
    %3876 = vmatpush1.msra.mxu0 %v3848
    %3877 = vmatprep.subr.mxu0 0.0
    %3878 = vmatpush1.msra.mxu0 %v3849
    %3879 = vmatprep.subr.mxu0 0.0
    %3880 = vmatpush1.msra.mxu0 %v3850
    %3881 = vmatprep.subr.mxu0 0.0
    %3882 = vmatpush1.msra.mxu0 %v3851
    %3883 = vmatprep.subr.mxu0 0.0
    %3884 = vmatpush1.msra.mxu0 %v3852
    %3885 = vmatprep.subr.mxu0 0.0
    %3886 = vmatpush1.msra.mxu0 %v3853
    %3887 = vmatprep.subr.mxu0 0.0
    %3888 = vmatpush1.msra.mxu0 %v3854
    %3889 = vmatprep.subr.mxu0 0.0
    %3890 = vmatpush1.msra.mxu0 %v3855
    %3891 = vmatprep.subr.mxu0 0.0
    %3892 = vmatpush1.msra.mxu0 %v3856
    %3893 = vmatprep.subr.mxu0 0.0
    %3894 = vmatpush1.msra.mxu0 %v3857
    %3895 = vmatprep.subr.mxu0 0.0
    %3896 = vmatpush1.msra.mxu0 %v3858
    %3897 = vmatprep.subr.mxu0 0.0
    %3898 = vmatpush1.msra.mxu0 %v3859
    %3899 = vmatprep.subr.mxu0 0.0
    %3900 = vmatpush1.msra.mxu0 0.0
    %3901 = vmatprep.subr.mxu0 0.0
    %3902 = vmatpush1.msra.mxu0 0.0
    %3903 = vmatprep.subr.mxu0 0.0
    %3904 = vmatpush1.msra.mxu0 0.0
    %3905 = vmatprep.subr.mxu0 0.0
    %3906 = vmatpush1.msra.mxu0 0.0
    %3907 = vmatprep.subr.mxu0 0.0
    %3908 = vmatpush1.msra.mxu0 0.0
    %3909 = vmatprep.subr.mxu0 0.0
    %3910 = vmatpush1.msra.mxu0 0.0
    %3911 = vmatprep.subr.mxu0 0.0
    %3912 = vmatpush1.msra.mxu0 0.0
    %3913 = vmatprep.subr.mxu0 0.0
    %3914 = vmatpush1.msra.mxu0 0.0
    %3915 = vmatprep.subr.mxu0 0.0
    %3916 = vmatpush1.msra.mxu0 0.0
    %3917 = vmatprep.subr.mxu0 0.0
    %3918 = vmatpush1.msra.mxu0 0.0
    %3919 = vmatprep.subr.mxu0 0.0
    %3920 = vmatpush1.msra.mxu0 0.0
    %3921 = vmatprep.subr.mxu0 0.0
    %3922 = vmatpush1.msra.mxu0 0.0
    %3923 = vmatprep.subr.mxu0 0.0
    %3924 = vmatpush1.msra.mxu0 0.0
    %3925 = vmatprep.subr.mxu0 0.0
    %3926 = vmatpush1.msra.mxu0 0.0
    %3927 = vmatprep.subr.mxu0 0.0
    %3928 = vmatpush1.msra.mxu0 0.0
    %3929 = vmatprep.subr.mxu0 0.0
    %3930 = vmatpush1.msra.mxu0 0.0
    %3931 = vmatprep.mubr.f32.mxu0 0.0
    %3932 = vmatmul.mubr.f32.gmra.mrb[0].mxu0 %v3843
    %v3933 = vpop.f32.mrb[0].mxu0
    %v3934 = vadd.f32 %v3865, %v3933
    %v3935 = vpop.f32.mrb[0].mxu0
    %3936 = vdwg.mxu0
    %vm3937 = vcmask 261120
    %v3938 = vsel %vm3937, %v3934, 0.0
    %3939 = vadd.xlane.f32.xlu0 %v3938
    %v3940 = vpop.xlane.xlu0 %3939
    %v3941 = vrcp.pop 32.0
    %v3942 = vmul.f32 %v3940, %v3941
    %v3943 = vsub.f32 %v3934, %v3942
    %v3944 = vmul.f32 %v3943, %v3943
    %v3945 = vsel %vm3937, %v3944, 0.0
    %3946 = vadd.xlane.f32.xlu0 %v3945
    %v3947 = vpop.xlane.xlu0 %3946
    %v3948 = vmul.f32 %v3947, %v3941
    %v3949 = vadd.f32 %v3948, 1e-05
    %v3950 = vrsqrt.pop %v3949
    %v3951 = vmul.f32 %v3943, %v3950
    %v3952 = vld [vmem:[%s13] sm:$0x1]
    %v3954 = vlaneseq
    %v3955 = vshrl.u32 %v3954, 7
    %v3956 = vsub.s32 0, %v3955
    %v3957 = vrot.slane %v3952, %v3956
    %v3959 = vmul.f32 %v3951, %v3957
    %v3960 = vld [vmem:[%s14] sm:$0x1]
    %v3962 = vlaneseq
    %v3963 = vshrl.u32 %v3962, 7
    %v3964 = vsub.s32 0, %v3963
    %v3965 = vrot.slane %v3960, %v3964
    %v3967 = vadd.f32 %v3959, %v3965
    %v3968 = vmax.f32 %v3967, 0.0
    %v3969 = vld [vmem:[%s15] sm:$0xff]
    %v3970 = vld [vmem:[%s15 + $0x8] sm:$0xff]
    %v3971 = vld [vmem:[%s15 + $0x10] sm:$0xff]
    %v3972 = vld [vmem:[%s15 + $0x18] sm:$0xff]
    %v3973 = vld [vmem:[%s16] sm:$0x1]
    %v3975 = vlaneseq
    %v3976 = vshrl.u32 %v3975, 7
    %v3977 = vsub.s32 0, %v3976
    %v3978 = vrot.slane %v3973, %v3977
    %v3981 = vsel %vm3937, %v3968, 0
    %3983 = vmatprep.subr.mxu0 0.0
    %3984 = vmatpush1.msra.mxu0 %v3969
    %3985 = vmatprep.subr.mxu0 0.0
    %3986 = vmatpush1.msra.mxu0 %v3970
    %3987 = vmatprep.subr.mxu0 0.0
    %3988 = vmatpush1.msra.mxu0 %v3971
    %3989 = vmatprep.subr.mxu0 0.0
    %3990 = vmatpush1.msra.mxu0 %v3972
    %3991 = vmatprep.subr.mxu0 0.0
    %3992 = vmatpush1.msra.mxu0 0.0
    %3993 = vmatprep.subr.mxu0 0.0
    %3994 = vmatpush1.msra.mxu0 0.0
    %3995 = vmatprep.subr.mxu0 0.0
    %3996 = vmatpush1.msra.mxu0 0.0
    %3997 = vmatprep.subr.mxu0 0.0
    %3998 = vmatpush1.msra.mxu0 0.0
    %3999 = vmatprep.subr.mxu0 0.0
    %4000 = vmatpush1.msra.mxu0 0.0
    %4001 = vmatprep.subr.mxu0 0.0
    %4002 = vmatpush1.msra.mxu0 0.0
    %4003 = vmatprep.subr.mxu0 0.0
    %4004 = vmatpush1.msra.mxu0 0.0
    %4005 = vmatprep.subr.mxu0 0.0
    %4006 = vmatpush1.msra.mxu0 0.0
    %4007 = vmatprep.subr.mxu0 0.0
    %4008 = vmatpush1.msra.mxu0 0.0
    %4009 = vmatprep.subr.mxu0 0.0
    %4010 = vmatpush1.msra.mxu0 0.0
    %4011 = vmatprep.subr.mxu0 0.0
    %4012 = vmatpush1.msra.mxu0 0.0
    %4013 = vmatprep.subr.mxu0 0.0
    %4014 = vmatpush1.msra.mxu0 0.0
    %4015 = vmatprep.subr.mxu0 0.0
    %4016 = vmatpush1.msra.mxu0 0.0
    %4017 = vmatprep.subr.mxu0 0.0
    %4018 = vmatpush1.msra.mxu0 0.0
    %4019 = vmatprep.subr.mxu0 0.0
    %4020 = vmatpush1.msra.mxu0 0.0
    %4021 = vmatprep.subr.mxu0 0.0
    %4022 = vmatpush1.msra.mxu0 0.0
    %4023 = vmatprep.subr.mxu0 0.0
    %4024 = vmatpush1.msra.mxu0 0.0
    %4025 = vmatprep.subr.mxu0 0.0
    %4026 = vmatpush1.msra.mxu0 0.0
    %4027 = vmatprep.subr.mxu0 0.0
    %4028 = vmatpush1.msra.mxu0 0.0
    %4029 = vmatprep.subr.mxu0 0.0
    %4030 = vmatpush1.msra.mxu0 0.0
    %4031 = vmatprep.subr.mxu0 0.0
    %4032 = vmatpush1.msra.mxu0 0.0
    %4033 = vmatprep.subr.mxu0 0.0
    %4034 = vmatpush1.msra.mxu0 0.0
    %4035 = vmatprep.subr.mxu0 0.0
    %4036 = vmatpush1.msra.mxu0 0.0
    %4037 = vmatprep.subr.mxu0 0.0
    %4038 = vmatpush1.msra.mxu0 0.0
    %4039 = vmatprep.subr.mxu0 0.0
    %4040 = vmatpush1.msra.mxu0 0.0
    %4041 = vmatprep.subr.mxu0 0.0
    %4042 = vmatpush1.msra.mxu0 0.0
    %4043 = vmatprep.subr.mxu0 0.0
    %4044 = vmatpush1.msra.mxu0 0.0
    %4045 = vmatprep.subr.mxu0 0.0
    %4046 = vmatpush1.msra.mxu0 0.0
    %4047 = vmatprep.mubr.f32.mxu0 0.0
    %4048 = vmatmul.mubr.f32.gmra.mrb[0].mxu0 %v3981
    %v4049 = vpop.f32.mrb[0].mxu0
    %v4050 = vadd.f32 %v3978, %v4049
    %v4051 = vpop.f32.mrb[0].mxu0
    %4052 = vdwg.mxu0
    %s4053 = scalar_lea.vmem %s11, 128
    %v4054 = vld [vmem:[%s4053] sm:$0xff]
    %v4055 = vld [vmem:[%s4053 + $0x8] sm:$0xff]
    %v4056 = vld [vmem:[%s4053 + $0x10] sm:$0xff]
    %v4057 = vld [vmem:[%s4053 + $0x18] sm:$0xff]
    %v4058 = vld [vmem:[%s4053 + $0x20] sm:$0xff]
    %v4059 = vld [vmem:[%s4053 + $0x28] sm:$0xff]
    %v4060 = vld [vmem:[%s4053 + $0x30] sm:$0xff]
    %v4061 = vld [vmem:[%s4053 + $0x38] sm:$0xff]
    %v4062 = vld [vmem:[%s4053 + $0x40] sm:$0xff]
    %v4063 = vld [vmem:[%s4053 + $0x48] sm:$0xff]
    %v4064 = vld [vmem:[%s4053 + $0x50] sm:$0xff]
    %v4065 = vld [vmem:[%s4053 + $0x58] sm:$0xff]
    %v4066 = vld [vmem:[%s4053 + $0x60] sm:$0xff]
    %v4067 = vld [vmem:[%s4053 + $0x68] sm:$0xff]
    %v4068 = vld [vmem:[%s4053 + $0x70] sm:$0xff]
    %v4069 = vld [vmem:[%s4053 + $0x78] sm:$0xff]
    %s4070 = scalar_lea.vmem %s12, 1
    %v4071 = vld [vmem:[%s4070] sm:$0x1]
    %v4073 = vlaneseq
    %v4074 = vshrl.u32 %v4073, 7
    %v4075 = vsub.s32 0, %v4074
    %v4076 = vrot.slane %v4071, %v4075
    %4078 = vmatprep.subr.mxu0 0.0
    %4079 = vmatpush1.msra.mxu0 %v4054
    %4080 = vmatprep.subr.mxu0 0.0
    %4081 = vmatpush1.msra.mxu0 %v4055
    %4082 = vmatprep.subr.mxu0 0.0
    %4083 = vmatpush1.msra.mxu0 %v4056
    %4084 = vmatprep.subr.mxu0 0.0
    %4085 = vmatpush1.msra.mxu0 %v4057
    %4086 = vmatprep.subr.mxu0 0.0
    %4087 = vmatpush1.msra.mxu0 %v4058
    %4088 = vmatprep.subr.mxu0 0.0
    %4089 = vmatpush1.msra.mxu0 %v4059
    %4090 = vmatprep.subr.mxu0 0.0
    %4091 = vmatpush1.msra.mxu0 %v4060
    %4092 = vmatprep.subr.mxu0 0.0
    %4093 = vmatpush1.msra.mxu0 %v4061
    %4094 = vmatprep.subr.mxu0 0.0
    %4095 = vmatpush1.msra.mxu0 %v4062
    %4096 = vmatprep.subr.mxu0 0.0
    %4097 = vmatpush1.msra.mxu0 %v4063
    %4098 = vmatprep.subr.mxu0 0.0
    %4099 = vmatpush1.msra.mxu0 %v4064
    %4100 = vmatprep.subr.mxu0 0.0
    %4101 = vmatpush1.msra.mxu0 %v4065
    %4102 = vmatprep.subr.mxu0 0.0
    %4103 = vmatpush1.msra.mxu0 %v4066
    %4104 = vmatprep.subr.mxu0 0.0
    %4105 = vmatpush1.msra.mxu0 %v4067
    %4106 = vmatprep.subr.mxu0 0.0
    %4107 = vmatpush1.msra.mxu0 %v4068
    %4108 = vmatprep.subr.mxu0 0.0
    %4109 = vmatpush1.msra.mxu0 %v4069
    %4110 = vmatprep.subr.mxu0 0.0
    %4111 = vmatpush1.msra.mxu0 0.0
    %4112 = vmatprep.subr.mxu0 0.0
    %4113 = vmatpush1.msra.mxu0 0.0
    %4114 = vmatprep.subr.mxu0 0.0
    %4115 = vmatpush1.msra.mxu0 0.0
    %4116 = vmatprep.subr.mxu0 0.0
    %4117 = vmatpush1.msra.mxu0 0.0
    %4118 = vmatprep.subr.mxu0 0.0
    %4119 = vmatpush1.msra.mxu0 0.0
    %4120 = vmatprep.subr.mxu0 0.0
    %4121 = vmatpush1.msra.mxu0 0.0
    %4122 = vmatprep.subr.mxu0 0.0
    %4123 = vmatpush1.msra.mxu0 0.0
    %4124 = vmatprep.subr.mxu0 0.0
    %4125 = vmatpush1.msra.mxu0 0.0
    %4126 = vmatprep.subr.mxu0 0.0
    %4127 = vmatpush1.msra.mxu0 0.0
    %4128 = vmatprep.subr.mxu0 0.0
    %4129 = vmatpush1.msra.mxu0 0.0
    %4130 = vmatprep.subr.mxu0 0.0
    %4131 = vmatpush1.msra.mxu0 0.0
    %4132 = vmatprep.subr.mxu0 0.0
    %4133 = vmatpush1.msra.mxu0 0.0
    %4134 = vmatprep.subr.mxu0 0.0
    %4135 = vmatpush1.msra.mxu0 0.0
    %4136 = vmatprep.subr.mxu0 0.0
    %4137 = vmatpush1.msra.mxu0 0.0
    %4138 = vmatprep.subr.mxu0 0.0
    %4139 = vmatpush1.msra.mxu0 0.0
    %4140 = vmatprep.subr.mxu0 0.0
    %4141 = vmatpush1.msra.mxu0 0.0
    %4142 = vmatprep.mubr.f32.mxu0 0.0
    %4143 = vmatmul.mubr.f32.gmra.mrb[0].mxu0 %v3843
    %v4144 = vpop.f32.mrb[0].mxu0
    %v4145 = vadd.f32 %v4076, %v4144
    %v4146 = vpop.f32.mrb[0].mxu0
    %4147 = vdwg.mxu0
    %v4148 = vsel %vm3937, %v4145, 0.0
    %4149 = vadd.xlane.f32.xlu0 %v4148
    %v4150 = vpop.xlane.xlu0 %4149
    %v4151 = vmul.f32 %v4150, %v3941
    %v4152 = vsub.f32 %v4145, %v4151
    %v4153 = vmul.f32 %v4152, %v4152
    %v4154 = vsel %vm3937, %v4153, 0.0
    %4155 = vadd.xlane.f32.xlu0 %v4154
    %v4156 = vpop.xlane.xlu0 %4155
    %v4157 = vmul.f32 %v4156, %v3941
    %v4158 = vadd.f32 %v4157, 1e-05
    %v4159 = vrsqrt.pop %v4158
    %v4160 = vmul.f32 %v4152, %v4159
    %s4161 = scalar_lea.vmem %s13, 1
    %v4162 = vld [vmem:[%s4161] sm:$0x1]
    %v4164 = vlaneseq
    %v4165 = vshrl.u32 %v4164, 7
    %v4166 = vsub.s32 0, %v4165
    %v4167 = vrot.slane %v4162, %v4166
    %v4169 = vmul.f32 %v4160, %v4167
    %s4170 = scalar_lea.vmem %s14, 1
    %v4171 = vld [vmem:[%s4170] sm:$0x1]
    %v4173 = vlaneseq
    %v4174 = vshrl.u32 %v4173, 7
    %v4175 = vsub.s32 0, %v4174
    %v4176 = vrot.slane %v4171, %v4175
    %v4178 = vadd.f32 %v4169, %v4176
    %v4179 = vmax.f32 %v4178, 0.0
    %s4180 = scalar_lea.vmem %s15, 32
    %v4181 = vld [vmem:[%s4180] sm:$0xff]
    %v4182 = vld [vmem:[%s4180 + $0x8] sm:$0xff]
    %v4183 = vld [vmem:[%s4180 + $0x10] sm:$0xff]
    %v4184 = vld [vmem:[%s4180 + $0x18] sm:$0xff]
    %v4186 = vsel %vm3937, %v4179, 0
    %4188 = vmatprep.subr.mxu0 0.0
    %4189 = vmatpush1.msra.mxu0 %v4181
    %4190 = vmatprep.subr.mxu0 0.0
    %4191 = vmatpush1.msra.mxu0 %v4182
    %4192 = vmatprep.subr.mxu0 0.0
    %4193 = vmatpush1.msra.mxu0 %v4183
    %4194 = vmatprep.subr.mxu0 0.0
    %4195 = vmatpush1.msra.mxu0 %v4184
    %4196 = vmatprep.subr.mxu0 0.0
    %4197 = vmatpush1.msra.mxu0 0.0
    %4198 = vmatprep.subr.mxu0 0.0
    %4199 = vmatpush1.msra.mxu0 0.0
    %4200 = vmatprep.subr.mxu0 0.0
    %4201 = vmatpush1.msra.mxu0 0.0
    %4202 = vmatprep.subr.mxu0 0.0
    %4203 = vmatpush1.msra.mxu0 0.0
    %4204 = vmatprep.subr.mxu0 0.0
    %4205 = vmatpush1.msra.mxu0 0.0
    %4206 = vmatprep.subr.mxu0 0.0
    %4207 = vmatpush1.msra.mxu0 0.0
    %4208 = vmatprep.subr.mxu0 0.0
    %4209 = vmatpush1.msra.mxu0 0.0
    %4210 = vmatprep.subr.mxu0 0.0
    %4211 = vmatpush1.msra.mxu0 0.0
    %4212 = vmatprep.subr.mxu0 0.0
    %4213 = vmatpush1.msra.mxu0 0.0
    %4214 = vmatprep.subr.mxu0 0.0
    %4215 = vmatpush1.msra.mxu0 0.0
    %4216 = vmatprep.subr.mxu0 0.0
    %4217 = vmatpush1.msra.mxu0 0.0
    %4218 = vmatprep.subr.mxu0 0.0
    %4219 = vmatpush1.msra.mxu0 0.0
    %4220 = vmatprep.subr.mxu0 0.0
    %4221 = vmatpush1.msra.mxu0 0.0
    %4222 = vmatprep.subr.mxu0 0.0
    %4223 = vmatpush1.msra.mxu0 0.0
    %4224 = vmatprep.subr.mxu0 0.0
    %4225 = vmatpush1.msra.mxu0 0.0
    %4226 = vmatprep.subr.mxu0 0.0
    %4227 = vmatpush1.msra.mxu0 0.0
    %4228 = vmatprep.subr.mxu0 0.0
    %4229 = vmatpush1.msra.mxu0 0.0
    %4230 = vmatprep.subr.mxu0 0.0
    %4231 = vmatpush1.msra.mxu0 0.0
    %4232 = vmatprep.subr.mxu0 0.0
    %4233 = vmatpush1.msra.mxu0 0.0
    %4234 = vmatprep.subr.mxu0 0.0
    %4235 = vmatpush1.msra.mxu0 0.0
    %4236 = vmatprep.subr.mxu0 0.0
    %4237 = vmatpush1.msra.mxu0 0.0
    %4238 = vmatprep.subr.mxu0 0.0
    %4239 = vmatpush1.msra.mxu0 0.0
    %4240 = vmatprep.subr.mxu0 0.0
    %4241 = vmatpush1.msra.mxu0 0.0
    %4242 = vmatprep.subr.mxu0 0.0
    %4243 = vmatpush1.msra.mxu0 0.0
    %4244 = vmatprep.subr.mxu0 0.0
    %4245 = vmatpush1.msra.mxu0 0.0
    %4246 = vmatprep.subr.mxu0 0.0
    %4247 = vmatpush1.msra.mxu0 0.0
    %4248 = vmatprep.subr.mxu0 0.0
    %4249 = vmatpush1.msra.mxu0 0.0
    %4250 = vmatprep.subr.mxu0 0.0
    %4251 = vmatpush1.msra.mxu0 0.0
    %4252 = vmatprep.mubr.f32.mxu0 0.0
    %4253 = vmatmul.mubr.f32.gmra.mrb[0].mxu0 %v4186
    %v4254 = vpop.f32.mrb[0].mxu0
    %v4255 = vadd.f32 0.0, %v4254
    %v4256 = vpop.f32.mrb[0].mxu0
    %4257 = vdwg.mxu0
    %v4258 = vadd.f32 %v4050, %v4255
    %s4259 = scalar_lea.vmem %s16, 1
    %v4260 = vld [vmem:[%s4259] sm:$0x1]
    %v4262 = vlaneseq
    %v4263 = vshrl.u32 %v4262, 7
    %v4264 = vsub.s32 0, %v4263
    %v4265 = vrot.slane %v4260, %v4264
    %v4267 = vadd.f32 %v4258, %v4265
    %4268 = vst.msk [vmem:[%s17] sm:$0xff] %vm3937, %v4267
    // Predicated region
    $region102: #{enhanced_two_tower_forward.1} parent=1 // pred_check
      _
    $region103: #{enhanced_two_tower_forward.1} parent=1 // pred_check_branch
      %4270 = sbr.rel (0) target = $region105
    $region104: #{enhanced_two_tower_forward.1} parent=1 // pred_region
      _
    $region105: #{enhanced_two_tower_forward.1} parent=1 // pred_fallthru
      _
    // Predicated region
    $region106: #{enhanced_two_tower_forward.1} parent=1 // pred_check
      _
    $region107: #{enhanced_two_tower_forward.1} parent=1 // pred_check_branch
      %4272 = sbr.rel (0) target = $region109
    $region108: #{enhanced_two_tower_forward.1} parent=1 // pred_region
      _
    $region109: #{enhanced_two_tower_forward.1} parent=1 // pred_fallthru
      _
    %4273 = vsyncpa [#allocation5], 1
    %4274 = vsyncpa [#allocation7], 1
    %4275 = vsyncpa [#allocation10], 1
    %4276 = vsyncpa [#allocation13], 1
    %4277 = vsyncpa [#allocation16], 1

</llo_original>
